<compile_context>
chip_gen: v7x
topology: tpu7x:2x2x1
jax: 0.10.0
libtpu: 0.0.40
codegen_flags: <defaults>
</compile_context>

<pallas_src>
import functools

import jax
import jax.numpy as jnp
from jax.experimental import pallas as pl
from jax.experimental.pallas import tpu as pltpu

BN_EPS = 1e-5


def _basic_block_kernel(xph_ref, w1_ref, g1_ref, b1_ref, w2_ref, g2_ref, b2_ref,
                        wsa_ref, r_ref, p_ref, pt_ref, chm_ref,
                        out_ref, h1p_ref, sap_ref):
    N, Hp, _ = xph_ref.shape
    H = Hp - 2
    M = N * H
    WC = out_ref.shape[1]           # W * C   (lane-folded pixel*channel axis)
    Wpix = p_ref.shape[1]           # W
    C = WC // Wpix
    cdt = w1_ref.dtype              # conv matmul compute dtype (f32 or bf16)
    inv_cnt = 1.0 / float(M * Wpix)
    f32 = jnp.float32

    def conv3x3(center, padded_ref, wb_ref):
        """3x3 / pad 1 conv as 3 banded MXU matmuls (one per vertical tap ky).
        Horizontal taps + W zero-padding are folded into the banded weights, so
        only cheap row-shifted (dy) slices of the H-padded buffer are needed."""
        kin = padded_ref.shape[2]
        acc = jnp.dot(center.astype(cdt), wb_ref[1], preferred_element_type=f32)
        acc = acc + jnp.dot(padded_ref[:, 0:H, :].reshape(M, kin).astype(cdt),
                            wb_ref[0], preferred_element_type=f32)
        acc = acc + jnp.dot(padded_ref[:, 2:2 + H, :].reshape(M, kin).astype(cdt),
                            wb_ref[2], preferred_element_type=f32)
        return acc

    def batch_norm(acc, g_ref, b_ref):
        """Training-mode BN: one-pass sum / sum-of-squares; per-channel reduce and
        broadcast via the same-channel selector matmul (r_ref) so everything stays
        in the lane-dense (M, W*C) layout. g_ref/b_ref are pre-tiled to (1, W*C)."""
        colsum = jnp.sum(acc, axis=0, keepdims=True)                    # (1, WC)
        colsq = jnp.sum(acc * acc, axis=0, keepdims=True)               # (1, WC)
        mean = jnp.dot(colsum, r_ref[...], preferred_element_type=f32) * inv_cnt
        ex2 = jnp.dot(colsq, r_ref[...], preferred_element_type=f32) * inv_cnt
        var = ex2 - mean * mean
        scale = g_ref[...] * jax.lax.rsqrt(var + BN_EPS)
        return (acc - mean) * scale + b_ref[...]

    # Center rows of the H-padded input: conv1's middle vertical tap AND the residual identity.
    x_id = xph_ref[:, 1:1 + H, :].reshape(M, WC)

    # ---------------- conv1 -> bn1 -> relu ----------------
    h1 = jnp.maximum(batch_norm(conv3x3(x_id, xph_ref, w1_ref), g1_ref, b1_ref), 0.0)

    # Stage h1 with a 1-row H halo for conv2 (only the halo rows get zeroed).
    h1p_ref[:, 0:1, :] = jnp.zeros((N, 1, WC), f32)
    h1p_ref[:, H + 1:H + 2, :] = jnp.zeros((N, 1, WC), f32)
    h1p_ref[:, 1:1 + H, :] = h1.reshape(N, H, WC)

    # ---------------- conv2 -> bn2 ----------------
    h2 = batch_norm(conv3x3(h1, h1p_ref, w2_ref), g2_ref, b2_ref)

    # ---------------- spatial attention ----------------
    # Per-pixel channel mean / max via selector matmuls (keeps the lane-dense layout;
    # chm_ref[c] zeroes every lane not belonging to channel c, so the dot extracts exactly
    # that channel's value per pixel).
    avg = jnp.dot(h2, p_ref[...], preferred_element_type=f32) * (1.0 / C)        # (M, W)
    mx = jnp.dot(h2 * chm_ref[0:1, :], p_ref[...], preferred_element_type=f32)   # (M, W)
    for c in range(1, C):
        mx = jnp.maximum(mx, jnp.dot(h2 * chm_ref[c:c + 1, :], p_ref[...],
                                     preferred_element_type=f32))

    # Planar [avg | max] staged with a 3-row H halo (W padding is folded into the SA bands).
    sap_ref[:, 0:3, :] = jnp.zeros((N, 3, 2 * Wpix), f32)
    sap_ref[:, H + 3:H + 6, :] = jnp.zeros((N, 3, 2 * Wpix), f32)
    sap_ref[:, 3:3 + H, 0:Wpix] = avg.reshape(N, H, Wpix)
    sap_ref[:, 3:3 + H, Wpix:2 * Wpix] = mx.reshape(N, H, Wpix)

    # 7x7 / pad 3 SA conv = 7 banded matmuls (instead of 98 scalar FMA taps).
    att = jnp.dot(sap_ref[:, 0:H, :].reshape(M, 2 * Wpix), wsa_ref[0],
                  preferred_element_type=f32)
    for ky in range(1, 7):
        att = att + jnp.dot(sap_ref[:, ky:ky + H, :].reshape(M, 2 * Wpix), wsa_ref[ky],
                            preferred_element_type=f32)
    att = jax.nn.sigmoid(att)                                                     # (M, W)

    # Expand (M, W) -> (M, W*C) with the pixel-expansion selector, then
    # out = relu(sa(out) * out + identity), stored lane-dense.
    att_full = jnp.dot(att, pt_ref[...], preferred_element_type=f32)
    out_ref[...] = jnp.maximum(h2 * att_full + x_id, 0.0)


def _band3x3(w, W):
    """(Cout, Cin, 3, 3) conv weight -> (3, W*Cin, W*Cout) banded matrices.

    B[ky, x_in*Cin + ci, x*Cout + co] = w[co, ci, ky, x_in - x + 1] (zero outside the band),
    so one matmul per vertical tap applies all three horizontal taps and the W zero-padding."""
    wt = jnp.transpose(w, (2, 3, 1, 0)).astype(jnp.float32)                # (ky, kx, ci, co)
    D = jnp.stack([jnp.eye(W, k=1 - kx, dtype=jnp.float32) for kx in range(3)])
    B = jnp.einsum('kab,hkio->haibo', D, wt)                               # (3, W, Ci, W, Co)
    return B.reshape(3, W * w.shape[1], W * w.shape[0])


def _band7x7_sa(wsa, W):
    """(1, 2, 7, 7) SA conv weight -> (7, 2*W, W) banded matrices for the planar
    [avg | max] lane layout (channel 0 = mean, channel 1 = max, as in CBAM)."""
    wt = jnp.transpose(wsa[0], (1, 2, 0)).astype(jnp.float32)              # (ky, kx, ch)
    D = jnp.stack([jnp.eye(W, k=3 - kx, dtype=jnp.float32) for kx in range(7)])
    B = jnp.einsum('kab,hkc->hcab', D, wt)                                 # (7, 2, W, W)
    return B.reshape(7, 2 * W, W)


@functools.partial(jax.jit, static_argnames=("matmul_dtype",))
def basic_block_forward(x_nchw, w1, g1, b1, w2, g2, b2, wsa, *,
                        matmul_dtype=jnp.bfloat16):
    """x_nchw: (N, Cin, H, W). w1: (Cout, Cin, 3, 3), w2: (Cout, Cout, 3, 3),
    wsa: (1, 2, 7, 7), g*/b*: (Cout,). Returns NCHW (N, Cout, H, W) float32.
    matmul_dtype controls the conv matmul operand dtype (bf16 = MXU-friendly)."""
    N, Cin, H, W = x_nchw.shape
    Cout = w1.shape[0]
    assert Cin == Cout, "stride=1 / downsample=None requires in_channel == out_channel"
    WC = W * Cout

    # Lane-folded layout: (N, H, W*C); pad H only (W padding is folded into the bands).
    x_fold = jnp.transpose(x_nchw, (0, 2, 3, 1)).astype(jnp.float32).reshape(N, H, WC)
    xph = jnp.pad(x_fold, ((0, 0), (1, 1), (0, 0)))

    w1b = _band3x3(w1, W).astype(matmul_dtype)
    w2b = _band3x3(w2, W).astype(matmul_dtype)
    wsab = _band7x7_sa(wsa, W)                          # SA conv kept in f32 (tiny)

    # 0/1 selector matrices (all f32) used inside the kernel.
    eye_c = jnp.eye(Cout, dtype=jnp.float32)
    eye_w = jnp.eye(W, dtype=jnp.float32)
    sel_same_channel = jnp.tile(eye_c, (W, W))          # (WC, WC): BN per-channel reduce/broadcast
    sel_pixel_reduce = jnp.repeat(eye_w, Cout, axis=0)  # (WC, W) : lane -> pixel reduce
    sel_pixel_expand = jnp.repeat(eye_w, Cout, axis=1)  # (W, WC) : pixel -> lane expand
    chan_masks = jnp.tile(eye_c, (1, W))                # (C, WC) : per-channel lane masks

    g1t = jnp.tile(g1.astype(jnp.float32), W)[None, :]  # (1, WC) per-lane-tiled BN params
    b1t = jnp.tile(b1.astype(jnp.float32), W)[None, :]
    g2t = jnp.tile(g2.astype(jnp.float32), W)[None, :]
    b2t = jnp.tile(b2.astype(jnp.float32), W)[None, :]

    vmem = pl.BlockSpec(memory_space=pltpu.MemorySpace.VMEM)

    out2d = pl.pallas_call(
        _basic_block_kernel,
        out_shape=jax.ShapeDtypeStruct((N * H, WC), jnp.float32),   # lane-dense output slab
        in_specs=[vmem] * 12,
        out_specs=vmem,
        scratch_shapes=[
            pltpu.VMEM((N, H + 2, WC), jnp.float32),        # H-padded h1 for conv2
            pltpu.VMEM((N, H + 6, 2 * W), jnp.float32),     # H-padded planar [avg|max] for SA
        ],
        compiler_params=pltpu.CompilerParams(vmem_limit_bytes=32 * 1024 * 1024),
    )(xph, w1b, g1t, b1t, w2b, g2t, b2t, wsab,
      sel_same_channel, sel_pixel_reduce, sel_pixel_expand, chan_masks)

    return jnp.transpose(out2d.reshape(N, H, W, Cout), (0, 3, 1, 2))    # back to NCHW


def _reference(x, w1, g1, b1, w2, g2, b2, wsa):
    """Plain-JAX reference mirroring the PyTorch forward (NCHW)."""
    dn = ('NCHW', 'OIHW', 'NCHW')

    def conv(a, w, pad):
        return jax.lax.conv_general_dilated(a, w, (1, 1), [(pad, pad), (pad, pad)],
                                            dimension_numbers=dn)

    def bn(a, g, b):
        mu = jnp.mean(a, axis=(0, 2, 3), keepdims=True)
        var = jnp.mean((a - mu) ** 2, axis=(0, 2, 3), keepdims=True)
        return (a - mu) * jax.lax.rsqrt(var + BN_EPS) * g[None, :, None, None] + b[None, :, None, None]

    out = jax.nn.relu(bn(conv(x, w1, 1), g1, b1))
    out = bn(conv(out, w2, 1), g2, b2)
    att = jnp.concatenate([jnp.mean(out, axis=1, keepdims=True),
                           jnp.max(out, axis=1, keepdims=True)], axis=1)
    att = jax.nn.sigmoid(conv(att, wsa, 3))
    return jax.nn.relu(att * out + x)


if __name__ == "__main__":
    key = jax.random.PRNGKey(0)
    N, Cin, H, W = 2, 4, 16, 16
    Cout = Cin  # downsample=None, stride=1 -> residual add requires in_channel == out_channel

    ks = jax.random.split(key, 8)
    x = jax.random.normal(ks[0], (N, Cin, H, W), jnp.float32)
    w1 = jax.random.normal(ks[1], (Cout, Cin, 3, 3), jnp.float32) * 0.2
    w2 = jax.random.normal(ks[2], (Cout, Cout, 3, 3), jnp.float32) * 0.2
    wsa = jax.random.normal(ks[3], (1, 2, 7, 7), jnp.float32) * 0.2
    g1 = jax.random.uniform(ks[4], (Cout,), jnp.float32, 0.5, 1.5)
    b1 = jax.random.normal(ks[5], (Cout,), jnp.float32) * 0.1
    g2 = jax.random.uniform(ks[6], (Cout,), jnp.float32, 0.5, 1.5)
    b2 = jax.random.normal(ks[7], (Cout,), jnp.float32) * 0.1

    ref = _reference(x, w1, g1, b1, w2, g2, b2, wsa)

    # f32 matmul path: tight correctness check against the plain-JAX reference.
    out_f32 = jax.block_until_ready(
        basic_block_forward(x, w1, g1, b1, w2, g2, b2, wsa, matmul_dtype=jnp.float32))
    assert out_f32.shape == (N, Cout, H, W)
    err_f32 = float(jnp.max(jnp.abs(out_f32 - ref)))
    assert jnp.allclose(out_f32, ref, atol=1e-4, rtol=1e-4), f"f32 max_err={err_f32}"

    # bf16 matmul path (default, MXU-friendly): loose sanity check vs the f32 reference.
    out_bf16 = jax.block_until_ready(
        basic_block_forward(x, w1, g1, b1, w2, g2, b2, wsa))
    assert out_bf16.shape == (N, Cout, H, W)
    err_bf16 = float(jnp.max(jnp.abs(out_bf16 - ref)))
    assert err_bf16 < 0.25, f"bf16 max_err={err_bf16}"

    print("KERNEL_OK")
</pallas_src>

<mosaic_0001>
module attributes {stable_mosaic.version = 11 : i64} {
  func.func @_basic_block_kernel(%arg0: memref<2x18x64xf32, #tpu.memory_space<vmem>>, %arg1: memref<3x64x64xf32, #tpu.memory_space<vmem>>, %arg2: memref<1x64xf32, #tpu.memory_space<vmem>>, %arg3: memref<1x64xf32, #tpu.memory_space<vmem>>, %arg4: memref<3x64x64xf32, #tpu.memory_space<vmem>>, %arg5: memref<1x64xf32, #tpu.memory_space<vmem>>, %arg6: memref<1x64xf32, #tpu.memory_space<vmem>>, %arg7: memref<7x32x16xf32, #tpu.memory_space<vmem>>, %arg8: memref<64x64xf32, #tpu.memory_space<vmem>>, %arg9: memref<64x16xf32, #tpu.memory_space<vmem>>, %arg10: memref<16x64xf32, #tpu.memory_space<vmem>>, %arg11: memref<4x64xf32, #tpu.memory_space<vmem>>, %arg12: memref<32x64xf32, #tpu.memory_space<vmem>>, %arg13: memref<2x18x64xf32, #tpu.memory_space<vmem>>, %arg14: memref<2x22x32xf32, #tpu.memory_space<vmem>>) attributes {dimension_semantics = [], scalar_prefetch = 0 : i64, scratch_operands = 2 : i64, tpu.core_type = #tpu.core_type<tc>} {
    %c0 = arith.constant 0 : index
    %c1 = arith.constant 1 : index
    %c0_0 = arith.constant 0 : index
    %0 = vector.load %arg0[%c0, %c1, %c0_0] : memref<2x18x64xf32, #tpu.memory_space<vmem>>, vector<2x16x64xf32>
    %1 = vector.shape_cast %0 : vector<2x16x64xf32> to vector<32x64xf32>
    %c1_1 = arith.constant 1 : index
    %c0_2 = arith.constant 0 : index
    %c0_3 = arith.constant 0 : index
    %2 = vector.load %arg1[%c1_1, %c0_2, %c0_3] : memref<3x64x64xf32, #tpu.memory_space<vmem>>, vector<1x64x64xf32>
    %3 = vector.shape_cast %2 : vector<1x64x64xf32> to vector<64x64xf32>
    %cst = arith.constant dense<0.000000e+00> : vector<32x64xf32>
    %4 = tpu.matmul %1, %3, %cst {dimension_numbers = #tpu.dot_dimension_numbers<[1], [0], [0], [1], [0, 0, 1, 1], [], []>} : vector<32x64xf32>, vector<64x64xf32>, vector<32x64xf32> -> vector<32x64xf32>
    %c0_4 = arith.constant 0 : index
    %c0_5 = arith.constant 0 : index
    %c0_6 = arith.constant 0 : index
    %5 = vector.load %arg0[%c0_4, %c0_5, %c0_6] : memref<2x18x64xf32, #tpu.memory_space<vmem>>, vector<2x16x64xf32>
    %6 = vector.shape_cast %5 : vector<2x16x64xf32> to vector<32x64xf32>
    %c0_7 = arith.constant 0 : index
    %c0_8 = arith.constant 0 : index
    %c0_9 = arith.constant 0 : index
    %7 = vector.load %arg1[%c0_7, %c0_8, %c0_9] : memref<3x64x64xf32, #tpu.memory_space<vmem>>, vector<1x64x64xf32>
    %8 = vector.shape_cast %7 : vector<1x64x64xf32> to vector<64x64xf32>
    %cst_10 = arith.constant dense<0.000000e+00> : vector<32x64xf32>
    %9 = tpu.matmul %6, %8, %cst_10 {dimension_numbers = #tpu.dot_dimension_numbers<[1], [0], [0], [1], [0, 0, 1, 1], [], []>} : vector<32x64xf32>, vector<64x64xf32>, vector<32x64xf32> -> vector<32x64xf32>
    %10 = arith.addf %4, %9 : vector<32x64xf32>
    %c0_11 = arith.constant 0 : index
    %c2 = arith.constant 2 : index
    %c0_12 = arith.constant 0 : index
    %11 = vector.load %arg0[%c0_11, %c2, %c0_12] : memref<2x18x64xf32, #tpu.memory_space<vmem>>, vector<2x16x64xf32>
    %12 = vector.shape_cast %11 : vector<2x16x64xf32> to vector<32x64xf32>
    %c2_13 = arith.constant 2 : index
    %c0_14 = arith.constant 0 : index
    %c0_15 = arith.constant 0 : index
    %13 = vector.load %arg1[%c2_13, %c0_14, %c0_15] : memref<3x64x64xf32, #tpu.memory_space<vmem>>, vector<1x64x64xf32>
    %14 = vector.shape_cast %13 : vector<1x64x64xf32> to vector<64x64xf32>
    %cst_16 = arith.constant dense<0.000000e+00> : vector<32x64xf32>
    %15 = tpu.matmul %12, %14, %cst_16 {dimension_numbers = #tpu.dot_dimension_numbers<[1], [0], [0], [1], [0, 0, 1, 1], [], []>} : vector<32x64xf32>, vector<64x64xf32>, vector<32x64xf32> -> vector<32x64xf32>
    %16 = arith.addf %10, %15 : vector<32x64xf32>
    %cst_17 = arith.constant dense<0.000000e+00> : vector<64xf32>
    %17 = vector.multi_reduction <add>, %16, %cst_17 [0] : vector<32x64xf32> to vector<64xf32>
    %18 = vector.shape_cast %17 : vector<64xf32> to vector<1x64xf32>
    %19 = arith.mulf %16, %16 : vector<32x64xf32>
    %cst_18 = arith.constant dense<0.000000e+00> : vector<64xf32>
    %20 = vector.multi_reduction <add>, %19, %cst_18 [0] : vector<32x64xf32> to vector<64xf32>
    %21 = vector.shape_cast %20 : vector<64xf32> to vector<1x64xf32>
    %c0_19 = arith.constant 0 : index
    %c0_20 = arith.constant 0 : index
    %22 = vector.load %arg8[%c0_19, %c0_20] : memref<64x64xf32, #tpu.memory_space<vmem>>, vector<64x64xf32>
    %cst_21 = arith.constant dense<0.000000e+00> : vector<1x64xf32>
    %23 = tpu.matmul %18, %22, %cst_21 {dimension_numbers = #tpu.dot_dimension_numbers<[1], [0], [0], [1], [0, 0, 1, 1], [], []>} : vector<1x64xf32>, vector<64x64xf32>, vector<1x64xf32> -> vector<1x64xf32>
    %cst_22 = arith.constant 0.001953125 : f32
    %24 = vector.broadcast %cst_22 : f32 to vector<1x64xf32>
    %25 = arith.mulf %23, %24 : vector<1x64xf32>
    %c0_23 = arith.constant 0 : index
    %c0_24 = arith.constant 0 : index
    %26 = vector.load %arg8[%c0_23, %c0_24] : memref<64x64xf32, #tpu.memory_space<vmem>>, vector<64x64xf32>
    %cst_25 = arith.constant dense<0.000000e+00> : vector<1x64xf32>
    %27 = tpu.matmul %21, %26, %cst_25 {dimension_numbers = #tpu.dot_dimension_numbers<[1], [0], [0], [1], [0, 0, 1, 1], [], []>} : vector<1x64xf32>, vector<64x64xf32>, vector<1x64xf32> -> vector<1x64xf32>
    %cst_26 = arith.constant 0.001953125 : f32
    %28 = vector.broadcast %cst_26 : f32 to vector<1x64xf32>
    %29 = arith.mulf %27, %28 : vector<1x64xf32>
    %30 = arith.mulf %25, %25 : vector<1x64xf32>
    %31 = arith.subf %29, %30 : vector<1x64xf32>
    %c0_27 = arith.constant 0 : index
    %c0_28 = arith.constant 0 : index
    %32 = vector.load %arg2[%c0_27, %c0_28] : memref<1x64xf32, #tpu.memory_space<vmem>>, vector<1x64xf32>
    %cst_29 = arith.constant 9.99999974E-6 : f32
    %33 = vector.broadcast %cst_29 : f32 to vector<1x64xf32>
    %34 = arith.addf %31, %33 : vector<1x64xf32>
    %35 = math.rsqrt %34 : vector<1x64xf32>
    %36 = arith.mulf %32, %35 : vector<1x64xf32>
    %37 = vector.broadcast %25 : vector<1x64xf32> to vector<32x64xf32>
    %38 = arith.subf %16, %37 : vector<32x64xf32>
    %39 = vector.broadcast %36 : vector<1x64xf32> to vector<32x64xf32>
    %40 = arith.mulf %38, %39 : vector<32x64xf32>
    %c0_30 = arith.constant 0 : index
    %c0_31 = arith.constant 0 : index
    %41 = vector.load %arg3[%c0_30, %c0_31] : memref<1x64xf32, #tpu.memory_space<vmem>>, vector<1x64xf32>
    %42 = vector.broadcast %41 : vector<1x64xf32> to vector<32x64xf32>
    %43 = arith.addf %40, %42 : vector<32x64xf32>
    %cst_32 = arith.constant 0.000000e+00 : f32
    %44 = vector.broadcast %cst_32 : f32 to vector<32x64xf32>
    %45 = arith.maximumf %43, %44 : vector<32x64xf32>
    %cst_33 = arith.constant 0.000000e+00 : f32
    %46 = vector.broadcast %cst_33 : f32 to vector<2x1x64xf32>
    %c0_34 = arith.constant 0 : index
    %c0_35 = arith.constant 0 : index
    %c0_36 = arith.constant 0 : index
    %47 = vector.load %arg13[%c0_34, %c0_35, %c0_36] : memref<2x18x64xf32, #tpu.memory_space<vmem>>, vector<2x1x64xf32>
    tpu.vector_store %arg13[%c0_34, %c0_35, %c0_36], %46 {strides = array<i32>} : memref<2x18x64xf32, #tpu.memory_space<vmem>>, vector<2x1x64xf32>,
    %cst_37 = arith.constant 0.000000e+00 : f32
    %48 = vector.broadcast %cst_37 : f32 to vector<2x1x64xf32>
    %c0_38 = arith.constant 0 : index
    %c17 = arith.constant 17 : index
    %c0_39 = arith.constant 0 : index
    %49 = vector.load %arg13[%c0_38, %c17, %c0_39] : memref<2x18x64xf32, #tpu.memory_space<vmem>>, vector<2x1x64xf32>
    tpu.vector_store %arg13[%c0_38, %c17, %c0_39], %48 {strides = array<i32>} : memref<2x18x64xf32, #tpu.memory_space<vmem>>, vector<2x1x64xf32>,
    %50 = vector.shape_cast %45 : vector<32x64xf32> to vector<2x16x64xf32>
    %c0_40 = arith.constant 0 : index
    %c1_41 = arith.constant 1 : index
    %c0_42 = arith.constant 0 : index
    %51 = vector.load %arg13[%c0_40, %c1_41, %c0_42] : memref<2x18x64xf32, #tpu.memory_space<vmem>>, vector<2x16x64xf32>
    tpu.vector_store %arg13[%c0_40, %c1_41, %c0_42], %50 {strides = array<i32>} : memref<2x18x64xf32, #tpu.memory_space<vmem>>, vector<2x16x64xf32>,
    %c1_43 = arith.constant 1 : index
    %c0_44 = arith.constant 0 : index
    %c0_45 = arith.constant 0 : index
    %52 = vector.load %arg4[%c1_43, %c0_44, %c0_45] : memref<3x64x64xf32, #tpu.memory_space<vmem>>, vector<1x64x64xf32>
    %53 = vector.shape_cast %52 : vector<1x64x64xf32> to vector<64x64xf32>
    %cst_46 = arith.constant dense<0.000000e+00> : vector<32x64xf32>
    %54 = tpu.matmul %45, %53, %cst_46 {dimension_numbers = #tpu.dot_dimension_numbers<[1], [0], [0], [1], [0, 0, 1, 1], [], []>} : vector<32x64xf32>, vector<64x64xf32>, vector<32x64xf32> -> vector<32x64xf32>
    %c0_47 = arith.constant 0 : index
    %c0_48 = arith.constant 0 : index
    %c0_49 = arith.constant 0 : index
    %55 = vector.load %arg13[%c0_47, %c0_48, %c0_49] : memref<2x18x64xf32, #tpu.memory_space<vmem>>, vector<2x16x64xf32>
    %56 = vector.shape_cast %55 : vector<2x16x64xf32> to vector<32x64xf32>
    %c0_50 = arith.constant 0 : index
    %c0_51 = arith.constant 0 : index
    %c0_52 = arith.constant 0 : index
    %57 = vector.load %arg4[%c0_50, %c0_51, %c0_52] : memref<3x64x64xf32, #tpu.memory_space<vmem>>, vector<1x64x64xf32>
    %58 = vector.shape_cast %57 : vector<1x64x64xf32> to vector<64x64xf32>
    %cst_53 = arith.constant dense<0.000000e+00> : vector<32x64xf32>
    %59 = tpu.matmul %56, %58, %cst_53 {dimension_numbers = #tpu.dot_dimension_numbers<[1], [0], [0], [1], [0, 0, 1, 1], [], []>} : vector<32x64xf32>, vector<64x64xf32>, vector<32x64xf32> -> vector<32x64xf32>
    %60 = arith.addf %54, %59 : vector<32x64xf32>
    %c0_54 = arith.constant 0 : index
    %c2_55 = arith.constant 2 : index
    %c0_56 = arith.constant 0 : index
    %61 = vector.load %arg13[%c0_54, %c2_55, %c0_56] : memref<2x18x64xf32, #tpu.memory_space<vmem>>, vector<2x16x64xf32>
    %62 = vector.shape_cast %61 : vector<2x16x64xf32> to vector<32x64xf32>
    %c2_57 = arith.constant 2 : index
    %c0_58 = arith.constant 0 : index
    %c0_59 = arith.constant 0 : index
    %63 = vector.load %arg4[%c2_57, %c0_58, %c0_59] : memref<3x64x64xf32, #tpu.memory_space<vmem>>, vector<1x64x64xf32>
    %64 = vector.shape_cast %63 : vector<1x64x64xf32> to vector<64x64xf32>
    %cst_60 = arith.constant dense<0.000000e+00> : vector<32x64xf32>
    %65 = tpu.matmul %62, %64, %cst_60 {dimension_numbers = #tpu.dot_dimension_numbers<[1], [0], [0], [1], [0, 0, 1, 1], [], []>} : vector<32x64xf32>, vector<64x64xf32>, vector<32x64xf32> -> vector<32x64xf32>
    %66 = arith.addf %60, %65 : vector<32x64xf32>
    %cst_61 = arith.constant dense<0.000000e+00> : vector<64xf32>
    %67 = vector.multi_reduction <add>, %66, %cst_61 [0] : vector<32x64xf32> to vector<64xf32>
    %68 = vector.shape_cast %67 : vector<64xf32> to vector<1x64xf32>
    %69 = arith.mulf %66, %66 : vector<32x64xf32>
    %cst_62 = arith.constant dense<0.000000e+00> : vector<64xf32>
    %70 = vector.multi_reduction <add>, %69, %cst_62 [0] : vector<32x64xf32> to vector<64xf32>
    %71 = vector.shape_cast %70 : vector<64xf32> to vector<1x64xf32>
    %c0_63 = arith.constant 0 : index
    %c0_64 = arith.constant 0 : index
    %72 = vector.load %arg8[%c0_63, %c0_64] : memref<64x64xf32, #tpu.memory_space<vmem>>, vector<64x64xf32>
    %cst_65 = arith.constant dense<0.000000e+00> : vector<1x64xf32>
    %73 = tpu.matmul %68, %72, %cst_65 {dimension_numbers = #tpu.dot_dimension_numbers<[1], [0], [0], [1], [0, 0, 1, 1], [], []>} : vector<1x64xf32>, vector<64x64xf32>, vector<1x64xf32> -> vector<1x64xf32>
    %cst_66 = arith.constant 0.001953125 : f32
    %74 = vector.broadcast %cst_66 : f32 to vector<1x64xf32>
    %75 = arith.mulf %73, %74 : vector<1x64xf32>
    %c0_67 = arith.constant 0 : index
    %c0_68 = arith.constant 0 : index
    %76 = vector.load %arg8[%c0_67, %c0_68] : memref<64x64xf32, #tpu.memory_space<vmem>>, vector<64x64xf32>
    %cst_69 = arith.constant dense<0.000000e+00> : vector<1x64xf32>
    %77 = tpu.matmul %71, %76, %cst_69 {dimension_numbers = #tpu.dot_dimension_numbers<[1], [0], [0], [1], [0, 0, 1, 1], [], []>} : vector<1x64xf32>, vector<64x64xf32>, vector<1x64xf32> -> vector<1x64xf32>
    %cst_70 = arith.constant 0.001953125 : f32
    %78 = vector.broadcast %cst_70 : f32 to vector<1x64xf32>
    %79 = arith.mulf %77, %78 : vector<1x64xf32>
    %80 = arith.mulf %75, %75 : vector<1x64xf32>
    %81 = arith.subf %79, %80 : vector<1x64xf32>
    %c0_71 = arith.constant 0 : index
    %c0_72 = arith.constant 0 : index
    %82 = vector.load %arg5[%c0_71, %c0_72] : memref<1x64xf32, #tpu.memory_space<vmem>>, vector<1x64xf32>
    %cst_73 = arith.constant 9.99999974E-6 : f32
    %83 = vector.broadcast %cst_73 : f32 to vector<1x64xf32>
    %84 = arith.addf %81, %83 : vector<1x64xf32>
    %85 = math.rsqrt %84 : vector<1x64xf32>
    %86 = arith.mulf %82, %85 : vector<1x64xf32>
    %87 = vector.broadcast %75 : vector<1x64xf32> to vector<32x64xf32>
    %88 = arith.subf %66, %87 : vector<32x64xf32>
    %89 = vector.broadcast %86 : vector<1x64xf32> to vector<32x64xf32>
    %90 = arith.mulf %88, %89 : vector<32x64xf32>
    %c0_74 = arith.constant 0 : index
    %c0_75 = arith.constant 0 : index
    %91 = vector.load %arg6[%c0_74, %c0_75] : memref<1x64xf32, #tpu.memory_space<vmem>>, vector<1x64xf32>
    %92 = vector.broadcast %91 : vector<1x64xf32> to vector<32x64xf32>
    %93 = arith.addf %90, %92 : vector<32x64xf32>
    %c0_76 = arith.constant 0 : index
    %c0_77 = arith.constant 0 : index
    %94 = vector.load %arg9[%c0_76, %c0_77] : memref<64x16xf32, #tpu.memory_space<vmem>>, vector<64x16xf32>
    %cst_78 = arith.constant dense<0.000000e+00> : vector<32x16xf32>
    %95 = tpu.matmul %93, %94, %cst_78 {dimension_numbers = #tpu.dot_dimension_numbers<[1], [0], [0], [1], [0, 0, 1, 1], [], []>} : vector<32x64xf32>, vector<64x16xf32>, vector<32x16xf32> -> vector<32x16xf32>
    %cst_79 = arith.constant 2.500000e-01 : f32
    %96 = vector.broadcast %cst_79 : f32 to vector<32x16xf32>
    %97 = arith.mulf %95, %96 : vector<32x16xf32>
    %c0_80 = arith.constant 0 : index
    %c0_81 = arith.constant 0 : index
    %98 = vector.load %arg11[%c0_80, %c0_81] : memref<4x64xf32, #tpu.memory_space<vmem>>, vector<1x64xf32>
    %99 = vector.broadcast %98 : vector<1x64xf32> to vector<32x64xf32>
    %100 = arith.mulf %93, %99 : vector<32x64xf32>
    %c0_82 = arith.constant 0 : index
    %c0_83 = arith.constant 0 : index
    %101 = vector.load %arg9[%c0_82, %c0_83] : memref<64x16xf32, #tpu.memory_space<vmem>>, vector<64x16xf32>
    %cst_84 = arith.constant dense<0.000000e+00> : vector<32x16xf32>
    %102 = tpu.matmul %100, %101, %cst_84 {dimension_numbers = #tpu.dot_dimension_numbers<[1], [0], [0], [1], [0, 0, 1, 1], [], []>} : vector<32x64xf32>, vector<64x16xf32>, vector<32x16xf32> -> vector<32x16xf32>
    %c1_85 = arith.constant 1 : index
    %c0_86 = arith.constant 0 : index
    %103 = vector.load %arg11[%c1_85, %c0_86] : memref<4x64xf32, #tpu.memory_space<vmem>>, vector<1x64xf32>
    %104 = vector.broadcast %103 : vector<1x64xf32> to vector<32x64xf32>
    %105 = arith.mulf %93, %104 : vector<32x64xf32>
    %c0_87 = arith.constant 0 : index
    %c0_88 = arith.constant 0 : index
    %106 = vector.load %arg9[%c0_87, %c0_88] : memref<64x16xf32, #tpu.memory_space<vmem>>, vector<64x16xf32>
    %cst_89 = arith.constant dense<0.000000e+00> : vector<32x16xf32>
    %107 = tpu.matmul %105, %106, %cst_89 {dimension_numbers = #tpu.dot_dimension_numbers<[1], [0], [0], [1], [0, 0, 1, 1], [], []>} : vector<32x64xf32>, vector<64x16xf32>, vector<32x16xf32> -> vector<32x16xf32>
    %108 = arith.maximumf %102, %107 : vector<32x16xf32>
    %c2_90 = arith.constant 2 : index
    %c0_91 = arith.constant 0 : index
    %109 = vector.load %arg11[%c2_90, %c0_91] : memref<4x64xf32, #tpu.memory_space<vmem>>, vector<1x64xf32>
    %110 = vector.broadcast %109 : vector<1x64xf32> to vector<32x64xf32>
    %111 = arith.mulf %93, %110 : vector<32x64xf32>
    %c0_92 = arith.constant 0 : index
    %c0_93 = arith.constant 0 : index
    %112 = vector.load %arg9[%c0_92, %c0_93] : memref<64x16xf32, #tpu.memory_space<vmem>>, vector<64x16xf32>
    %cst_94 = arith.constant dense<0.000000e+00> : vector<32x16xf32>
    %113 = tpu.matmul %111, %112, %cst_94 {dimension_numbers = #tpu.dot_dimension_numbers<[1], [0], [0], [1], [0, 0, 1, 1], [], []>} : vector<32x64xf32>, vector<64x16xf32>, vector<32x16xf32> -> vector<32x16xf32>
    %114 = arith.maximumf %108, %113 : vector<32x16xf32>
    %c3 = arith.constant 3 : index
    %c0_95 = arith.constant 0 : index
    %115 = vector.load %arg11[%c3, %c0_95] : memref<4x64xf32, #tpu.memory_space<vmem>>, vector<1x64xf32>
    %116 = vector.broadcast %115 : vector<1x64xf32> to vector<32x64xf32>
    %117 = arith.mulf %93, %116 : vector<32x64xf32>
    %c0_96 = arith.constant 0 : index
    %c0_97 = arith.constant 0 : index
    %118 = vector.load %arg9[%c0_96, %c0_97] : memref<64x16xf32, #tpu.memory_space<vmem>>, vector<64x16xf32>
    %cst_98 = arith.constant dense<0.000000e+00> : vector<32x16xf32>
    %119 = tpu.matmul %117, %118, %cst_98 {dimension_numbers = #tpu.dot_dimension_numbers<[1], [0], [0], [1], [0, 0, 1, 1], [], []>} : vector<32x64xf32>, vector<64x16xf32>, vector<32x16xf32> -> vector<32x16xf32>
    %120 = arith.maximumf %114, %119 : vector<32x16xf32>
    %cst_99 = arith.constant 0.000000e+00 : f32
    %121 = vector.broadcast %cst_99 : f32 to vector<2x3x32xf32>
    %c0_100 = arith.constant 0 : index
    %c0_101 = arith.constant 0 : index
    %c0_102 = arith.constant 0 : index
    %122 = vector.load %arg14[%c0_100, %c0_101, %c0_102] : memref<2x22x32xf32, #tpu.memory_space<vmem>>, vector<2x3x32xf32>
    tpu.vector_store %arg14[%c0_100, %c0_101, %c0_102], %121 {strides = array<i32>} : memref<2x22x32xf32, #tpu.memory_space<vmem>>, vector<2x3x32xf32>,
    %cst_103 = arith.constant 0.000000e+00 : f32
    %123 = vector.broadcast %cst_103 : f32 to vector<2x3x32xf32>
    %c0_104 = arith.constant 0 : index
    %c19 = arith.constant 19 : index
    %c0_105 = arith.constant 0 : index
    %124 = vector.load %arg14[%c0_104, %c19, %c0_105] : memref<2x22x32xf32, #tpu.memory_space<vmem>>, vector<2x3x32xf32>
    tpu.vector_store %arg14[%c0_104, %c19, %c0_105], %123 {strides = array<i32>} : memref<2x22x32xf32, #tpu.memory_space<vmem>>, vector<2x3x32xf32>,
    %125 = vector.shape_cast %97 : vector<32x16xf32> to vector<2x16x16xf32>
    %c0_106 = arith.constant 0 : index
    %c3_107 = arith.constant 3 : index
    %c0_108 = arith.constant 0 : index
    %126 = vector.load %arg14[%c0_106, %c3_107, %c0_108] : memref<2x22x32xf32, #tpu.memory_space<vmem>>, vector<2x16x16xf32>
    tpu.vector_store %arg14[%c0_106, %c3_107, %c0_108], %125 {strides = array<i32>} : memref<2x22x32xf32, #tpu.memory_space<vmem>>, vector<2x16x16xf32>,
    %127 = vector.shape_cast %120 : vector<32x16xf32> to vector<2x16x16xf32>
    %c0_109 = arith.constant 0 : index
    %c3_110 = arith.constant 3 : index
    %c16 = arith.constant 16 : index
    %128 = vector.load %arg14[%c0_109, %c3_110, %c16] : memref<2x22x32xf32, #tpu.memory_space<vmem>>, vector<2x16x16xf32>
    tpu.vector_store %arg14[%c0_109, %c3_110, %c16], %127 {strides = array<i32>} : memref<2x22x32xf32, #tpu.memory_space<vmem>>, vector<2x16x16xf32>,
    %c0_111 = arith.constant 0 : index
    %c0_112 = arith.constant 0 : index
    %c0_113 = arith.constant 0 : index
    %129 = vector.load %arg14[%c0_111, %c0_112, %c0_113] : memref<2x22x32xf32, #tpu.memory_space<vmem>>, vector<2x16x32xf32>
    %130 = vector.shape_cast %129 : vector<2x16x32xf32> to vector<32x32xf32>
    %c0_114 = arith.constant 0 : index
    %c0_115 = arith.constant 0 : index
    %c0_116 = arith.constant 0 : index
    %131 = vector.load %arg7[%c0_114, %c0_115, %c0_116] : memref<7x32x16xf32, #tpu.memory_space<vmem>>, vector<1x32x16xf32>
    %132 = vector.shape_cast %131 : vector<1x32x16xf32> to vector<32x16xf32>
    %cst_117 = arith.constant dense<0.000000e+00> : vector<32x16xf32>
    %133 = tpu.matmul %130, %132, %cst_117 {dimension_numbers = #tpu.dot_dimension_numbers<[1], [0], [0], [1], [0, 0, 1, 1], [], []>} : vector<32x32xf32>, vector<32x16xf32>, vector<32x16xf32> -> vector<32x16xf32>
    %c0_118 = arith.constant 0 : index
    %c1_119 = arith.constant 1 : index
    %c0_120 = arith.constant 0 : index
    %134 = vector.load %arg14[%c0_118, %c1_119, %c0_120] : memref<2x22x32xf32, #tpu.memory_space<vmem>>, vector<2x16x32xf32>
    %135 = vector.shape_cast %134 : vector<2x16x32xf32> to vector<32x32xf32>
    %c1_121 = arith.constant 1 : index
    %c0_122 = arith.constant 0 : index
    %c0_123 = arith.constant 0 : index
    %136 = vector.load %arg7[%c1_121, %c0_122, %c0_123] : memref<7x32x16xf32, #tpu.memory_space<vmem>>, vector<1x32x16xf32>
    %137 = vector.shape_cast %136 : vector<1x32x16xf32> to vector<32x16xf32>
    %cst_124 = arith.constant dense<0.000000e+00> : vector<32x16xf32>
    %138 = tpu.matmul %135, %137, %cst_124 {dimension_numbers = #tpu.dot_dimension_numbers<[1], [0], [0], [1], [0, 0, 1, 1], [], []>} : vector<32x32xf32>, vector<32x16xf32>, vector<32x16xf32> -> vector<32x16xf32>
    %139 = arith.addf %133, %138 : vector<32x16xf32>
    %c0_125 = arith.constant 0 : index
    %c2_126 = arith.constant 2 : index
    %c0_127 = arith.constant 0 : index
    %140 = vector.load %arg14[%c0_125, %c2_126, %c0_127] : memref<2x22x32xf32, #tpu.memory_space<vmem>>, vector<2x16x32xf32>
    %141 = vector.shape_cast %140 : vector<2x16x32xf32> to vector<32x32xf32>
    %c2_128 = arith.constant 2 : index
    %c0_129 = arith.constant 0 : index
    %c0_130 = arith.constant 0 : index
    %142 = vector.load %arg7[%c2_128, %c0_129, %c0_130] : memref<7x32x16xf32, #tpu.memory_space<vmem>>, vector<1x32x16xf32>
    %143 = vector.shape_cast %142 : vector<1x32x16xf32> to vector<32x16xf32>
    %cst_131 = arith.constant dense<0.000000e+00> : vector<32x16xf32>
    %144 = tpu.matmul %141, %143, %cst_131 {dimension_numbers = #tpu.dot_dimension_numbers<[1], [0], [0], [1], [0, 0, 1, 1], [], []>} : vector<32x32xf32>, vector<32x16xf32>, vector<32x16xf32> -> vector<32x16xf32>
    %145 = arith.addf %139, %144 : vector<32x16xf32>
    %c0_132 = arith.constant 0 : index
    %c3_133 = arith.constant 3 : index
    %c0_134 = arith.constant 0 : index
    %146 = vector.load %arg14[%c0_132, %c3_133, %c0_134] : memref<2x22x32xf32, #tpu.memory_space<vmem>>, vector<2x16x32xf32>
    %147 = vector.shape_cast %146 : vector<2x16x32xf32> to vector<32x32xf32>
    %c3_135 = arith.constant 3 : index
    %c0_136 = arith.constant 0 : index
    %c0_137 = arith.constant 0 : index
    %148 = vector.load %arg7[%c3_135, %c0_136, %c0_137] : memref<7x32x16xf32, #tpu.memory_space<vmem>>, vector<1x32x16xf32>
    %149 = vector.shape_cast %148 : vector<1x32x16xf32> to vector<32x16xf32>
    %cst_138 = arith.constant dense<0.000000e+00> : vector<32x16xf32>
    %150 = tpu.matmul %147, %149, %cst_138 {dimension_numbers = #tpu.dot_dimension_numbers<[1], [0], [0], [1], [0, 0, 1, 1], [], []>} : vector<32x32xf32>, vector<32x16xf32>, vector<32x16xf32> -> vector<32x16xf32>
    %151 = arith.addf %145, %150 : vector<32x16xf32>
    %c0_139 = arith.constant 0 : index
    %c4 = arith.constant 4 : index
    %c0_140 = arith.constant 0 : index
    %152 = vector.load %arg14[%c0_139, %c4, %c0_140] : memref<2x22x32xf32, #tpu.memory_space<vmem>>, vector<2x16x32xf32>
    %153 = vector.shape_cast %152 : vector<2x16x32xf32> to vector<32x32xf32>
    %c4_141 = arith.constant 4 : index
    %c0_142 = arith.constant 0 : index
    %c0_143 = arith.constant 0 : index
    %154 = vector.load %arg7[%c4_141, %c0_142, %c0_143] : memref<7x32x16xf32, #tpu.memory_space<vmem>>, vector<1x32x16xf32>
    %155 = vector.shape_cast %154 : vector<1x32x16xf32> to vector<32x16xf32>
    %cst_144 = arith.constant dense<0.000000e+00> : vector<32x16xf32>
    %156 = tpu.matmul %153, %155, %cst_144 {dimension_numbers = #tpu.dot_dimension_numbers<[1], [0], [0], [1], [0, 0, 1, 1], [], []>} : vector<32x32xf32>, vector<32x16xf32>, vector<32x16xf32> -> vector<32x16xf32>
    %157 = arith.addf %151, %156 : vector<32x16xf32>
    %c0_145 = arith.constant 0 : index
    %c5 = arith.constant 5 : index
    %c0_146 = arith.constant 0 : index
    %158 = vector.load %arg14[%c0_145, %c5, %c0_146] : memref<2x22x32xf32, #tpu.memory_space<vmem>>, vector<2x16x32xf32>
    %159 = vector.shape_cast %158 : vector<2x16x32xf32> to vector<32x32xf32>
    %c5_147 = arith.constant 5 : index
    %c0_148 = arith.constant 0 : index
    %c0_149 = arith.constant 0 : index
    %160 = vector.load %arg7[%c5_147, %c0_148, %c0_149] : memref<7x32x16xf32, #tpu.memory_space<vmem>>, vector<1x32x16xf32>
    %161 = vector.shape_cast %160 : vector<1x32x16xf32> to vector<32x16xf32>
    %cst_150 = arith.constant dense<0.000000e+00> : vector<32x16xf32>
    %162 = tpu.matmul %159, %161, %cst_150 {dimension_numbers = #tpu.dot_dimension_numbers<[1], [0], [0], [1], [0, 0, 1, 1], [], []>} : vector<32x32xf32>, vector<32x16xf32>, vector<32x16xf32> -> vector<32x16xf32>
    %163 = arith.addf %157, %162 : vector<32x16xf32>
    %c0_151 = arith.constant 0 : index
    %c6 = arith.constant 6 : index
    %c0_152 = arith.constant 0 : index
    %164 = vector.load %arg14[%c0_151, %c6, %c0_152] : memref<2x22x32xf32, #tpu.memory_space<vmem>>, vector<2x16x32xf32>
    %165 = vector.shape_cast %164 : vector<2x16x32xf32> to vector<32x32xf32>
    %c6_153 = arith.constant 6 : index
    %c0_154 = arith.constant 0 : index
    %c0_155 = arith.constant 0 : index
    %166 = vector.load %arg7[%c6_153, %c0_154, %c0_155] : memref<7x32x16xf32, #tpu.memory_space<vmem>>, vector<1x32x16xf32>
    %167 = vector.shape_cast %166 : vector<1x32x16xf32> to vector<32x16xf32>
    %cst_156 = arith.constant dense<0.000000e+00> : vector<32x16xf32>
    %168 = tpu.matmul %165, %167, %cst_156 {dimension_numbers = #tpu.dot_dimension_numbers<[1], [0], [0], [1], [0, 0, 1, 1], [], []>} : vector<32x32xf32>, vector<32x16xf32>, vector<32x16xf32> -> vector<32x16xf32>
    %169 = arith.addf %163, %168 : vector<32x16xf32>
    %170 = arith.negf %169 : vector<32x16xf32>
    %171 = math.exp %170 : vector<32x16xf32>
    %cst_157 = arith.constant 1.000000e+00 : f32
    %172 = vector.broadcast %cst_157 : f32 to vector<32x16xf32>
    %173 = arith.addf %172, %171 : vector<32x16xf32>
    %174 = arith.divf %172, %173 : vector<32x16xf32>
    %c0_158 = arith.constant 0 : index
    %c0_159 = arith.constant 0 : index
    %175 = vector.load %arg10[%c0_158, %c0_159] : memref<16x64xf32, #tpu.memory_space<vmem>>, vector<16x64xf32>
    %cst_160 = arith.constant dense<0.000000e+00> : vector<32x64xf32>
    %176 = tpu.matmul %174, %175, %cst_160 {dimension_numbers = #tpu.dot_dimension_numbers<[1], [0], [0], [1], [0, 0, 1, 1], [], []>} : vector<32x16xf32>, vector<16x64xf32>, vector<32x64xf32> -> vector<32x64xf32>
    %177 = arith.mulf %93, %176 : vector<32x64xf32>
    %178 = arith.addf %177, %1 : vector<32x64xf32>
    %cst_161 = arith.constant 0.000000e+00 : f32
    %179 = vector.broadcast %cst_161 : f32 to vector<32x64xf32>
    %180 = arith.maximumf %178, %179 : vector<32x64xf32>
    %c0_162 = arith.constant 0 : index
    %c0_163 = arith.constant 0 : index
    %181 = vector.load %arg12[%c0_162, %c0_163] : memref<32x64xf32, #tpu.memory_space<vmem>>, vector<32x64xf32>
    tpu.vector_store %arg12[%c0_162, %c0_163], %180 {strides = array<i32>} : memref<32x64xf32, #tpu.memory_space<vmem>>, vector<32x64xf32>,
    return
  }
}

</mosaic_0001>

<llo_original>
// kernel: tile.43
$region0: #{tile.43}
  #allocation0 [shape = 's32[1]{0}', space=sflag, size = 0x4, scoped, tag = 'scoped memory for tile.43']
  %s0 = inlined_call_operand.vmem [shape: f32[4], index: 0, kind: input, shape index: {}]
  %s1 = inlined_call_operand.vmem [shape: f32[16,4], index: 1, kind: output, shape index: {}]
  // Predicated region
  $region2: #{tile.43} parent=0 // pred_check
    _
  $region3: #{tile.43} parent=0 // pred_check_branch
    %3 = sbr.rel (0) target = $region5
  $region4: #{tile.43} parent=0 // pred_region
    _
  $region5: #{tile.43} parent=0 // pred_fallthru
    _
  %v4 = vld [vmem:[%s0] ss:$0 sm:$0xff]
  %5 = vst [vmem:[%s1] sm:$0xff] %v4
  %s6 = scalar_lea.vmem %s1, 8
  %7 = vst [vmem:[%s6] sm:$0xff] %v4

// kernel: tile.44
$region0: #{tile.44}
  %s0 = inlined_call_operand.vmem [shape: f32[16,4], index: 0, kind: input, shape index: {}]
  %s1 = inlined_call_operand.vmem [shape: f32[1,64], index: 1, kind: output, shape index: {}]
  $region1: #{tile.44} parent=0
    #allocation0 [shape = 'u8[4096]{0}', space=vmem, size = 0x1000, scoped, tag = 'scoped mem for output reshape']
    %v2 = vld [vmem:[%s0] sm:$0x1]
    %vm3 = vcmask 31744
    %4 = vst.msk [vmem:[#allocation0] sm:$0x1] %vm3, %v2
    %s5 = scalar_lea.vmem %s0, 15
    %v6 = vld [vmem:[%s5] sm:$0x1]
    %7 = vrot.lane.b32.xlu0 %v6, 60
    %v8 = vpop.permute.xlu0 %7
    %vm9 = vcmask 523744
    %10 = vst.msk [vmem:[#allocation0] sm:$0x1] %vm9, %v8
    %s11 = scalar_lea.vmem %s0, 14
    %v12 = vld [vmem:[%s11] sm:$0x1]
    %13 = vrot.lane.b32.xlu0 %v12, 56
    %v14 = vpop.permute.xlu0 %13
    %vm15 = vcmask 490944
    %16 = vst.msk [vmem:[#allocation0] sm:$0x1] %vm15, %v14
    %s17 = scalar_lea.vmem %s0, 13
    %v18 = vld [vmem:[%s17] sm:$0x1]
    %19 = vrot.lane.b32.xlu0 %v18, 52
    %v20 = vpop.permute.xlu0 %19
    %vm21 = vcmask 458144
    %22 = vst.msk [vmem:[#allocation0] sm:$0x1] %vm21, %v20
    %s23 = scalar_lea.vmem %s0, 12
    %v24 = vld [vmem:[%s23] sm:$0x1]
    %25 = vrot.lane.b32.xlu0 %v24, 48
    %v26 = vpop.permute.xlu0 %25
    %vm27 = vcmask 425344
    %28 = vst.msk [vmem:[#allocation0] sm:$0x1] %vm27, %v26
    %s29 = scalar_lea.vmem %s0, 11
    %v30 = vld [vmem:[%s29] sm:$0x1]
    %31 = vrot.lane.b32.xlu0 %v30, 44
    %v32 = vpop.permute.xlu0 %31
    %vm33 = vcmask 392544
    %34 = vst.msk [vmem:[#allocation0] sm:$0x1] %vm33, %v32
    %s35 = scalar_lea.vmem %s0, 10
    %v36 = vld [vmem:[%s35] sm:$0x1]
    %37 = vrot.lane.b32.xlu0 %v36, 40
    %v38 = vpop.permute.xlu0 %37
    %vm39 = vcmask 359744
    %40 = vst.msk [vmem:[#allocation0] sm:$0x1] %vm39, %v38
    %s41 = scalar_lea.vmem %s0, 9
    %v42 = vld [vmem:[%s41] sm:$0x1]
    %43 = vrot.lane.b32.xlu0 %v42, 36
    %v44 = vpop.permute.xlu0 %43
    %vm45 = vcmask 326944
    %46 = vst.msk [vmem:[#allocation0] sm:$0x1] %vm45, %v44
    %s47 = scalar_lea.vmem %s0, 8
    %v48 = vld [vmem:[%s47] sm:$0x1]
    %49 = vrot.lane.b32.xlu0 %v48, 32
    %v50 = vpop.permute.xlu0 %49
    %vm51 = vcmask 294144
    %52 = vst.msk [vmem:[#allocation0] sm:$0x1] %vm51, %v50
    %s53 = scalar_lea.vmem %s0, 7
    %v54 = vld [vmem:[%s53] sm:$0x1]
    %55 = vrot.lane.b32.xlu0 %v54, 28
    %v56 = vpop.permute.xlu0 %55
    %vm57 = vcmask 261344
    %58 = vst.msk [vmem:[#allocation0] sm:$0x1] %vm57, %v56
    %s59 = scalar_lea.vmem %s0, 6
    %v60 = vld [vmem:[%s59] sm:$0x1]
    %61 = vrot.lane.b32.xlu0 %v60, 24
    %v62 = vpop.permute.xlu0 %61
    %vm63 = vcmask 228544
    %64 = vst.msk [vmem:[#allocation0] sm:$0x1] %vm63, %v62
    %s65 = scalar_lea.vmem %s0, 5
    %v66 = vld [vmem:[%s65] sm:$0x1]
    %67 = vrot.lane.b32.xlu0 %v66, 20
    %v68 = vpop.permute.xlu0 %67
    %vm69 = vcmask 195744
    %70 = vst.msk [vmem:[#allocation0] sm:$0x1] %vm69, %v68
    %s71 = scalar_lea.vmem %s0, 4
    %v72 = vld [vmem:[%s71] sm:$0x1]
    %73 = vrot.lane.b32.xlu0 %v72, 16
    %v74 = vpop.permute.xlu0 %73
    %vm75 = vcmask 162944
    %76 = vst.msk [vmem:[#allocation0] sm:$0x1] %vm75, %v74
    %s77 = scalar_lea.vmem %s0, 3
    %v78 = vld [vmem:[%s77] sm:$0x1]
    %79 = vrot.lane.b32.xlu0 %v78, 12
    %v80 = vpop.permute.xlu0 %79
    %vm81 = vcmask 130144
    %82 = vst.msk [vmem:[#allocation0] sm:$0x1] %vm81, %v80
    %s83 = scalar_lea.vmem %s0, 2
    %v84 = vld [vmem:[%s83] sm:$0x1]
    %85 = vrot.lane.b32.xlu0 %v84, 8
    %v86 = vpop.permute.xlu0 %85
    %vm87 = vcmask 97344
    %88 = vst.msk [vmem:[#allocation0] sm:$0x1] %vm87, %v86
    %s89 = scalar_lea.vmem %s0, 1
    %v90 = vld [vmem:[%s89] sm:$0x1]
    %91 = vrot.lane.b32.xlu0 %v90, 4
    %v92 = vpop.permute.xlu0 %91
    %vm93 = vcmask 64544
    %94 = vst.msk [vmem:[#allocation0] sm:$0x1] %vm93, %v92
    %s96 = sshllo.u32 0, 1
    %v98 = vld [vmem:[#allocation0] sm:%s96]
    %s99 = sshllo.u32 0, 1
    %100 = vst [vmem:[%s1] sm:%s99] %v98

// kernel: tile.33
$region0: #{tile.33}
  #allocation0 [shape = 's32[1]{0}', space=sflag, size = 0x4, scoped, tag = 'scoped memory for tile.33']
  %s0 = inlined_call_operand.vmem [shape: f32[4,4], index: 0, kind: input, shape index: {}]
  %s1 = inlined_call_operand.vmem [shape: f32[16,4,16,4], index: 1, kind: output, shape index: {}]
  // Predicated region
  $region2: #{tile.33} parent=0 // pred_check
    _
  $region3: #{tile.33} parent=0 // pred_check_branch
    %3 = sbr.rel (0) target = $region5
  $region4: #{tile.33} parent=0 // pred_region
    _
  $region5: #{tile.33} parent=0 // pred_fallthru
    _
  %v4 = vld [vmem:[%s0] ss:$0 sm:$0xff]
  %5 = vst [vmem:[%s1] sm:$0xff] %v4
  %s6 = scalar_lea.vmem %s1, 64
  %7 = vst [vmem:[%s6] sm:$0xff] %v4
  %s8 = scalar_lea.vmem %s1, 128
  %9 = vst [vmem:[%s8] sm:$0xff] %v4
  %s10 = scalar_lea.vmem %s1, 192
  %11 = vst [vmem:[%s10] sm:$0xff] %v4
  %s12 = scalar_lea.vmem %s1, 256
  %13 = vst [vmem:[%s12] sm:$0xff] %v4
  %s14 = scalar_lea.vmem %s1, 320
  %15 = vst [vmem:[%s14] sm:$0xff] %v4
  %s16 = scalar_lea.vmem %s1, 384
  %17 = vst [vmem:[%s16] sm:$0xff] %v4
  %s18 = scalar_lea.vmem %s1, 448
  %19 = vst [vmem:[%s18] sm:$0xff] %v4
  %s20 = scalar_lea.vmem %s1, 512
  %21 = vst [vmem:[%s20] sm:$0xff] %v4
  %s22 = scalar_lea.vmem %s1, 576
  %23 = vst [vmem:[%s22] sm:$0xff] %v4
  %s24 = scalar_lea.vmem %s1, 640
  %25 = vst [vmem:[%s24] sm:$0xff] %v4
  %s26 = scalar_lea.vmem %s1, 704
  %27 = vst [vmem:[%s26] sm:$0xff] %v4
  %s28 = scalar_lea.vmem %s1, 768
  %29 = vst [vmem:[%s28] sm:$0xff] %v4
  %s30 = scalar_lea.vmem %s1, 832
  %31 = vst [vmem:[%s30] sm:$0xff] %v4
  %s32 = scalar_lea.vmem %s1, 896
  %33 = vst [vmem:[%s32] sm:$0xff] %v4
  %s34 = scalar_lea.vmem %s1, 960
  %35 = vst [vmem:[%s34] sm:$0xff] %v4
  %s36 = scalar_lea.vmem %s0, 1
  %v37 = vld [vmem:[%s36] ss:$0 sm:$0xff]
  %s38 = scalar_lea.vmem %s1, 16
  %39 = vst [vmem:[%s38] sm:$0xff] %v37
  %s40 = scalar_lea.vmem %s1, 80
  %41 = vst [vmem:[%s40] sm:$0xff] %v37
  %s42 = scalar_lea.vmem %s1, 144
  %43 = vst [vmem:[%s42] sm:$0xff] %v37
  %s44 = scalar_lea.vmem %s1, 208
  %45 = vst [vmem:[%s44] sm:$0xff] %v37
  %s46 = scalar_lea.vmem %s1, 272
  %47 = vst [vmem:[%s46] sm:$0xff] %v37
  %s48 = scalar_lea.vmem %s1, 336
  %49 = vst [vmem:[%s48] sm:$0xff] %v37
  %s50 = scalar_lea.vmem %s1, 400
  %51 = vst [vmem:[%s50] sm:$0xff] %v37
  %s52 = scalar_lea.vmem %s1, 464
  %53 = vst [vmem:[%s52] sm:$0xff] %v37
  %s54 = scalar_lea.vmem %s1, 528
  %55 = vst [vmem:[%s54] sm:$0xff] %v37
  %s56 = scalar_lea.vmem %s1, 592
  %57 = vst [vmem:[%s56] sm:$0xff] %v37
  %s58 = scalar_lea.vmem %s1, 656
  %59 = vst [vmem:[%s58] sm:$0xff] %v37
  %s60 = scalar_lea.vmem %s1, 720
  %61 = vst [vmem:[%s60] sm:$0xff] %v37
  %s62 = scalar_lea.vmem %s1, 784
  %63 = vst [vmem:[%s62] sm:$0xff] %v37
  %s64 = scalar_lea.vmem %s1, 848
  %65 = vst [vmem:[%s64] sm:$0xff] %v37
  %s66 = scalar_lea.vmem %s1, 912
  %67 = vst [vmem:[%s66] sm:$0xff] %v37
  %s68 = scalar_lea.vmem %s1, 976
  %69 = vst [vmem:[%s68] sm:$0xff] %v37
  %s70 = scalar_lea.vmem %s0, 2
  %v71 = vld [vmem:[%s70] ss:$0 sm:$0xff]
  %s72 = scalar_lea.vmem %s1, 32
  %73 = vst [vmem:[%s72] sm:$0xff] %v71
  %s74 = scalar_lea.vmem %s1, 96
  %75 = vst [vmem:[%s74] sm:$0xff] %v71
  %s76 = scalar_lea.vmem %s1, 160
  %77 = vst [vmem:[%s76] sm:$0xff] %v71
  %s78 = scalar_lea.vmem %s1, 224
  %79 = vst [vmem:[%s78] sm:$0xff] %v71
  %s80 = scalar_lea.vmem %s1, 288
  %81 = vst [vmem:[%s80] sm:$0xff] %v71
  %s82 = scalar_lea.vmem %s1, 352
  %83 = vst [vmem:[%s82] sm:$0xff] %v71
  %s84 = scalar_lea.vmem %s1, 416
  %85 = vst [vmem:[%s84] sm:$0xff] %v71
  %s86 = scalar_lea.vmem %s1, 480
  %87 = vst [vmem:[%s86] sm:$0xff] %v71
  %s88 = scalar_lea.vmem %s1, 544
  %89 = vst [vmem:[%s88] sm:$0xff] %v71
  %s90 = scalar_lea.vmem %s1, 608
  %91 = vst [vmem:[%s90] sm:$0xff] %v71
  %s92 = scalar_lea.vmem %s1, 672
  %93 = vst [vmem:[%s92] sm:$0xff] %v71
  %s94 = scalar_lea.vmem %s1, 736
  %95 = vst [vmem:[%s94] sm:$0xff] %v71
  %s96 = scalar_lea.vmem %s1, 800
  %97 = vst [vmem:[%s96] sm:$0xff] %v71
  %s98 = scalar_lea.vmem %s1, 864
  %99 = vst [vmem:[%s98] sm:$0xff] %v71
  %s100 = scalar_lea.vmem %s1, 928
  %101 = vst [vmem:[%s100] sm:$0xff] %v71
  %s102 = scalar_lea.vmem %s1, 992
  %103 = vst [vmem:[%s102] sm:$0xff] %v71
  %s104 = scalar_lea.vmem %s0, 3
  %v105 = vld [vmem:[%s104] ss:$0 sm:$0xff]
  %s106 = scalar_lea.vmem %s1, 48
  %107 = vst [vmem:[%s106] sm:$0xff] %v105
  %s108 = scalar_lea.vmem %s1, 112
  %109 = vst [vmem:[%s108] sm:$0xff] %v105
  %s110 = scalar_lea.vmem %s1, 176
  %111 = vst [vmem:[%s110] sm:$0xff] %v105
  %s112 = scalar_lea.vmem %s1, 240
  %113 = vst [vmem:[%s112] sm:$0xff] %v105
  %s114 = scalar_lea.vmem %s1, 304
  %115 = vst [vmem:[%s114] sm:$0xff] %v105
  %s116 = scalar_lea.vmem %s1, 368
  %117 = vst [vmem:[%s116] sm:$0xff] %v105
  %s118 = scalar_lea.vmem %s1, 432
  %119 = vst [vmem:[%s118] sm:$0xff] %v105
  %s120 = scalar_lea.vmem %s1, 496
  %121 = vst [vmem:[%s120] sm:$0xff] %v105
  %s122 = scalar_lea.vmem %s1, 560
  %123 = vst [vmem:[%s122] sm:$0xff] %v105
  %s124 = scalar_lea.vmem %s1, 624
  %125 = vst [vmem:[%s124] sm:$0xff] %v105
  %s126 = scalar_lea.vmem %s1, 688
  %127 = vst [vmem:[%s126] sm:$0xff] %v105
  %s128 = scalar_lea.vmem %s1, 752
  %129 = vst [vmem:[%s128] sm:$0xff] %v105
  %s130 = scalar_lea.vmem %s1, 816
  %131 = vst [vmem:[%s130] sm:$0xff] %v105
  %s132 = scalar_lea.vmem %s1, 880
  %133 = vst [vmem:[%s132] sm:$0xff] %v105
  %s134 = scalar_lea.vmem %s1, 944
  %135 = vst [vmem:[%s134] sm:$0xff] %v105
  %s136 = scalar_lea.vmem %s1, 1008
  %137 = vst [vmem:[%s136] sm:$0xff] %v105
  %s138 = scalar_lea.vmem %s1, 8
  %139 = vst [vmem:[%s138] sm:$0xff] %v4
  %s140 = scalar_lea.vmem %s1, 72
  %141 = vst [vmem:[%s140] sm:$0xff] %v4
  %s142 = scalar_lea.vmem %s1, 136
  %143 = vst [vmem:[%s142] sm:$0xff] %v4
  %s144 = scalar_lea.vmem %s1, 200
  %145 = vst [vmem:[%s144] sm:$0xff] %v4
  %s146 = scalar_lea.vmem %s1, 264
  %147 = vst [vmem:[%s146] sm:$0xff] %v4
  %s148 = scalar_lea.vmem %s1, 328
  %149 = vst [vmem:[%s148] sm:$0xff] %v4
  %s150 = scalar_lea.vmem %s1, 392
  %151 = vst [vmem:[%s150] sm:$0xff] %v4
  %s152 = scalar_lea.vmem %s1, 456
  %153 = vst [vmem:[%s152] sm:$0xff] %v4
  %s154 = scalar_lea.vmem %s1, 520
  %155 = vst [vmem:[%s154] sm:$0xff] %v4
  %s156 = scalar_lea.vmem %s1, 584
  %157 = vst [vmem:[%s156] sm:$0xff] %v4
  %s158 = scalar_lea.vmem %s1, 648
  %159 = vst [vmem:[%s158] sm:$0xff] %v4
  %s160 = scalar_lea.vmem %s1, 712
  %161 = vst [vmem:[%s160] sm:$0xff] %v4
  %s162 = scalar_lea.vmem %s1, 776
  %163 = vst [vmem:[%s162] sm:$0xff] %v4
  %s164 = scalar_lea.vmem %s1, 840
  %165 = vst [vmem:[%s164] sm:$0xff] %v4
  %s166 = scalar_lea.vmem %s1, 904
  %167 = vst [vmem:[%s166] sm:$0xff] %v4
  %s168 = scalar_lea.vmem %s1, 968
  %169 = vst [vmem:[%s168] sm:$0xff] %v4
  %s170 = scalar_lea.vmem %s1, 24
  %171 = vst [vmem:[%s170] sm:$0xff] %v37
  %s172 = scalar_lea.vmem %s1, 88
  %173 = vst [vmem:[%s172] sm:$0xff] %v37
  %s174 = scalar_lea.vmem %s1, 152
  %175 = vst [vmem:[%s174] sm:$0xff] %v37
  %s176 = scalar_lea.vmem %s1, 216
  %177 = vst [vmem:[%s176] sm:$0xff] %v37
  %s178 = scalar_lea.vmem %s1, 280
  %179 = vst [vmem:[%s178] sm:$0xff] %v37
  %s180 = scalar_lea.vmem %s1, 344
  %181 = vst [vmem:[%s180] sm:$0xff] %v37
  %s182 = scalar_lea.vmem %s1, 408
  %183 = vst [vmem:[%s182] sm:$0xff] %v37
  %s184 = scalar_lea.vmem %s1, 472
  %185 = vst [vmem:[%s184] sm:$0xff] %v37
  %s186 = scalar_lea.vmem %s1, 536
  %187 = vst [vmem:[%s186] sm:$0xff] %v37
  %s188 = scalar_lea.vmem %s1, 600
  %189 = vst [vmem:[%s188] sm:$0xff] %v37
  %s190 = scalar_lea.vmem %s1, 664
  %191 = vst [vmem:[%s190] sm:$0xff] %v37
  %s192 = scalar_lea.vmem %s1, 728
  %193 = vst [vmem:[%s192] sm:$0xff] %v37
  %s194 = scalar_lea.vmem %s1, 792
  %195 = vst [vmem:[%s194] sm:$0xff] %v37
  %s196 = scalar_lea.vmem %s1, 856
  %197 = vst [vmem:[%s196] sm:$0xff] %v37
  %s198 = scalar_lea.vmem %s1, 920
  %199 = vst [vmem:[%s198] sm:$0xff] %v37
  %s200 = scalar_lea.vmem %s1, 984
  %201 = vst [vmem:[%s200] sm:$0xff] %v37
  %s202 = scalar_lea.vmem %s1, 40
  %203 = vst [vmem:[%s202] sm:$0xff] %v71
  %s204 = scalar_lea.vmem %s1, 104
  %205 = vst [vmem:[%s204] sm:$0xff] %v71
  %s206 = scalar_lea.vmem %s1, 168
  %207 = vst [vmem:[%s206] sm:$0xff] %v71
  %s208 = scalar_lea.vmem %s1, 232
  %209 = vst [vmem:[%s208] sm:$0xff] %v71
  %s210 = scalar_lea.vmem %s1, 296
  %211 = vst [vmem:[%s210] sm:$0xff] %v71
  %s212 = scalar_lea.vmem %s1, 360
  %213 = vst [vmem:[%s212] sm:$0xff] %v71
  %s214 = scalar_lea.vmem %s1, 424
  %215 = vst [vmem:[%s214] sm:$0xff] %v71
  %s216 = scalar_lea.vmem %s1, 488
  %217 = vst [vmem:[%s216] sm:$0xff] %v71
  %s218 = scalar_lea.vmem %s1, 552
  %219 = vst [vmem:[%s218] sm:$0xff] %v71
  %s220 = scalar_lea.vmem %s1, 616
  %221 = vst [vmem:[%s220] sm:$0xff] %v71
  %s222 = scalar_lea.vmem %s1, 680
  %223 = vst [vmem:[%s222] sm:$0xff] %v71
  %s224 = scalar_lea.vmem %s1, 744
  %225 = vst [vmem:[%s224] sm:$0xff] %v71
  %s226 = scalar_lea.vmem %s1, 808
  %227 = vst [vmem:[%s226] sm:$0xff] %v71
  %s228 = scalar_lea.vmem %s1, 872
  %229 = vst [vmem:[%s228] sm:$0xff] %v71
  %s230 = scalar_lea.vmem %s1, 936
  %231 = vst [vmem:[%s230] sm:$0xff] %v71
  %s232 = scalar_lea.vmem %s1, 1000
  %233 = vst [vmem:[%s232] sm:$0xff] %v71
  %s234 = scalar_lea.vmem %s1, 56
  %235 = vst [vmem:[%s234] sm:$0xff] %v105
  %s236 = scalar_lea.vmem %s1, 120
  %237 = vst [vmem:[%s236] sm:$0xff] %v105
  %s238 = scalar_lea.vmem %s1, 184
  %239 = vst [vmem:[%s238] sm:$0xff] %v105
  %s240 = scalar_lea.vmem %s1, 248
  %241 = vst [vmem:[%s240] sm:$0xff] %v105
  %s242 = scalar_lea.vmem %s1, 312
  %243 = vst [vmem:[%s242] sm:$0xff] %v105
  %s244 = scalar_lea.vmem %s1, 376
  %245 = vst [vmem:[%s244] sm:$0xff] %v105
  %s246 = scalar_lea.vmem %s1, 440
  %247 = vst [vmem:[%s246] sm:$0xff] %v105
  %s248 = scalar_lea.vmem %s1, 504
  %249 = vst [vmem:[%s248] sm:$0xff] %v105
  %s250 = scalar_lea.vmem %s1, 568
  %251 = vst [vmem:[%s250] sm:$0xff] %v105
  %s252 = scalar_lea.vmem %s1, 632
  %253 = vst [vmem:[%s252] sm:$0xff] %v105
  %s254 = scalar_lea.vmem %s1, 696
  %255 = vst [vmem:[%s254] sm:$0xff] %v105
  %s256 = scalar_lea.vmem %s1, 760
  %257 = vst [vmem:[%s256] sm:$0xff] %v105
  %s258 = scalar_lea.vmem %s1, 824
  %259 = vst [vmem:[%s258] sm:$0xff] %v105
  %s260 = scalar_lea.vmem %s1, 888
  %261 = vst [vmem:[%s260] sm:$0xff] %v105
  %s262 = scalar_lea.vmem %s1, 952
  %263 = vst [vmem:[%s262] sm:$0xff] %v105
  %s264 = scalar_lea.vmem %s1, 1016
  %265 = vst [vmem:[%s264] sm:$0xff] %v105

// kernel: tile.34
$region0: #{tile.34}
  %s0 = inlined_call_operand.vmem [shape: f32[16,4,16,4], index: 0, kind: input, shape index: {}]
  %s1 = inlined_call_operand.vmem [shape: f32[64,64], index: 1, kind: output, shape index: {}]
  %s2 = smov 3
  %v3 = vld [vmem:[%s0] ss:$16 sm:%s2]
  %s4 = smov 12
  %v5 = vld [vmem:[%s0] ss:$16 sm:%s4]
  %vm6 = vcmask 1043458
  %v7 = vsel %vm6, %v5, %v3
  %s8 = smov 48
  %v9 = vld [vmem:[%s0] ss:$16 sm:%s8]
  %vm10 = vcmask 1045508
  %v11 = vsel %vm10, %v9, %v7
  %s12 = smov 192
  %v13 = vld [vmem:[%s0] ss:$16 sm:%s12]
  %vm14 = vcmask 1047558
  %v15 = vsel %vm14, %v13, %v11
  %vm16 = vcmask 31744
  %17 = vst.msk [vmem:[%s1] sm:$0xff] %vm16, %v15
  %s18 = scalar_lea.vmem %s0, 128
  %s19 = smov 3
  %v20 = vld [vmem:[%s18] ss:$16 sm:%s19]
  %s21 = scalar_lea.vmem %s0, 128
  %s22 = smov 12
  %v23 = vld [vmem:[%s21] ss:$16 sm:%s22]
  %vm24 = vcmask 1043458
  %v25 = vsel %vm24, %v23, %v20
  %s26 = scalar_lea.vmem %s0, 128
  %s27 = smov 48
  %v28 = vld [vmem:[%s26] ss:$16 sm:%s27]
  %vm29 = vcmask 1045508
  %v30 = vsel %vm29, %v28, %v25
  %s31 = scalar_lea.vmem %s0, 128
  %s32 = smov 192
  %v33 = vld [vmem:[%s31] ss:$16 sm:%s32]
  %vm34 = vcmask 1047558
  %v35 = vsel %vm34, %v33, %v30
  %vm36 = vcmask 31744
  %s37 = scalar_lea.vmem %s1, 8
  %38 = vst.msk [vmem:[%s37] sm:$0xff] %vm36, %v35
  %s39 = scalar_lea.vmem %s0, 256
  %s40 = smov 3
  %v41 = vld [vmem:[%s39] ss:$16 sm:%s40]
  %s42 = scalar_lea.vmem %s0, 256
  %s43 = smov 12
  %v44 = vld [vmem:[%s42] ss:$16 sm:%s43]
  %vm45 = vcmask 1043458
  %v46 = vsel %vm45, %v44, %v41
  %s47 = scalar_lea.vmem %s0, 256
  %s48 = smov 48
  %v49 = vld [vmem:[%s47] ss:$16 sm:%s48]
  %vm50 = vcmask 1045508
  %v51 = vsel %vm50, %v49, %v46
  %s52 = scalar_lea.vmem %s0, 256
  %s53 = smov 192
  %v54 = vld [vmem:[%s52] ss:$16 sm:%s53]
  %vm55 = vcmask 1047558
  %v56 = vsel %vm55, %v54, %v51
  %vm57 = vcmask 31744
  %s58 = scalar_lea.vmem %s1, 16
  %59 = vst.msk [vmem:[%s58] sm:$0xff] %vm57, %v56
  %s60 = scalar_lea.vmem %s0, 384
  %s61 = smov 3
  %v62 = vld [vmem:[%s60] ss:$16 sm:%s61]
  %s63 = scalar_lea.vmem %s0, 384
  %s64 = smov 12
  %v65 = vld [vmem:[%s63] ss:$16 sm:%s64]
  %vm66 = vcmask 1043458
  %v67 = vsel %vm66, %v65, %v62
  %s68 = scalar_lea.vmem %s0, 384
  %s69 = smov 48
  %v70 = vld [vmem:[%s68] ss:$16 sm:%s69]
  %vm71 = vcmask 1045508
  %v72 = vsel %vm71, %v70, %v67
  %s73 = scalar_lea.vmem %s0, 384
  %s74 = smov 192
  %v75 = vld [vmem:[%s73] ss:$16 sm:%s74]
  %vm76 = vcmask 1047558
  %v77 = vsel %vm76, %v75, %v72
  %vm78 = vcmask 31744
  %s79 = scalar_lea.vmem %s1, 24
  %80 = vst.msk [vmem:[%s79] sm:$0xff] %vm78, %v77
  %s81 = scalar_lea.vmem %s0, 512
  %s82 = smov 3
  %v83 = vld [vmem:[%s81] ss:$16 sm:%s82]
  %s84 = scalar_lea.vmem %s0, 512
  %s85 = smov 12
  %v86 = vld [vmem:[%s84] ss:$16 sm:%s85]
  %vm87 = vcmask 1043458
  %v88 = vsel %vm87, %v86, %v83
  %s89 = scalar_lea.vmem %s0, 512
  %s90 = smov 48
  %v91 = vld [vmem:[%s89] ss:$16 sm:%s90]
  %vm92 = vcmask 1045508
  %v93 = vsel %vm92, %v91, %v88
  %s94 = scalar_lea.vmem %s0, 512
  %s95 = smov 192
  %v96 = vld [vmem:[%s94] ss:$16 sm:%s95]
  %vm97 = vcmask 1047558
  %v98 = vsel %vm97, %v96, %v93
  %vm99 = vcmask 31744
  %s100 = scalar_lea.vmem %s1, 32
  %101 = vst.msk [vmem:[%s100] sm:$0xff] %vm99, %v98
  %s102 = scalar_lea.vmem %s0, 640
  %s103 = smov 3
  %v104 = vld [vmem:[%s102] ss:$16 sm:%s103]
  %s105 = scalar_lea.vmem %s0, 640
  %s106 = smov 12
  %v107 = vld [vmem:[%s105] ss:$16 sm:%s106]
  %vm108 = vcmask 1043458
  %v109 = vsel %vm108, %v107, %v104
  %s110 = scalar_lea.vmem %s0, 640
  %s111 = smov 48
  %v112 = vld [vmem:[%s110] ss:$16 sm:%s111]
  %vm113 = vcmask 1045508
  %v114 = vsel %vm113, %v112, %v109
  %s115 = scalar_lea.vmem %s0, 640
  %s116 = smov 192
  %v117 = vld [vmem:[%s115] ss:$16 sm:%s116]
  %vm118 = vcmask 1047558
  %v119 = vsel %vm118, %v117, %v114
  %vm120 = vcmask 31744
  %s121 = scalar_lea.vmem %s1, 40
  %122 = vst.msk [vmem:[%s121] sm:$0xff] %vm120, %v119
  %s123 = scalar_lea.vmem %s0, 768
  %s124 = smov 3
  %v125 = vld [vmem:[%s123] ss:$16 sm:%s124]
  %s126 = scalar_lea.vmem %s0, 768
  %s127 = smov 12
  %v128 = vld [vmem:[%s126] ss:$16 sm:%s127]
  %vm129 = vcmask 1043458
  %v130 = vsel %vm129, %v128, %v125
  %s131 = scalar_lea.vmem %s0, 768
  %s132 = smov 48
  %v133 = vld [vmem:[%s131] ss:$16 sm:%s132]
  %vm134 = vcmask 1045508
  %v135 = vsel %vm134, %v133, %v130
  %s136 = scalar_lea.vmem %s0, 768
  %s137 = smov 192
  %v138 = vld [vmem:[%s136] ss:$16 sm:%s137]
  %vm139 = vcmask 1047558
  %v140 = vsel %vm139, %v138, %v135
  %vm141 = vcmask 31744
  %s142 = scalar_lea.vmem %s1, 48
  %143 = vst.msk [vmem:[%s142] sm:$0xff] %vm141, %v140
  %s144 = scalar_lea.vmem %s0, 896
  %s145 = smov 3
  %v146 = vld [vmem:[%s144] ss:$16 sm:%s145]
  %s147 = scalar_lea.vmem %s0, 896
  %s148 = smov 12
  %v149 = vld [vmem:[%s147] ss:$16 sm:%s148]
  %vm150 = vcmask 1043458
  %v151 = vsel %vm150, %v149, %v146
  %s152 = scalar_lea.vmem %s0, 896
  %s153 = smov 48
  %v154 = vld [vmem:[%s152] ss:$16 sm:%s153]
  %vm155 = vcmask 1045508
  %v156 = vsel %vm155, %v154, %v151
  %s157 = scalar_lea.vmem %s0, 896
  %s158 = smov 192
  %v159 = vld [vmem:[%s157] ss:$16 sm:%s158]
  %vm160 = vcmask 1047558
  %v161 = vsel %vm160, %v159, %v156
  %vm162 = vcmask 31744
  %s163 = scalar_lea.vmem %s1, 56
  %164 = vst.msk [vmem:[%s163] sm:$0xff] %vm162, %v161
  %s165 = scalar_lea.vmem %s0, 15
  %s166 = smov 3
  %v167 = vld [vmem:[%s165] ss:$16 sm:%s166]
  %s168 = scalar_lea.vmem %s0, 15
  %s169 = smov 12
  %v170 = vld [vmem:[%s168] ss:$16 sm:%s169]
  %vm171 = vcmask 1043458
  %v172 = vsel %vm171, %v170, %v167
  %s173 = scalar_lea.vmem %s0, 15
  %s174 = smov 48
  %v175 = vld [vmem:[%s173] ss:$16 sm:%s174]
  %vm176 = vcmask 1045508
  %v177 = vsel %vm176, %v175, %v172
  %s178 = scalar_lea.vmem %s0, 15
  %s179 = smov 192
  %v180 = vld [vmem:[%s178] ss:$16 sm:%s179]
  %vm181 = vcmask 1047558
  %v182 = vsel %vm181, %v180, %v177
  %183 = vrot.lane.b32.xlu0 %v182, 60
  %v184 = vpop.permute.xlu0 %183
  %vm185 = vcmask 523744
  %186 = vst.msk [vmem:[%s1] sm:$0xff] %vm185, %v184
  %s187 = scalar_lea.vmem %s0, 527
  %s188 = smov 3
  %v189 = vld [vmem:[%s187] ss:$16 sm:%s188]
  %s190 = scalar_lea.vmem %s0, 527
  %s191 = smov 12
  %v192 = vld [vmem:[%s190] ss:$16 sm:%s191]
  %vm193 = vcmask 1043458
  %v194 = vsel %vm193, %v192, %v189
  %s195 = scalar_lea.vmem %s0, 527
  %s196 = smov 48
  %v197 = vld [vmem:[%s195] ss:$16 sm:%s196]
  %vm198 = vcmask 1045508
  %v199 = vsel %vm198, %v197, %v194
  %s200 = scalar_lea.vmem %s0, 527
  %s201 = smov 192
  %v202 = vld [vmem:[%s200] ss:$16 sm:%s201]
  %vm203 = vcmask 1047558
  %v204 = vsel %vm203, %v202, %v199
  %205 = vrot.lane.b32.xlu0 %v204, 60
  %v206 = vpop.permute.xlu0 %205
  %vm207 = vcmask 523744
  %s208 = scalar_lea.vmem %s1, 32
  %209 = vst.msk [vmem:[%s208] sm:$0xff] %vm207, %v206
  %s210 = scalar_lea.vmem %s0, 143
  %s211 = smov 3
  %v212 = vld [vmem:[%s210] ss:$16 sm:%s211]
  %s213 = scalar_lea.vmem %s0, 143
  %s214 = smov 12
  %v215 = vld [vmem:[%s213] ss:$16 sm:%s214]
  %vm216 = vcmask 1043458
  %v217 = vsel %vm216, %v215, %v212
  %s218 = scalar_lea.vmem %s0, 143
  %s219 = smov 48
  %v220 = vld [vmem:[%s218] ss:$16 sm:%s219]
  %vm221 = vcmask 1045508
  %v222 = vsel %vm221, %v220, %v217
  %s223 = scalar_lea.vmem %s0, 143
  %s224 = smov 192
  %v225 = vld [vmem:[%s223] ss:$16 sm:%s224]
  %vm226 = vcmask 1047558
  %v227 = vsel %vm226, %v225, %v222
  %228 = vrot.lane.b32.xlu0 %v227, 60
  %v229 = vpop.permute.xlu0 %228
  %vm230 = vcmask 523744
  %s231 = scalar_lea.vmem %s1, 8
  %232 = vst.msk [vmem:[%s231] sm:$0xff] %vm230, %v229
  %s233 = scalar_lea.vmem %s0, 655
  %s234 = smov 3
  %v235 = vld [vmem:[%s233] ss:$16 sm:%s234]
  %s236 = scalar_lea.vmem %s0, 655
  %s237 = smov 12
  %v238 = vld [vmem:[%s236] ss:$16 sm:%s237]
  %vm239 = vcmask 1043458
  %v240 = vsel %vm239, %v238, %v235
  %s241 = scalar_lea.vmem %s0, 655
  %s242 = smov 48
  %v243 = vld [vmem:[%s241] ss:$16 sm:%s242]
  %vm244 = vcmask 1045508
  %v245 = vsel %vm244, %v243, %v240
  %s246 = scalar_lea.vmem %s0, 655
  %s247 = smov 192
  %v248 = vld [vmem:[%s246] ss:$16 sm:%s247]
  %vm249 = vcmask 1047558
  %v250 = vsel %vm249, %v248, %v245
  %251 = vrot.lane.b32.xlu0 %v250, 60
  %v252 = vpop.permute.xlu0 %251
  %vm253 = vcmask 523744
  %s254 = scalar_lea.vmem %s1, 40
  %255 = vst.msk [vmem:[%s254] sm:$0xff] %vm253, %v252
  %s256 = scalar_lea.vmem %s0, 271
  %s257 = smov 3
  %v258 = vld [vmem:[%s256] ss:$16 sm:%s257]
  %s259 = scalar_lea.vmem %s0, 271
  %s260 = smov 12
  %v261 = vld [vmem:[%s259] ss:$16 sm:%s260]
  %vm262 = vcmask 1043458
  %v263 = vsel %vm262, %v261, %v258
  %s264 = scalar_lea.vmem %s0, 271
  %s265 = smov 48
  %v266 = vld [vmem:[%s264] ss:$16 sm:%s265]
  %vm267 = vcmask 1045508
  %v268 = vsel %vm267, %v266, %v263
  %s269 = scalar_lea.vmem %s0, 271
  %s270 = smov 192
  %v271 = vld [vmem:[%s269] ss:$16 sm:%s270]
  %vm272 = vcmask 1047558
  %v273 = vsel %vm272, %v271, %v268
  %274 = vrot.lane.b32.xlu0 %v273, 60
  %v275 = vpop.permute.xlu0 %274
  %vm276 = vcmask 523744
  %s277 = scalar_lea.vmem %s1, 16
  %278 = vst.msk [vmem:[%s277] sm:$0xff] %vm276, %v275
  %s279 = scalar_lea.vmem %s0, 783
  %s280 = smov 3
  %v281 = vld [vmem:[%s279] ss:$16 sm:%s280]
  %s282 = scalar_lea.vmem %s0, 783
  %s283 = smov 12
  %v284 = vld [vmem:[%s282] ss:$16 sm:%s283]
  %vm285 = vcmask 1043458
  %v286 = vsel %vm285, %v284, %v281
  %s287 = scalar_lea.vmem %s0, 783
  %s288 = smov 48
  %v289 = vld [vmem:[%s287] ss:$16 sm:%s288]
  %vm290 = vcmask 1045508
  %v291 = vsel %vm290, %v289, %v286
  %s292 = scalar_lea.vmem %s0, 783
  %s293 = smov 192
  %v294 = vld [vmem:[%s292] ss:$16 sm:%s293]
  %vm295 = vcmask 1047558
  %v296 = vsel %vm295, %v294, %v291
  %297 = vrot.lane.b32.xlu0 %v296, 60
  %v298 = vpop.permute.xlu0 %297
  %vm299 = vcmask 523744
  %s300 = scalar_lea.vmem %s1, 48
  %301 = vst.msk [vmem:[%s300] sm:$0xff] %vm299, %v298
  %s302 = scalar_lea.vmem %s0, 399
  %s303 = smov 3
  %v304 = vld [vmem:[%s302] ss:$16 sm:%s303]
  %s305 = scalar_lea.vmem %s0, 399
  %s306 = smov 12
  %v307 = vld [vmem:[%s305] ss:$16 sm:%s306]
  %vm308 = vcmask 1043458
  %v309 = vsel %vm308, %v307, %v304
  %s310 = scalar_lea.vmem %s0, 399
  %s311 = smov 48
  %v312 = vld [vmem:[%s310] ss:$16 sm:%s311]
  %vm313 = vcmask 1045508
  %v314 = vsel %vm313, %v312, %v309
  %s315 = scalar_lea.vmem %s0, 399
  %s316 = smov 192
  %v317 = vld [vmem:[%s315] ss:$16 sm:%s316]
  %vm318 = vcmask 1047558
  %v319 = vsel %vm318, %v317, %v314
  %320 = vrot.lane.b32.xlu0 %v319, 60
  %v321 = vpop.permute.xlu0 %320
  %vm322 = vcmask 523744
  %s323 = scalar_lea.vmem %s1, 24
  %324 = vst.msk [vmem:[%s323] sm:$0xff] %vm322, %v321
  %s325 = scalar_lea.vmem %s0, 911
  %s326 = smov 3
  %v327 = vld [vmem:[%s325] ss:$16 sm:%s326]
  %s328 = scalar_lea.vmem %s0, 911
  %s329 = smov 12
  %v330 = vld [vmem:[%s328] ss:$16 sm:%s329]
  %vm331 = vcmask 1043458
  %v332 = vsel %vm331, %v330, %v327
  %s333 = scalar_lea.vmem %s0, 911
  %s334 = smov 48
  %v335 = vld [vmem:[%s333] ss:$16 sm:%s334]
  %vm336 = vcmask 1045508
  %v337 = vsel %vm336, %v335, %v332
  %s338 = scalar_lea.vmem %s0, 911
  %s339 = smov 192
  %v340 = vld [vmem:[%s338] ss:$16 sm:%s339]
  %vm341 = vcmask 1047558
  %v342 = vsel %vm341, %v340, %v337
  %343 = vrot.lane.b32.xlu0 %v342, 60
  %v344 = vpop.permute.xlu0 %343
  %vm345 = vcmask 523744
  %s346 = scalar_lea.vmem %s1, 56
  %347 = vst.msk [vmem:[%s346] sm:$0xff] %vm345, %v344
  %s348 = scalar_lea.vmem %s0, 14
  %s349 = smov 3
  %v350 = vld [vmem:[%s348] ss:$16 sm:%s349]
  %s351 = scalar_lea.vmem %s0, 14
  %s352 = smov 12
  %v353 = vld [vmem:[%s351] ss:$16 sm:%s352]
  %vm354 = vcmask 1043458
  %v355 = vsel %vm354, %v353, %v350
  %s356 = scalar_lea.vmem %s0, 14
  %s357 = smov 48
  %v358 = vld [vmem:[%s356] ss:$16 sm:%s357]
  %vm359 = vcmask 1045508
  %v360 = vsel %vm359, %v358, %v355
  %s361 = scalar_lea.vmem %s0, 14
  %s362 = smov 192
  %v363 = vld [vmem:[%s361] ss:$16 sm:%s362]
  %vm364 = vcmask 1047558
  %v365 = vsel %vm364, %v363, %v360
  %366 = vrot.lane.b32.xlu0 %v365, 56
  %v367 = vpop.permute.xlu0 %366
  %vm368 = vcmask 490944
  %369 = vst.msk [vmem:[%s1] sm:$0xff] %vm368, %v367
  %s370 = scalar_lea.vmem %s0, 526
  %s371 = smov 3
  %v372 = vld [vmem:[%s370] ss:$16 sm:%s371]
  %s373 = scalar_lea.vmem %s0, 526
  %s374 = smov 12
  %v375 = vld [vmem:[%s373] ss:$16 sm:%s374]
  %vm376 = vcmask 1043458
  %v377 = vsel %vm376, %v375, %v372
  %s378 = scalar_lea.vmem %s0, 526
  %s379 = smov 48
  %v380 = vld [vmem:[%s378] ss:$16 sm:%s379]
  %vm381 = vcmask 1045508
  %v382 = vsel %vm381, %v380, %v377
  %s383 = scalar_lea.vmem %s0, 526
  %s384 = smov 192
  %v385 = vld [vmem:[%s383] ss:$16 sm:%s384]
  %vm386 = vcmask 1047558
  %v387 = vsel %vm386, %v385, %v382
  %388 = vrot.lane.b32.xlu0 %v387, 56
  %v389 = vpop.permute.xlu0 %388
  %vm390 = vcmask 490944
  %s391 = scalar_lea.vmem %s1, 32
  %392 = vst.msk [vmem:[%s391] sm:$0xff] %vm390, %v389
  %s393 = scalar_lea.vmem %s0, 142
  %s394 = smov 3
  %v395 = vld [vmem:[%s393] ss:$16 sm:%s394]
  %s396 = scalar_lea.vmem %s0, 142
  %s397 = smov 12
  %v398 = vld [vmem:[%s396] ss:$16 sm:%s397]
  %vm399 = vcmask 1043458
  %v400 = vsel %vm399, %v398, %v395
  %s401 = scalar_lea.vmem %s0, 142
  %s402 = smov 48
  %v403 = vld [vmem:[%s401] ss:$16 sm:%s402]
  %vm404 = vcmask 1045508
  %v405 = vsel %vm404, %v403, %v400
  %s406 = scalar_lea.vmem %s0, 142
  %s407 = smov 192
  %v408 = vld [vmem:[%s406] ss:$16 sm:%s407]
  %vm409 = vcmask 1047558
  %v410 = vsel %vm409, %v408, %v405
  %411 = vrot.lane.b32.xlu0 %v410, 56
  %v412 = vpop.permute.xlu0 %411
  %vm413 = vcmask 490944
  %s414 = scalar_lea.vmem %s1, 8
  %415 = vst.msk [vmem:[%s414] sm:$0xff] %vm413, %v412
  %s416 = scalar_lea.vmem %s0, 654
  %s417 = smov 3
  %v418 = vld [vmem:[%s416] ss:$16 sm:%s417]
  %s419 = scalar_lea.vmem %s0, 654
  %s420 = smov 12
  %v421 = vld [vmem:[%s419] ss:$16 sm:%s420]
  %vm422 = vcmask 1043458
  %v423 = vsel %vm422, %v421, %v418
  %s424 = scalar_lea.vmem %s0, 654
  %s425 = smov 48
  %v426 = vld [vmem:[%s424] ss:$16 sm:%s425]
  %vm427 = vcmask 1045508
  %v428 = vsel %vm427, %v426, %v423
  %s429 = scalar_lea.vmem %s0, 654
  %s430 = smov 192
  %v431 = vld [vmem:[%s429] ss:$16 sm:%s430]
  %vm432 = vcmask 1047558
  %v433 = vsel %vm432, %v431, %v428
  %434 = vrot.lane.b32.xlu0 %v433, 56
  %v435 = vpop.permute.xlu0 %434
  %vm436 = vcmask 490944
  %s437 = scalar_lea.vmem %s1, 40
  %438 = vst.msk [vmem:[%s437] sm:$0xff] %vm436, %v435
  %s439 = scalar_lea.vmem %s0, 270
  %s440 = smov 3
  %v441 = vld [vmem:[%s439] ss:$16 sm:%s440]
  %s442 = scalar_lea.vmem %s0, 270
  %s443 = smov 12
  %v444 = vld [vmem:[%s442] ss:$16 sm:%s443]
  %vm445 = vcmask 1043458
  %v446 = vsel %vm445, %v444, %v441
  %s447 = scalar_lea.vmem %s0, 270
  %s448 = smov 48
  %v449 = vld [vmem:[%s447] ss:$16 sm:%s448]
  %vm450 = vcmask 1045508
  %v451 = vsel %vm450, %v449, %v446
  %s452 = scalar_lea.vmem %s0, 270
  %s453 = smov 192
  %v454 = vld [vmem:[%s452] ss:$16 sm:%s453]
  %vm455 = vcmask 1047558
  %v456 = vsel %vm455, %v454, %v451
  %457 = vrot.lane.b32.xlu0 %v456, 56
  %v458 = vpop.permute.xlu0 %457
  %vm459 = vcmask 490944
  %s460 = scalar_lea.vmem %s1, 16
  %461 = vst.msk [vmem:[%s460] sm:$0xff] %vm459, %v458
  %s462 = scalar_lea.vmem %s0, 782
  %s463 = smov 3
  %v464 = vld [vmem:[%s462] ss:$16 sm:%s463]
  %s465 = scalar_lea.vmem %s0, 782
  %s466 = smov 12
  %v467 = vld [vmem:[%s465] ss:$16 sm:%s466]
  %vm468 = vcmask 1043458
  %v469 = vsel %vm468, %v467, %v464
  %s470 = scalar_lea.vmem %s0, 782
  %s471 = smov 48
  %v472 = vld [vmem:[%s470] ss:$16 sm:%s471]
  %vm473 = vcmask 1045508
  %v474 = vsel %vm473, %v472, %v469
  %s475 = scalar_lea.vmem %s0, 782
  %s476 = smov 192
  %v477 = vld [vmem:[%s475] ss:$16 sm:%s476]
  %vm478 = vcmask 1047558
  %v479 = vsel %vm478, %v477, %v474
  %480 = vrot.lane.b32.xlu0 %v479, 56
  %v481 = vpop.permute.xlu0 %480
  %vm482 = vcmask 490944
  %s483 = scalar_lea.vmem %s1, 48
  %484 = vst.msk [vmem:[%s483] sm:$0xff] %vm482, %v481
  %s485 = scalar_lea.vmem %s0, 398
  %s486 = smov 3
  %v487 = vld [vmem:[%s485] ss:$16 sm:%s486]
  %s488 = scalar_lea.vmem %s0, 398
  %s489 = smov 12
  %v490 = vld [vmem:[%s488] ss:$16 sm:%s489]
  %vm491 = vcmask 1043458
  %v492 = vsel %vm491, %v490, %v487
  %s493 = scalar_lea.vmem %s0, 398
  %s494 = smov 48
  %v495 = vld [vmem:[%s493] ss:$16 sm:%s494]
  %vm496 = vcmask 1045508
  %v497 = vsel %vm496, %v495, %v492
  %s498 = scalar_lea.vmem %s0, 398
  %s499 = smov 192
  %v500 = vld [vmem:[%s498] ss:$16 sm:%s499]
  %vm501 = vcmask 1047558
  %v502 = vsel %vm501, %v500, %v497
  %503 = vrot.lane.b32.xlu0 %v502, 56
  %v504 = vpop.permute.xlu0 %503
  %vm505 = vcmask 490944
  %s506 = scalar_lea.vmem %s1, 24
  %507 = vst.msk [vmem:[%s506] sm:$0xff] %vm505, %v504
  %s508 = scalar_lea.vmem %s0, 910
  %s509 = smov 3
  %v510 = vld [vmem:[%s508] ss:$16 sm:%s509]
  %s511 = scalar_lea.vmem %s0, 910
  %s512 = smov 12
  %v513 = vld [vmem:[%s511] ss:$16 sm:%s512]
  %vm514 = vcmask 1043458
  %v515 = vsel %vm514, %v513, %v510
  %s516 = scalar_lea.vmem %s0, 910
  %s517 = smov 48
  %v518 = vld [vmem:[%s516] ss:$16 sm:%s517]
  %vm519 = vcmask 1045508
  %v520 = vsel %vm519, %v518, %v515
  %s521 = scalar_lea.vmem %s0, 910
  %s522 = smov 192
  %v523 = vld [vmem:[%s521] ss:$16 sm:%s522]
  %vm524 = vcmask 1047558
  %v525 = vsel %vm524, %v523, %v520
  %526 = vrot.lane.b32.xlu0 %v525, 56
  %v527 = vpop.permute.xlu0 %526
  %vm528 = vcmask 490944
  %s529 = scalar_lea.vmem %s1, 56
  %530 = vst.msk [vmem:[%s529] sm:$0xff] %vm528, %v527
  %s531 = scalar_lea.vmem %s0, 13
  %s532 = smov 3
  %v533 = vld [vmem:[%s531] ss:$16 sm:%s532]
  %s534 = scalar_lea.vmem %s0, 13
  %s535 = smov 12
  %v536 = vld [vmem:[%s534] ss:$16 sm:%s535]
  %vm537 = vcmask 1043458
  %v538 = vsel %vm537, %v536, %v533
  %s539 = scalar_lea.vmem %s0, 13
  %s540 = smov 48
  %v541 = vld [vmem:[%s539] ss:$16 sm:%s540]
  %vm542 = vcmask 1045508
  %v543 = vsel %vm542, %v541, %v538
  %s544 = scalar_lea.vmem %s0, 13
  %s545 = smov 192
  %v546 = vld [vmem:[%s544] ss:$16 sm:%s545]
  %vm547 = vcmask 1047558
  %v548 = vsel %vm547, %v546, %v543
  %549 = vrot.lane.b32.xlu0 %v548, 52
  %v550 = vpop.permute.xlu0 %549
  %vm551 = vcmask 458144
  %552 = vst.msk [vmem:[%s1] sm:$0xff] %vm551, %v550
  %s553 = scalar_lea.vmem %s0, 525
  %s554 = smov 3
  %v555 = vld [vmem:[%s553] ss:$16 sm:%s554]
  %s556 = scalar_lea.vmem %s0, 525
  %s557 = smov 12
  %v558 = vld [vmem:[%s556] ss:$16 sm:%s557]
  %vm559 = vcmask 1043458
  %v560 = vsel %vm559, %v558, %v555
  %s561 = scalar_lea.vmem %s0, 525
  %s562 = smov 48
  %v563 = vld [vmem:[%s561] ss:$16 sm:%s562]
  %vm564 = vcmask 1045508
  %v565 = vsel %vm564, %v563, %v560
  %s566 = scalar_lea.vmem %s0, 525
  %s567 = smov 192
  %v568 = vld [vmem:[%s566] ss:$16 sm:%s567]
  %vm569 = vcmask 1047558
  %v570 = vsel %vm569, %v568, %v565
  %571 = vrot.lane.b32.xlu0 %v570, 52
  %v572 = vpop.permute.xlu0 %571
  %vm573 = vcmask 458144
  %s574 = scalar_lea.vmem %s1, 32
  %575 = vst.msk [vmem:[%s574] sm:$0xff] %vm573, %v572
  %s576 = scalar_lea.vmem %s0, 141
  %s577 = smov 3
  %v578 = vld [vmem:[%s576] ss:$16 sm:%s577]
  %s579 = scalar_lea.vmem %s0, 141
  %s580 = smov 12
  %v581 = vld [vmem:[%s579] ss:$16 sm:%s580]
  %vm582 = vcmask 1043458
  %v583 = vsel %vm582, %v581, %v578
  %s584 = scalar_lea.vmem %s0, 141
  %s585 = smov 48
  %v586 = vld [vmem:[%s584] ss:$16 sm:%s585]
  %vm587 = vcmask 1045508
  %v588 = vsel %vm587, %v586, %v583
  %s589 = scalar_lea.vmem %s0, 141
  %s590 = smov 192
  %v591 = vld [vmem:[%s589] ss:$16 sm:%s590]
  %vm592 = vcmask 1047558
  %v593 = vsel %vm592, %v591, %v588
  %594 = vrot.lane.b32.xlu0 %v593, 52
  %v595 = vpop.permute.xlu0 %594
  %vm596 = vcmask 458144
  %s597 = scalar_lea.vmem %s1, 8
  %598 = vst.msk [vmem:[%s597] sm:$0xff] %vm596, %v595
  %s599 = scalar_lea.vmem %s0, 653
  %s600 = smov 3
  %v601 = vld [vmem:[%s599] ss:$16 sm:%s600]
  %s602 = scalar_lea.vmem %s0, 653
  %s603 = smov 12
  %v604 = vld [vmem:[%s602] ss:$16 sm:%s603]
  %vm605 = vcmask 1043458
  %v606 = vsel %vm605, %v604, %v601
  %s607 = scalar_lea.vmem %s0, 653
  %s608 = smov 48
  %v609 = vld [vmem:[%s607] ss:$16 sm:%s608]
  %vm610 = vcmask 1045508
  %v611 = vsel %vm610, %v609, %v606
  %s612 = scalar_lea.vmem %s0, 653
  %s613 = smov 192
  %v614 = vld [vmem:[%s612] ss:$16 sm:%s613]
  %vm615 = vcmask 1047558
  %v616 = vsel %vm615, %v614, %v611
  %617 = vrot.lane.b32.xlu0 %v616, 52
  %v618 = vpop.permute.xlu0 %617
  %vm619 = vcmask 458144
  %s620 = scalar_lea.vmem %s1, 40
  %621 = vst.msk [vmem:[%s620] sm:$0xff] %vm619, %v618
  %s622 = scalar_lea.vmem %s0, 269
  %s623 = smov 3
  %v624 = vld [vmem:[%s622] ss:$16 sm:%s623]
  %s625 = scalar_lea.vmem %s0, 269
  %s626 = smov 12
  %v627 = vld [vmem:[%s625] ss:$16 sm:%s626]
  %vm628 = vcmask 1043458
  %v629 = vsel %vm628, %v627, %v624
  %s630 = scalar_lea.vmem %s0, 269
  %s631 = smov 48
  %v632 = vld [vmem:[%s630] ss:$16 sm:%s631]
  %vm633 = vcmask 1045508
  %v634 = vsel %vm633, %v632, %v629
  %s635 = scalar_lea.vmem %s0, 269
  %s636 = smov 192
  %v637 = vld [vmem:[%s635] ss:$16 sm:%s636]
  %vm638 = vcmask 1047558
  %v639 = vsel %vm638, %v637, %v634
  %640 = vrot.lane.b32.xlu0 %v639, 52
  %v641 = vpop.permute.xlu0 %640
  %vm642 = vcmask 458144
  %s643 = scalar_lea.vmem %s1, 16
  %644 = vst.msk [vmem:[%s643] sm:$0xff] %vm642, %v641
  %s645 = scalar_lea.vmem %s0, 781
  %s646 = smov 3
  %v647 = vld [vmem:[%s645] ss:$16 sm:%s646]
  %s648 = scalar_lea.vmem %s0, 781
  %s649 = smov 12
  %v650 = vld [vmem:[%s648] ss:$16 sm:%s649]
  %vm651 = vcmask 1043458
  %v652 = vsel %vm651, %v650, %v647
  %s653 = scalar_lea.vmem %s0, 781
  %s654 = smov 48
  %v655 = vld [vmem:[%s653] ss:$16 sm:%s654]
  %vm656 = vcmask 1045508
  %v657 = vsel %vm656, %v655, %v652
  %s658 = scalar_lea.vmem %s0, 781
  %s659 = smov 192
  %v660 = vld [vmem:[%s658] ss:$16 sm:%s659]
  %vm661 = vcmask 1047558
  %v662 = vsel %vm661, %v660, %v657
  %663 = vrot.lane.b32.xlu0 %v662, 52
  %v664 = vpop.permute.xlu0 %663
  %vm665 = vcmask 458144
  %s666 = scalar_lea.vmem %s1, 48
  %667 = vst.msk [vmem:[%s666] sm:$0xff] %vm665, %v664
  %s668 = scalar_lea.vmem %s0, 397
  %s669 = smov 3
  %v670 = vld [vmem:[%s668] ss:$16 sm:%s669]
  %s671 = scalar_lea.vmem %s0, 397
  %s672 = smov 12
  %v673 = vld [vmem:[%s671] ss:$16 sm:%s672]
  %vm674 = vcmask 1043458
  %v675 = vsel %vm674, %v673, %v670
  %s676 = scalar_lea.vmem %s0, 397
  %s677 = smov 48
  %v678 = vld [vmem:[%s676] ss:$16 sm:%s677]
  %vm679 = vcmask 1045508
  %v680 = vsel %vm679, %v678, %v675
  %s681 = scalar_lea.vmem %s0, 397
  %s682 = smov 192
  %v683 = vld [vmem:[%s681] ss:$16 sm:%s682]
  %vm684 = vcmask 1047558
  %v685 = vsel %vm684, %v683, %v680
  %686 = vrot.lane.b32.xlu0 %v685, 52
  %v687 = vpop.permute.xlu0 %686
  %vm688 = vcmask 458144
  %s689 = scalar_lea.vmem %s1, 24
  %690 = vst.msk [vmem:[%s689] sm:$0xff] %vm688, %v687
  %s691 = scalar_lea.vmem %s0, 909
  %s692 = smov 3
  %v693 = vld [vmem:[%s691] ss:$16 sm:%s692]
  %s694 = scalar_lea.vmem %s0, 909
  %s695 = smov 12
  %v696 = vld [vmem:[%s694] ss:$16 sm:%s695]
  %vm697 = vcmask 1043458
  %v698 = vsel %vm697, %v696, %v693
  %s699 = scalar_lea.vmem %s0, 909
  %s700 = smov 48
  %v701 = vld [vmem:[%s699] ss:$16 sm:%s700]
  %vm702 = vcmask 1045508
  %v703 = vsel %vm702, %v701, %v698
  %s704 = scalar_lea.vmem %s0, 909
  %s705 = smov 192
  %v706 = vld [vmem:[%s704] ss:$16 sm:%s705]
  %vm707 = vcmask 1047558
  %v708 = vsel %vm707, %v706, %v703
  %709 = vrot.lane.b32.xlu0 %v708, 52
  %v710 = vpop.permute.xlu0 %709
  %vm711 = vcmask 458144
  %s712 = scalar_lea.vmem %s1, 56
  %713 = vst.msk [vmem:[%s712] sm:$0xff] %vm711, %v710
  %s714 = scalar_lea.vmem %s0, 12
  %s715 = smov 3
  %v716 = vld [vmem:[%s714] ss:$16 sm:%s715]
  %s717 = scalar_lea.vmem %s0, 12
  %s718 = smov 12
  %v719 = vld [vmem:[%s717] ss:$16 sm:%s718]
  %vm720 = vcmask 1043458
  %v721 = vsel %vm720, %v719, %v716
  %s722 = scalar_lea.vmem %s0, 12
  %s723 = smov 48
  %v724 = vld [vmem:[%s722] ss:$16 sm:%s723]
  %vm725 = vcmask 1045508
  %v726 = vsel %vm725, %v724, %v721
  %s727 = scalar_lea.vmem %s0, 12
  %s728 = smov 192
  %v729 = vld [vmem:[%s727] ss:$16 sm:%s728]
  %vm730 = vcmask 1047558
  %v731 = vsel %vm730, %v729, %v726
  %732 = vrot.lane.b32.xlu0 %v731, 48
  %v733 = vpop.permute.xlu0 %732
  %vm734 = vcmask 425344
  %735 = vst.msk [vmem:[%s1] sm:$0xff] %vm734, %v733
  %s736 = scalar_lea.vmem %s0, 524
  %s737 = smov 3
  %v738 = vld [vmem:[%s736] ss:$16 sm:%s737]
  %s739 = scalar_lea.vmem %s0, 524
  %s740 = smov 12
  %v741 = vld [vmem:[%s739] ss:$16 sm:%s740]
  %vm742 = vcmask 1043458
  %v743 = vsel %vm742, %v741, %v738
  %s744 = scalar_lea.vmem %s0, 524
  %s745 = smov 48
  %v746 = vld [vmem:[%s744] ss:$16 sm:%s745]
  %vm747 = vcmask 1045508
  %v748 = vsel %vm747, %v746, %v743
  %s749 = scalar_lea.vmem %s0, 524
  %s750 = smov 192
  %v751 = vld [vmem:[%s749] ss:$16 sm:%s750]
  %vm752 = vcmask 1047558
  %v753 = vsel %vm752, %v751, %v748
  %754 = vrot.lane.b32.xlu0 %v753, 48
  %v755 = vpop.permute.xlu0 %754
  %vm756 = vcmask 425344
  %s757 = scalar_lea.vmem %s1, 32
  %758 = vst.msk [vmem:[%s757] sm:$0xff] %vm756, %v755
  %s759 = scalar_lea.vmem %s0, 140
  %s760 = smov 3
  %v761 = vld [vmem:[%s759] ss:$16 sm:%s760]
  %s762 = scalar_lea.vmem %s0, 140
  %s763 = smov 12
  %v764 = vld [vmem:[%s762] ss:$16 sm:%s763]
  %vm765 = vcmask 1043458
  %v766 = vsel %vm765, %v764, %v761
  %s767 = scalar_lea.vmem %s0, 140
  %s768 = smov 48
  %v769 = vld [vmem:[%s767] ss:$16 sm:%s768]
  %vm770 = vcmask 1045508
  %v771 = vsel %vm770, %v769, %v766
  %s772 = scalar_lea.vmem %s0, 140
  %s773 = smov 192
  %v774 = vld [vmem:[%s772] ss:$16 sm:%s773]
  %vm775 = vcmask 1047558
  %v776 = vsel %vm775, %v774, %v771
  %777 = vrot.lane.b32.xlu0 %v776, 48
  %v778 = vpop.permute.xlu0 %777
  %vm779 = vcmask 425344
  %s780 = scalar_lea.vmem %s1, 8
  %781 = vst.msk [vmem:[%s780] sm:$0xff] %vm779, %v778
  %s782 = scalar_lea.vmem %s0, 652
  %s783 = smov 3
  %v784 = vld [vmem:[%s782] ss:$16 sm:%s783]
  %s785 = scalar_lea.vmem %s0, 652
  %s786 = smov 12
  %v787 = vld [vmem:[%s785] ss:$16 sm:%s786]
  %vm788 = vcmask 1043458
  %v789 = vsel %vm788, %v787, %v784
  %s790 = scalar_lea.vmem %s0, 652
  %s791 = smov 48
  %v792 = vld [vmem:[%s790] ss:$16 sm:%s791]
  %vm793 = vcmask 1045508
  %v794 = vsel %vm793, %v792, %v789
  %s795 = scalar_lea.vmem %s0, 652
  %s796 = smov 192
  %v797 = vld [vmem:[%s795] ss:$16 sm:%s796]
  %vm798 = vcmask 1047558
  %v799 = vsel %vm798, %v797, %v794
  %800 = vrot.lane.b32.xlu0 %v799, 48
  %v801 = vpop.permute.xlu0 %800
  %vm802 = vcmask 425344
  %s803 = scalar_lea.vmem %s1, 40
  %804 = vst.msk [vmem:[%s803] sm:$0xff] %vm802, %v801
  %s805 = scalar_lea.vmem %s0, 268
  %s806 = smov 3
  %v807 = vld [vmem:[%s805] ss:$16 sm:%s806]
  %s808 = scalar_lea.vmem %s0, 268
  %s809 = smov 12
  %v810 = vld [vmem:[%s808] ss:$16 sm:%s809]
  %vm811 = vcmask 1043458
  %v812 = vsel %vm811, %v810, %v807
  %s813 = scalar_lea.vmem %s0, 268
  %s814 = smov 48
  %v815 = vld [vmem:[%s813] ss:$16 sm:%s814]
  %vm816 = vcmask 1045508
  %v817 = vsel %vm816, %v815, %v812
  %s818 = scalar_lea.vmem %s0, 268
  %s819 = smov 192
  %v820 = vld [vmem:[%s818] ss:$16 sm:%s819]
  %vm821 = vcmask 1047558
  %v822 = vsel %vm821, %v820, %v817
  %823 = vrot.lane.b32.xlu0 %v822, 48
  %v824 = vpop.permute.xlu0 %823
  %vm825 = vcmask 425344
  %s826 = scalar_lea.vmem %s1, 16
  %827 = vst.msk [vmem:[%s826] sm:$0xff] %vm825, %v824
  %s828 = scalar_lea.vmem %s0, 780
  %s829 = smov 3
  %v830 = vld [vmem:[%s828] ss:$16 sm:%s829]
  %s831 = scalar_lea.vmem %s0, 780
  %s832 = smov 12
  %v833 = vld [vmem:[%s831] ss:$16 sm:%s832]
  %vm834 = vcmask 1043458
  %v835 = vsel %vm834, %v833, %v830
  %s836 = scalar_lea.vmem %s0, 780
  %s837 = smov 48
  %v838 = vld [vmem:[%s836] ss:$16 sm:%s837]
  %vm839 = vcmask 1045508
  %v840 = vsel %vm839, %v838, %v835
  %s841 = scalar_lea.vmem %s0, 780
  %s842 = smov 192
  %v843 = vld [vmem:[%s841] ss:$16 sm:%s842]
  %vm844 = vcmask 1047558
  %v845 = vsel %vm844, %v843, %v840
  %846 = vrot.lane.b32.xlu0 %v845, 48
  %v847 = vpop.permute.xlu0 %846
  %vm848 = vcmask 425344
  %s849 = scalar_lea.vmem %s1, 48
  %850 = vst.msk [vmem:[%s849] sm:$0xff] %vm848, %v847
  %s851 = scalar_lea.vmem %s0, 396
  %s852 = smov 3
  %v853 = vld [vmem:[%s851] ss:$16 sm:%s852]
  %s854 = scalar_lea.vmem %s0, 396
  %s855 = smov 12
  %v856 = vld [vmem:[%s854] ss:$16 sm:%s855]
  %vm857 = vcmask 1043458
  %v858 = vsel %vm857, %v856, %v853
  %s859 = scalar_lea.vmem %s0, 396
  %s860 = smov 48
  %v861 = vld [vmem:[%s859] ss:$16 sm:%s860]
  %vm862 = vcmask 1045508
  %v863 = vsel %vm862, %v861, %v858
  %s864 = scalar_lea.vmem %s0, 396
  %s865 = smov 192
  %v866 = vld [vmem:[%s864] ss:$16 sm:%s865]
  %vm867 = vcmask 1047558
  %v868 = vsel %vm867, %v866, %v863
  %869 = vrot.lane.b32.xlu0 %v868, 48
  %v870 = vpop.permute.xlu0 %869
  %vm871 = vcmask 425344
  %s872 = scalar_lea.vmem %s1, 24
  %873 = vst.msk [vmem:[%s872] sm:$0xff] %vm871, %v870
  %s874 = scalar_lea.vmem %s0, 908
  %s875 = smov 3
  %v876 = vld [vmem:[%s874] ss:$16 sm:%s875]
  %s877 = scalar_lea.vmem %s0, 908
  %s878 = smov 12
  %v879 = vld [vmem:[%s877] ss:$16 sm:%s878]
  %vm880 = vcmask 1043458
  %v881 = vsel %vm880, %v879, %v876
  %s882 = scalar_lea.vmem %s0, 908
  %s883 = smov 48
  %v884 = vld [vmem:[%s882] ss:$16 sm:%s883]
  %vm885 = vcmask 1045508
  %v886 = vsel %vm885, %v884, %v881
  %s887 = scalar_lea.vmem %s0, 908
  %s888 = smov 192
  %v889 = vld [vmem:[%s887] ss:$16 sm:%s888]
  %vm890 = vcmask 1047558
  %v891 = vsel %vm890, %v889, %v886
  %892 = vrot.lane.b32.xlu0 %v891, 48
  %v893 = vpop.permute.xlu0 %892
  %vm894 = vcmask 425344
  %s895 = scalar_lea.vmem %s1, 56
  %896 = vst.msk [vmem:[%s895] sm:$0xff] %vm894, %v893
  %s897 = scalar_lea.vmem %s0, 11
  %s898 = smov 3
  %v899 = vld [vmem:[%s897] ss:$16 sm:%s898]
  %s900 = scalar_lea.vmem %s0, 11
  %s901 = smov 12
  %v902 = vld [vmem:[%s900] ss:$16 sm:%s901]
  %vm903 = vcmask 1043458
  %v904 = vsel %vm903, %v902, %v899
  %s905 = scalar_lea.vmem %s0, 11
  %s906 = smov 48
  %v907 = vld [vmem:[%s905] ss:$16 sm:%s906]
  %vm908 = vcmask 1045508
  %v909 = vsel %vm908, %v907, %v904
  %s910 = scalar_lea.vmem %s0, 11
  %s911 = smov 192
  %v912 = vld [vmem:[%s910] ss:$16 sm:%s911]
  %vm913 = vcmask 1047558
  %v914 = vsel %vm913, %v912, %v909
  %915 = vrot.lane.b32.xlu0 %v914, 44
  %v916 = vpop.permute.xlu0 %915
  %vm917 = vcmask 392544
  %918 = vst.msk [vmem:[%s1] sm:$0xff] %vm917, %v916
  %s919 = scalar_lea.vmem %s0, 523
  %s920 = smov 3
  %v921 = vld [vmem:[%s919] ss:$16 sm:%s920]
  %s922 = scalar_lea.vmem %s0, 523
  %s923 = smov 12
  %v924 = vld [vmem:[%s922] ss:$16 sm:%s923]
  %vm925 = vcmask 1043458
  %v926 = vsel %vm925, %v924, %v921
  %s927 = scalar_lea.vmem %s0, 523
  %s928 = smov 48
  %v929 = vld [vmem:[%s927] ss:$16 sm:%s928]
  %vm930 = vcmask 1045508
  %v931 = vsel %vm930, %v929, %v926
  %s932 = scalar_lea.vmem %s0, 523
  %s933 = smov 192
  %v934 = vld [vmem:[%s932] ss:$16 sm:%s933]
  %vm935 = vcmask 1047558
  %v936 = vsel %vm935, %v934, %v931
  %937 = vrot.lane.b32.xlu0 %v936, 44
  %v938 = vpop.permute.xlu0 %937
  %vm939 = vcmask 392544
  %s940 = scalar_lea.vmem %s1, 32
  %941 = vst.msk [vmem:[%s940] sm:$0xff] %vm939, %v938
  %s942 = scalar_lea.vmem %s0, 139
  %s943 = smov 3
  %v944 = vld [vmem:[%s942] ss:$16 sm:%s943]
  %s945 = scalar_lea.vmem %s0, 139
  %s946 = smov 12
  %v947 = vld [vmem:[%s945] ss:$16 sm:%s946]
  %vm948 = vcmask 1043458
  %v949 = vsel %vm948, %v947, %v944
  %s950 = scalar_lea.vmem %s0, 139
  %s951 = smov 48
  %v952 = vld [vmem:[%s950] ss:$16 sm:%s951]
  %vm953 = vcmask 1045508
  %v954 = vsel %vm953, %v952, %v949
  %s955 = scalar_lea.vmem %s0, 139
  %s956 = smov 192
  %v957 = vld [vmem:[%s955] ss:$16 sm:%s956]
  %vm958 = vcmask 1047558
  %v959 = vsel %vm958, %v957, %v954
  %960 = vrot.lane.b32.xlu0 %v959, 44
  %v961 = vpop.permute.xlu0 %960
  %vm962 = vcmask 392544
  %s963 = scalar_lea.vmem %s1, 8
  %964 = vst.msk [vmem:[%s963] sm:$0xff] %vm962, %v961
  %s965 = scalar_lea.vmem %s0, 651
  %s966 = smov 3
  %v967 = vld [vmem:[%s965] ss:$16 sm:%s966]
  %s968 = scalar_lea.vmem %s0, 651
  %s969 = smov 12
  %v970 = vld [vmem:[%s968] ss:$16 sm:%s969]
  %vm971 = vcmask 1043458
  %v972 = vsel %vm971, %v970, %v967
  %s973 = scalar_lea.vmem %s0, 651
  %s974 = smov 48
  %v975 = vld [vmem:[%s973] ss:$16 sm:%s974]
  %vm976 = vcmask 1045508
  %v977 = vsel %vm976, %v975, %v972
  %s978 = scalar_lea.vmem %s0, 651
  %s979 = smov 192
  %v980 = vld [vmem:[%s978] ss:$16 sm:%s979]
  %vm981 = vcmask 1047558
  %v982 = vsel %vm981, %v980, %v977
  %983 = vrot.lane.b32.xlu0 %v982, 44
  %v984 = vpop.permute.xlu0 %983
  %vm985 = vcmask 392544
  %s986 = scalar_lea.vmem %s1, 40
  %987 = vst.msk [vmem:[%s986] sm:$0xff] %vm985, %v984
  %s988 = scalar_lea.vmem %s0, 267
  %s989 = smov 3
  %v990 = vld [vmem:[%s988] ss:$16 sm:%s989]
  %s991 = scalar_lea.vmem %s0, 267
  %s992 = smov 12
  %v993 = vld [vmem:[%s991] ss:$16 sm:%s992]
  %vm994 = vcmask 1043458
  %v995 = vsel %vm994, %v993, %v990
  %s996 = scalar_lea.vmem %s0, 267
  %s997 = smov 48
  %v998 = vld [vmem:[%s996] ss:$16 sm:%s997]
  %vm999 = vcmask 1045508
  %v1000 = vsel %vm999, %v998, %v995
  %s1001 = scalar_lea.vmem %s0, 267
  %s1002 = smov 192
  %v1003 = vld [vmem:[%s1001] ss:$16 sm:%s1002]
  %vm1004 = vcmask 1047558
  %v1005 = vsel %vm1004, %v1003, %v1000
  %1006 = vrot.lane.b32.xlu0 %v1005, 44
  %v1007 = vpop.permute.xlu0 %1006
  %vm1008 = vcmask 392544
  %s1009 = scalar_lea.vmem %s1, 16
  %1010 = vst.msk [vmem:[%s1009] sm:$0xff] %vm1008, %v1007
  %s1011 = scalar_lea.vmem %s0, 779
  %s1012 = smov 3
  %v1013 = vld [vmem:[%s1011] ss:$16 sm:%s1012]
  %s1014 = scalar_lea.vmem %s0, 779
  %s1015 = smov 12
  %v1016 = vld [vmem:[%s1014] ss:$16 sm:%s1015]
  %vm1017 = vcmask 1043458
  %v1018 = vsel %vm1017, %v1016, %v1013
  %s1019 = scalar_lea.vmem %s0, 779
  %s1020 = smov 48
  %v1021 = vld [vmem:[%s1019] ss:$16 sm:%s1020]
  %vm1022 = vcmask 1045508
  %v1023 = vsel %vm1022, %v1021, %v1018
  %s1024 = scalar_lea.vmem %s0, 779
  %s1025 = smov 192
  %v1026 = vld [vmem:[%s1024] ss:$16 sm:%s1025]
  %vm1027 = vcmask 1047558
  %v1028 = vsel %vm1027, %v1026, %v1023
  %1029 = vrot.lane.b32.xlu0 %v1028, 44
  %v1030 = vpop.permute.xlu0 %1029
  %vm1031 = vcmask 392544
  %s1032 = scalar_lea.vmem %s1, 48
  %1033 = vst.msk [vmem:[%s1032] sm:$0xff] %vm1031, %v1030
  %s1034 = scalar_lea.vmem %s0, 395
  %s1035 = smov 3
  %v1036 = vld [vmem:[%s1034] ss:$16 sm:%s1035]
  %s1037 = scalar_lea.vmem %s0, 395
  %s1038 = smov 12
  %v1039 = vld [vmem:[%s1037] ss:$16 sm:%s1038]
  %vm1040 = vcmask 1043458
  %v1041 = vsel %vm1040, %v1039, %v1036
  %s1042 = scalar_lea.vmem %s0, 395
  %s1043 = smov 48
  %v1044 = vld [vmem:[%s1042] ss:$16 sm:%s1043]
  %vm1045 = vcmask 1045508
  %v1046 = vsel %vm1045, %v1044, %v1041
  %s1047 = scalar_lea.vmem %s0, 395
  %s1048 = smov 192
  %v1049 = vld [vmem:[%s1047] ss:$16 sm:%s1048]
  %vm1050 = vcmask 1047558
  %v1051 = vsel %vm1050, %v1049, %v1046
  %1052 = vrot.lane.b32.xlu0 %v1051, 44
  %v1053 = vpop.permute.xlu0 %1052
  %vm1054 = vcmask 392544
  %s1055 = scalar_lea.vmem %s1, 24
  %1056 = vst.msk [vmem:[%s1055] sm:$0xff] %vm1054, %v1053
  %s1057 = scalar_lea.vmem %s0, 907
  %s1058 = smov 3
  %v1059 = vld [vmem:[%s1057] ss:$16 sm:%s1058]
  %s1060 = scalar_lea.vmem %s0, 907
  %s1061 = smov 12
  %v1062 = vld [vmem:[%s1060] ss:$16 sm:%s1061]
  %vm1063 = vcmask 1043458
  %v1064 = vsel %vm1063, %v1062, %v1059
  %s1065 = scalar_lea.vmem %s0, 907
  %s1066 = smov 48
  %v1067 = vld [vmem:[%s1065] ss:$16 sm:%s1066]
  %vm1068 = vcmask 1045508
  %v1069 = vsel %vm1068, %v1067, %v1064
  %s1070 = scalar_lea.vmem %s0, 907
  %s1071 = smov 192
  %v1072 = vld [vmem:[%s1070] ss:$16 sm:%s1071]
  %vm1073 = vcmask 1047558
  %v1074 = vsel %vm1073, %v1072, %v1069
  %1075 = vrot.lane.b32.xlu0 %v1074, 44
  %v1076 = vpop.permute.xlu0 %1075
  %vm1077 = vcmask 392544
  %s1078 = scalar_lea.vmem %s1, 56
  %1079 = vst.msk [vmem:[%s1078] sm:$0xff] %vm1077, %v1076
  %s1080 = scalar_lea.vmem %s0, 10
  %s1081 = smov 3
  %v1082 = vld [vmem:[%s1080] ss:$16 sm:%s1081]
  %s1083 = scalar_lea.vmem %s0, 10
  %s1084 = smov 12
  %v1085 = vld [vmem:[%s1083] ss:$16 sm:%s1084]
  %vm1086 = vcmask 1043458
  %v1087 = vsel %vm1086, %v1085, %v1082
  %s1088 = scalar_lea.vmem %s0, 10
  %s1089 = smov 48
  %v1090 = vld [vmem:[%s1088] ss:$16 sm:%s1089]
  %vm1091 = vcmask 1045508
  %v1092 = vsel %vm1091, %v1090, %v1087
  %s1093 = scalar_lea.vmem %s0, 10
  %s1094 = smov 192
  %v1095 = vld [vmem:[%s1093] ss:$16 sm:%s1094]
  %vm1096 = vcmask 1047558
  %v1097 = vsel %vm1096, %v1095, %v1092
  %1098 = vrot.lane.b32.xlu0 %v1097, 40
  %v1099 = vpop.permute.xlu0 %1098
  %vm1100 = vcmask 359744
  %1101 = vst.msk [vmem:[%s1] sm:$0xff] %vm1100, %v1099
  %s1102 = scalar_lea.vmem %s0, 522
  %s1103 = smov 3
  %v1104 = vld [vmem:[%s1102] ss:$16 sm:%s1103]
  %s1105 = scalar_lea.vmem %s0, 522
  %s1106 = smov 12
  %v1107 = vld [vmem:[%s1105] ss:$16 sm:%s1106]
  %vm1108 = vcmask 1043458
  %v1109 = vsel %vm1108, %v1107, %v1104
  %s1110 = scalar_lea.vmem %s0, 522
  %s1111 = smov 48
  %v1112 = vld [vmem:[%s1110] ss:$16 sm:%s1111]
  %vm1113 = vcmask 1045508
  %v1114 = vsel %vm1113, %v1112, %v1109
  %s1115 = scalar_lea.vmem %s0, 522
  %s1116 = smov 192
  %v1117 = vld [vmem:[%s1115] ss:$16 sm:%s1116]
  %vm1118 = vcmask 1047558
  %v1119 = vsel %vm1118, %v1117, %v1114
  %1120 = vrot.lane.b32.xlu0 %v1119, 40
  %v1121 = vpop.permute.xlu0 %1120
  %vm1122 = vcmask 359744
  %s1123 = scalar_lea.vmem %s1, 32
  %1124 = vst.msk [vmem:[%s1123] sm:$0xff] %vm1122, %v1121
  %s1125 = scalar_lea.vmem %s0, 138
  %s1126 = smov 3
  %v1127 = vld [vmem:[%s1125] ss:$16 sm:%s1126]
  %s1128 = scalar_lea.vmem %s0, 138
  %s1129 = smov 12
  %v1130 = vld [vmem:[%s1128] ss:$16 sm:%s1129]
  %vm1131 = vcmask 1043458
  %v1132 = vsel %vm1131, %v1130, %v1127
  %s1133 = scalar_lea.vmem %s0, 138
  %s1134 = smov 48
  %v1135 = vld [vmem:[%s1133] ss:$16 sm:%s1134]
  %vm1136 = vcmask 1045508
  %v1137 = vsel %vm1136, %v1135, %v1132
  %s1138 = scalar_lea.vmem %s0, 138
  %s1139 = smov 192
  %v1140 = vld [vmem:[%s1138] ss:$16 sm:%s1139]
  %vm1141 = vcmask 1047558
  %v1142 = vsel %vm1141, %v1140, %v1137
  %1143 = vrot.lane.b32.xlu0 %v1142, 40
  %v1144 = vpop.permute.xlu0 %1143
  %vm1145 = vcmask 359744
  %s1146 = scalar_lea.vmem %s1, 8
  %1147 = vst.msk [vmem:[%s1146] sm:$0xff] %vm1145, %v1144
  %s1148 = scalar_lea.vmem %s0, 650
  %s1149 = smov 3
  %v1150 = vld [vmem:[%s1148] ss:$16 sm:%s1149]
  %s1151 = scalar_lea.vmem %s0, 650
  %s1152 = smov 12
  %v1153 = vld [vmem:[%s1151] ss:$16 sm:%s1152]
  %vm1154 = vcmask 1043458
  %v1155 = vsel %vm1154, %v1153, %v1150
  %s1156 = scalar_lea.vmem %s0, 650
  %s1157 = smov 48
  %v1158 = vld [vmem:[%s1156] ss:$16 sm:%s1157]
  %vm1159 = vcmask 1045508
  %v1160 = vsel %vm1159, %v1158, %v1155
  %s1161 = scalar_lea.vmem %s0, 650
  %s1162 = smov 192
  %v1163 = vld [vmem:[%s1161] ss:$16 sm:%s1162]
  %vm1164 = vcmask 1047558
  %v1165 = vsel %vm1164, %v1163, %v1160
  %1166 = vrot.lane.b32.xlu0 %v1165, 40
  %v1167 = vpop.permute.xlu0 %1166
  %vm1168 = vcmask 359744
  %s1169 = scalar_lea.vmem %s1, 40
  %1170 = vst.msk [vmem:[%s1169] sm:$0xff] %vm1168, %v1167
  %s1171 = scalar_lea.vmem %s0, 266
  %s1172 = smov 3
  %v1173 = vld [vmem:[%s1171] ss:$16 sm:%s1172]
  %s1174 = scalar_lea.vmem %s0, 266
  %s1175 = smov 12
  %v1176 = vld [vmem:[%s1174] ss:$16 sm:%s1175]
  %vm1177 = vcmask 1043458
  %v1178 = vsel %vm1177, %v1176, %v1173
  %s1179 = scalar_lea.vmem %s0, 266
  %s1180 = smov 48
  %v1181 = vld [vmem:[%s1179] ss:$16 sm:%s1180]
  %vm1182 = vcmask 1045508
  %v1183 = vsel %vm1182, %v1181, %v1178
  %s1184 = scalar_lea.vmem %s0, 266
  %s1185 = smov 192
  %v1186 = vld [vmem:[%s1184] ss:$16 sm:%s1185]
  %vm1187 = vcmask 1047558
  %v1188 = vsel %vm1187, %v1186, %v1183
  %1189 = vrot.lane.b32.xlu0 %v1188, 40
  %v1190 = vpop.permute.xlu0 %1189
  %vm1191 = vcmask 359744
  %s1192 = scalar_lea.vmem %s1, 16
  %1193 = vst.msk [vmem:[%s1192] sm:$0xff] %vm1191, %v1190
  %s1194 = scalar_lea.vmem %s0, 778
  %s1195 = smov 3
  %v1196 = vld [vmem:[%s1194] ss:$16 sm:%s1195]
  %s1197 = scalar_lea.vmem %s0, 778
  %s1198 = smov 12
  %v1199 = vld [vmem:[%s1197] ss:$16 sm:%s1198]
  %vm1200 = vcmask 1043458
  %v1201 = vsel %vm1200, %v1199, %v1196
  %s1202 = scalar_lea.vmem %s0, 778
  %s1203 = smov 48
  %v1204 = vld [vmem:[%s1202] ss:$16 sm:%s1203]
  %vm1205 = vcmask 1045508
  %v1206 = vsel %vm1205, %v1204, %v1201
  %s1207 = scalar_lea.vmem %s0, 778
  %s1208 = smov 192
  %v1209 = vld [vmem:[%s1207] ss:$16 sm:%s1208]
  %vm1210 = vcmask 1047558
  %v1211 = vsel %vm1210, %v1209, %v1206
  %1212 = vrot.lane.b32.xlu0 %v1211, 40
  %v1213 = vpop.permute.xlu0 %1212
  %vm1214 = vcmask 359744
  %s1215 = scalar_lea.vmem %s1, 48
  %1216 = vst.msk [vmem:[%s1215] sm:$0xff] %vm1214, %v1213
  %s1217 = scalar_lea.vmem %s0, 394
  %s1218 = smov 3
  %v1219 = vld [vmem:[%s1217] ss:$16 sm:%s1218]
  %s1220 = scalar_lea.vmem %s0, 394
  %s1221 = smov 12
  %v1222 = vld [vmem:[%s1220] ss:$16 sm:%s1221]
  %vm1223 = vcmask 1043458
  %v1224 = vsel %vm1223, %v1222, %v1219
  %s1225 = scalar_lea.vmem %s0, 394
  %s1226 = smov 48
  %v1227 = vld [vmem:[%s1225] ss:$16 sm:%s1226]
  %vm1228 = vcmask 1045508
  %v1229 = vsel %vm1228, %v1227, %v1224
  %s1230 = scalar_lea.vmem %s0, 394
  %s1231 = smov 192
  %v1232 = vld [vmem:[%s1230] ss:$16 sm:%s1231]
  %vm1233 = vcmask 1047558
  %v1234 = vsel %vm1233, %v1232, %v1229
  %1235 = vrot.lane.b32.xlu0 %v1234, 40
  %v1236 = vpop.permute.xlu0 %1235
  %vm1237 = vcmask 359744
  %s1238 = scalar_lea.vmem %s1, 24
  %1239 = vst.msk [vmem:[%s1238] sm:$0xff] %vm1237, %v1236
  %s1240 = scalar_lea.vmem %s0, 906
  %s1241 = smov 3
  %v1242 = vld [vmem:[%s1240] ss:$16 sm:%s1241]
  %s1243 = scalar_lea.vmem %s0, 906
  %s1244 = smov 12
  %v1245 = vld [vmem:[%s1243] ss:$16 sm:%s1244]
  %vm1246 = vcmask 1043458
  %v1247 = vsel %vm1246, %v1245, %v1242
  %s1248 = scalar_lea.vmem %s0, 906
  %s1249 = smov 48
  %v1250 = vld [vmem:[%s1248] ss:$16 sm:%s1249]
  %vm1251 = vcmask 1045508
  %v1252 = vsel %vm1251, %v1250, %v1247
  %s1253 = scalar_lea.vmem %s0, 906
  %s1254 = smov 192
  %v1255 = vld [vmem:[%s1253] ss:$16 sm:%s1254]
  %vm1256 = vcmask 1047558
  %v1257 = vsel %vm1256, %v1255, %v1252
  %1258 = vrot.lane.b32.xlu0 %v1257, 40
  %v1259 = vpop.permute.xlu0 %1258
  %vm1260 = vcmask 359744
  %s1261 = scalar_lea.vmem %s1, 56
  %1262 = vst.msk [vmem:[%s1261] sm:$0xff] %vm1260, %v1259
  %s1263 = scalar_lea.vmem %s0, 9
  %s1264 = smov 3
  %v1265 = vld [vmem:[%s1263] ss:$16 sm:%s1264]
  %s1266 = scalar_lea.vmem %s0, 9
  %s1267 = smov 12
  %v1268 = vld [vmem:[%s1266] ss:$16 sm:%s1267]
  %vm1269 = vcmask 1043458
  %v1270 = vsel %vm1269, %v1268, %v1265
  %s1271 = scalar_lea.vmem %s0, 9
  %s1272 = smov 48
  %v1273 = vld [vmem:[%s1271] ss:$16 sm:%s1272]
  %vm1274 = vcmask 1045508
  %v1275 = vsel %vm1274, %v1273, %v1270
  %s1276 = scalar_lea.vmem %s0, 9
  %s1277 = smov 192
  %v1278 = vld [vmem:[%s1276] ss:$16 sm:%s1277]
  %vm1279 = vcmask 1047558
  %v1280 = vsel %vm1279, %v1278, %v1275
  %1281 = vrot.lane.b32.xlu0 %v1280, 36
  %v1282 = vpop.permute.xlu0 %1281
  %vm1283 = vcmask 326944
  %1284 = vst.msk [vmem:[%s1] sm:$0xff] %vm1283, %v1282
  %s1285 = scalar_lea.vmem %s0, 521
  %s1286 = smov 3
  %v1287 = vld [vmem:[%s1285] ss:$16 sm:%s1286]
  %s1288 = scalar_lea.vmem %s0, 521
  %s1289 = smov 12
  %v1290 = vld [vmem:[%s1288] ss:$16 sm:%s1289]
  %vm1291 = vcmask 1043458
  %v1292 = vsel %vm1291, %v1290, %v1287
  %s1293 = scalar_lea.vmem %s0, 521
  %s1294 = smov 48
  %v1295 = vld [vmem:[%s1293] ss:$16 sm:%s1294]
  %vm1296 = vcmask 1045508
  %v1297 = vsel %vm1296, %v1295, %v1292
  %s1298 = scalar_lea.vmem %s0, 521
  %s1299 = smov 192
  %v1300 = vld [vmem:[%s1298] ss:$16 sm:%s1299]
  %vm1301 = vcmask 1047558
  %v1302 = vsel %vm1301, %v1300, %v1297
  %1303 = vrot.lane.b32.xlu0 %v1302, 36
  %v1304 = vpop.permute.xlu0 %1303
  %vm1305 = vcmask 326944
  %s1306 = scalar_lea.vmem %s1, 32
  %1307 = vst.msk [vmem:[%s1306] sm:$0xff] %vm1305, %v1304
  %s1308 = scalar_lea.vmem %s0, 137
  %s1309 = smov 3
  %v1310 = vld [vmem:[%s1308] ss:$16 sm:%s1309]
  %s1311 = scalar_lea.vmem %s0, 137
  %s1312 = smov 12
  %v1313 = vld [vmem:[%s1311] ss:$16 sm:%s1312]
  %vm1314 = vcmask 1043458
  %v1315 = vsel %vm1314, %v1313, %v1310
  %s1316 = scalar_lea.vmem %s0, 137
  %s1317 = smov 48
  %v1318 = vld [vmem:[%s1316] ss:$16 sm:%s1317]
  %vm1319 = vcmask 1045508
  %v1320 = vsel %vm1319, %v1318, %v1315
  %s1321 = scalar_lea.vmem %s0, 137
  %s1322 = smov 192
  %v1323 = vld [vmem:[%s1321] ss:$16 sm:%s1322]
  %vm1324 = vcmask 1047558
  %v1325 = vsel %vm1324, %v1323, %v1320
  %1326 = vrot.lane.b32.xlu0 %v1325, 36
  %v1327 = vpop.permute.xlu0 %1326
  %vm1328 = vcmask 326944
  %s1329 = scalar_lea.vmem %s1, 8
  %1330 = vst.msk [vmem:[%s1329] sm:$0xff] %vm1328, %v1327
  %s1331 = scalar_lea.vmem %s0, 649
  %s1332 = smov 3
  %v1333 = vld [vmem:[%s1331] ss:$16 sm:%s1332]
  %s1334 = scalar_lea.vmem %s0, 649
  %s1335 = smov 12
  %v1336 = vld [vmem:[%s1334] ss:$16 sm:%s1335]
  %vm1337 = vcmask 1043458
  %v1338 = vsel %vm1337, %v1336, %v1333
  %s1339 = scalar_lea.vmem %s0, 649
  %s1340 = smov 48
  %v1341 = vld [vmem:[%s1339] ss:$16 sm:%s1340]
  %vm1342 = vcmask 1045508
  %v1343 = vsel %vm1342, %v1341, %v1338
  %s1344 = scalar_lea.vmem %s0, 649
  %s1345 = smov 192
  %v1346 = vld [vmem:[%s1344] ss:$16 sm:%s1345]
  %vm1347 = vcmask 1047558
  %v1348 = vsel %vm1347, %v1346, %v1343
  %1349 = vrot.lane.b32.xlu0 %v1348, 36
  %v1350 = vpop.permute.xlu0 %1349
  %vm1351 = vcmask 326944
  %s1352 = scalar_lea.vmem %s1, 40
  %1353 = vst.msk [vmem:[%s1352] sm:$0xff] %vm1351, %v1350
  %s1354 = scalar_lea.vmem %s0, 265
  %s1355 = smov 3
  %v1356 = vld [vmem:[%s1354] ss:$16 sm:%s1355]
  %s1357 = scalar_lea.vmem %s0, 265
  %s1358 = smov 12
  %v1359 = vld [vmem:[%s1357] ss:$16 sm:%s1358]
  %vm1360 = vcmask 1043458
  %v1361 = vsel %vm1360, %v1359, %v1356
  %s1362 = scalar_lea.vmem %s0, 265
  %s1363 = smov 48
  %v1364 = vld [vmem:[%s1362] ss:$16 sm:%s1363]
  %vm1365 = vcmask 1045508
  %v1366 = vsel %vm1365, %v1364, %v1361
  %s1367 = scalar_lea.vmem %s0, 265
  %s1368 = smov 192
  %v1369 = vld [vmem:[%s1367] ss:$16 sm:%s1368]
  %vm1370 = vcmask 1047558
  %v1371 = vsel %vm1370, %v1369, %v1366
  %1372 = vrot.lane.b32.xlu0 %v1371, 36
  %v1373 = vpop.permute.xlu0 %1372
  %vm1374 = vcmask 326944
  %s1375 = scalar_lea.vmem %s1, 16
  %1376 = vst.msk [vmem:[%s1375] sm:$0xff] %vm1374, %v1373
  %s1377 = scalar_lea.vmem %s0, 777
  %s1378 = smov 3
  %v1379 = vld [vmem:[%s1377] ss:$16 sm:%s1378]
  %s1380 = scalar_lea.vmem %s0, 777
  %s1381 = smov 12
  %v1382 = vld [vmem:[%s1380] ss:$16 sm:%s1381]
  %vm1383 = vcmask 1043458
  %v1384 = vsel %vm1383, %v1382, %v1379
  %s1385 = scalar_lea.vmem %s0, 777
  %s1386 = smov 48
  %v1387 = vld [vmem:[%s1385] ss:$16 sm:%s1386]
  %vm1388 = vcmask 1045508
  %v1389 = vsel %vm1388, %v1387, %v1384
  %s1390 = scalar_lea.vmem %s0, 777
  %s1391 = smov 192
  %v1392 = vld [vmem:[%s1390] ss:$16 sm:%s1391]
  %vm1393 = vcmask 1047558
  %v1394 = vsel %vm1393, %v1392, %v1389
  %1395 = vrot.lane.b32.xlu0 %v1394, 36
  %v1396 = vpop.permute.xlu0 %1395
  %vm1397 = vcmask 326944
  %s1398 = scalar_lea.vmem %s1, 48
  %1399 = vst.msk [vmem:[%s1398] sm:$0xff] %vm1397, %v1396
  %s1400 = scalar_lea.vmem %s0, 393
  %s1401 = smov 3
  %v1402 = vld [vmem:[%s1400] ss:$16 sm:%s1401]
  %s1403 = scalar_lea.vmem %s0, 393
  %s1404 = smov 12
  %v1405 = vld [vmem:[%s1403] ss:$16 sm:%s1404]
  %vm1406 = vcmask 1043458
  %v1407 = vsel %vm1406, %v1405, %v1402
  %s1408 = scalar_lea.vmem %s0, 393
  %s1409 = smov 48
  %v1410 = vld [vmem:[%s1408] ss:$16 sm:%s1409]
  %vm1411 = vcmask 1045508
  %v1412 = vsel %vm1411, %v1410, %v1407
  %s1413 = scalar_lea.vmem %s0, 393
  %s1414 = smov 192
  %v1415 = vld [vmem:[%s1413] ss:$16 sm:%s1414]
  %vm1416 = vcmask 1047558
  %v1417 = vsel %vm1416, %v1415, %v1412
  %1418 = vrot.lane.b32.xlu0 %v1417, 36
  %v1419 = vpop.permute.xlu0 %1418
  %vm1420 = vcmask 326944
  %s1421 = scalar_lea.vmem %s1, 24
  %1422 = vst.msk [vmem:[%s1421] sm:$0xff] %vm1420, %v1419
  %s1423 = scalar_lea.vmem %s0, 905
  %s1424 = smov 3
  %v1425 = vld [vmem:[%s1423] ss:$16 sm:%s1424]
  %s1426 = scalar_lea.vmem %s0, 905
  %s1427 = smov 12
  %v1428 = vld [vmem:[%s1426] ss:$16 sm:%s1427]
  %vm1429 = vcmask 1043458
  %v1430 = vsel %vm1429, %v1428, %v1425
  %s1431 = scalar_lea.vmem %s0, 905
  %s1432 = smov 48
  %v1433 = vld [vmem:[%s1431] ss:$16 sm:%s1432]
  %vm1434 = vcmask 1045508
  %v1435 = vsel %vm1434, %v1433, %v1430
  %s1436 = scalar_lea.vmem %s0, 905
  %s1437 = smov 192
  %v1438 = vld [vmem:[%s1436] ss:$16 sm:%s1437]
  %vm1439 = vcmask 1047558
  %v1440 = vsel %vm1439, %v1438, %v1435
  %1441 = vrot.lane.b32.xlu0 %v1440, 36
  %v1442 = vpop.permute.xlu0 %1441
  %vm1443 = vcmask 326944
  %s1444 = scalar_lea.vmem %s1, 56
  %1445 = vst.msk [vmem:[%s1444] sm:$0xff] %vm1443, %v1442
  %s1446 = scalar_lea.vmem %s0, 8
  %s1447 = smov 3
  %v1448 = vld [vmem:[%s1446] ss:$16 sm:%s1447]
  %s1449 = scalar_lea.vmem %s0, 8
  %s1450 = smov 12
  %v1451 = vld [vmem:[%s1449] ss:$16 sm:%s1450]
  %vm1452 = vcmask 1043458
  %v1453 = vsel %vm1452, %v1451, %v1448
  %s1454 = scalar_lea.vmem %s0, 8
  %s1455 = smov 48
  %v1456 = vld [vmem:[%s1454] ss:$16 sm:%s1455]
  %vm1457 = vcmask 1045508
  %v1458 = vsel %vm1457, %v1456, %v1453
  %s1459 = scalar_lea.vmem %s0, 8
  %s1460 = smov 192
  %v1461 = vld [vmem:[%s1459] ss:$16 sm:%s1460]
  %vm1462 = vcmask 1047558
  %v1463 = vsel %vm1462, %v1461, %v1458
  %1464 = vrot.lane.b32.xlu0 %v1463, 32
  %v1465 = vpop.permute.xlu0 %1464
  %vm1466 = vcmask 294144
  %1467 = vst.msk [vmem:[%s1] sm:$0xff] %vm1466, %v1465
  %s1468 = scalar_lea.vmem %s0, 520
  %s1469 = smov 3
  %v1470 = vld [vmem:[%s1468] ss:$16 sm:%s1469]
  %s1471 = scalar_lea.vmem %s0, 520
  %s1472 = smov 12
  %v1473 = vld [vmem:[%s1471] ss:$16 sm:%s1472]
  %vm1474 = vcmask 1043458
  %v1475 = vsel %vm1474, %v1473, %v1470
  %s1476 = scalar_lea.vmem %s0, 520
  %s1477 = smov 48
  %v1478 = vld [vmem:[%s1476] ss:$16 sm:%s1477]
  %vm1479 = vcmask 1045508
  %v1480 = vsel %vm1479, %v1478, %v1475
  %s1481 = scalar_lea.vmem %s0, 520
  %s1482 = smov 192
  %v1483 = vld [vmem:[%s1481] ss:$16 sm:%s1482]
  %vm1484 = vcmask 1047558
  %v1485 = vsel %vm1484, %v1483, %v1480
  %1486 = vrot.lane.b32.xlu0 %v1485, 32
  %v1487 = vpop.permute.xlu0 %1486
  %vm1488 = vcmask 294144
  %s1489 = scalar_lea.vmem %s1, 32
  %1490 = vst.msk [vmem:[%s1489] sm:$0xff] %vm1488, %v1487
  %s1491 = scalar_lea.vmem %s0, 136
  %s1492 = smov 3
  %v1493 = vld [vmem:[%s1491] ss:$16 sm:%s1492]
  %s1494 = scalar_lea.vmem %s0, 136
  %s1495 = smov 12
  %v1496 = vld [vmem:[%s1494] ss:$16 sm:%s1495]
  %vm1497 = vcmask 1043458
  %v1498 = vsel %vm1497, %v1496, %v1493
  %s1499 = scalar_lea.vmem %s0, 136
  %s1500 = smov 48
  %v1501 = vld [vmem:[%s1499] ss:$16 sm:%s1500]
  %vm1502 = vcmask 1045508
  %v1503 = vsel %vm1502, %v1501, %v1498
  %s1504 = scalar_lea.vmem %s0, 136
  %s1505 = smov 192
  %v1506 = vld [vmem:[%s1504] ss:$16 sm:%s1505]
  %vm1507 = vcmask 1047558
  %v1508 = vsel %vm1507, %v1506, %v1503
  %1509 = vrot.lane.b32.xlu0 %v1508, 32
  %v1510 = vpop.permute.xlu0 %1509
  %vm1511 = vcmask 294144
  %s1512 = scalar_lea.vmem %s1, 8
  %1513 = vst.msk [vmem:[%s1512] sm:$0xff] %vm1511, %v1510
  %s1514 = scalar_lea.vmem %s0, 648
  %s1515 = smov 3
  %v1516 = vld [vmem:[%s1514] ss:$16 sm:%s1515]
  %s1517 = scalar_lea.vmem %s0, 648
  %s1518 = smov 12
  %v1519 = vld [vmem:[%s1517] ss:$16 sm:%s1518]
  %vm1520 = vcmask 1043458
  %v1521 = vsel %vm1520, %v1519, %v1516
  %s1522 = scalar_lea.vmem %s0, 648
  %s1523 = smov 48
  %v1524 = vld [vmem:[%s1522] ss:$16 sm:%s1523]
  %vm1525 = vcmask 1045508
  %v1526 = vsel %vm1525, %v1524, %v1521
  %s1527 = scalar_lea.vmem %s0, 648
  %s1528 = smov 192
  %v1529 = vld [vmem:[%s1527] ss:$16 sm:%s1528]
  %vm1530 = vcmask 1047558
  %v1531 = vsel %vm1530, %v1529, %v1526
  %1532 = vrot.lane.b32.xlu0 %v1531, 32
  %v1533 = vpop.permute.xlu0 %1532
  %vm1534 = vcmask 294144
  %s1535 = scalar_lea.vmem %s1, 40
  %1536 = vst.msk [vmem:[%s1535] sm:$0xff] %vm1534, %v1533
  %s1537 = scalar_lea.vmem %s0, 264
  %s1538 = smov 3
  %v1539 = vld [vmem:[%s1537] ss:$16 sm:%s1538]
  %s1540 = scalar_lea.vmem %s0, 264
  %s1541 = smov 12
  %v1542 = vld [vmem:[%s1540] ss:$16 sm:%s1541]
  %vm1543 = vcmask 1043458
  %v1544 = vsel %vm1543, %v1542, %v1539
  %s1545 = scalar_lea.vmem %s0, 264
  %s1546 = smov 48
  %v1547 = vld [vmem:[%s1545] ss:$16 sm:%s1546]
  %vm1548 = vcmask 1045508
  %v1549 = vsel %vm1548, %v1547, %v1544
  %s1550 = scalar_lea.vmem %s0, 264
  %s1551 = smov 192
  %v1552 = vld [vmem:[%s1550] ss:$16 sm:%s1551]
  %vm1553 = vcmask 1047558
  %v1554 = vsel %vm1553, %v1552, %v1549
  %1555 = vrot.lane.b32.xlu0 %v1554, 32
  %v1556 = vpop.permute.xlu0 %1555
  %vm1557 = vcmask 294144
  %s1558 = scalar_lea.vmem %s1, 16
  %1559 = vst.msk [vmem:[%s1558] sm:$0xff] %vm1557, %v1556
  %s1560 = scalar_lea.vmem %s0, 776
  %s1561 = smov 3
  %v1562 = vld [vmem:[%s1560] ss:$16 sm:%s1561]
  %s1563 = scalar_lea.vmem %s0, 776
  %s1564 = smov 12
  %v1565 = vld [vmem:[%s1563] ss:$16 sm:%s1564]
  %vm1566 = vcmask 1043458
  %v1567 = vsel %vm1566, %v1565, %v1562
  %s1568 = scalar_lea.vmem %s0, 776
  %s1569 = smov 48
  %v1570 = vld [vmem:[%s1568] ss:$16 sm:%s1569]
  %vm1571 = vcmask 1045508
  %v1572 = vsel %vm1571, %v1570, %v1567
  %s1573 = scalar_lea.vmem %s0, 776
  %s1574 = smov 192
  %v1575 = vld [vmem:[%s1573] ss:$16 sm:%s1574]
  %vm1576 = vcmask 1047558
  %v1577 = vsel %vm1576, %v1575, %v1572
  %1578 = vrot.lane.b32.xlu0 %v1577, 32
  %v1579 = vpop.permute.xlu0 %1578
  %vm1580 = vcmask 294144
  %s1581 = scalar_lea.vmem %s1, 48
  %1582 = vst.msk [vmem:[%s1581] sm:$0xff] %vm1580, %v1579
  %s1583 = scalar_lea.vmem %s0, 392
  %s1584 = smov 3
  %v1585 = vld [vmem:[%s1583] ss:$16 sm:%s1584]
  %s1586 = scalar_lea.vmem %s0, 392
  %s1587 = smov 12
  %v1588 = vld [vmem:[%s1586] ss:$16 sm:%s1587]
  %vm1589 = vcmask 1043458
  %v1590 = vsel %vm1589, %v1588, %v1585
  %s1591 = scalar_lea.vmem %s0, 392
  %s1592 = smov 48
  %v1593 = vld [vmem:[%s1591] ss:$16 sm:%s1592]
  %vm1594 = vcmask 1045508
  %v1595 = vsel %vm1594, %v1593, %v1590
  %s1596 = scalar_lea.vmem %s0, 392
  %s1597 = smov 192
  %v1598 = vld [vmem:[%s1596] ss:$16 sm:%s1597]
  %vm1599 = vcmask 1047558
  %v1600 = vsel %vm1599, %v1598, %v1595
  %1601 = vrot.lane.b32.xlu0 %v1600, 32
  %v1602 = vpop.permute.xlu0 %1601
  %vm1603 = vcmask 294144
  %s1604 = scalar_lea.vmem %s1, 24
  %1605 = vst.msk [vmem:[%s1604] sm:$0xff] %vm1603, %v1602
  %s1606 = scalar_lea.vmem %s0, 904
  %s1607 = smov 3
  %v1608 = vld [vmem:[%s1606] ss:$16 sm:%s1607]
  %s1609 = scalar_lea.vmem %s0, 904
  %s1610 = smov 12
  %v1611 = vld [vmem:[%s1609] ss:$16 sm:%s1610]
  %vm1612 = vcmask 1043458
  %v1613 = vsel %vm1612, %v1611, %v1608
  %s1614 = scalar_lea.vmem %s0, 904
  %s1615 = smov 48
  %v1616 = vld [vmem:[%s1614] ss:$16 sm:%s1615]
  %vm1617 = vcmask 1045508
  %v1618 = vsel %vm1617, %v1616, %v1613
  %s1619 = scalar_lea.vmem %s0, 904
  %s1620 = smov 192
  %v1621 = vld [vmem:[%s1619] ss:$16 sm:%s1620]
  %vm1622 = vcmask 1047558
  %v1623 = vsel %vm1622, %v1621, %v1618
  %1624 = vrot.lane.b32.xlu0 %v1623, 32
  %v1625 = vpop.permute.xlu0 %1624
  %vm1626 = vcmask 294144
  %s1627 = scalar_lea.vmem %s1, 56
  %1628 = vst.msk [vmem:[%s1627] sm:$0xff] %vm1626, %v1625
  %s1629 = scalar_lea.vmem %s0, 7
  %s1630 = smov 3
  %v1631 = vld [vmem:[%s1629] ss:$16 sm:%s1630]
  %s1632 = scalar_lea.vmem %s0, 7
  %s1633 = smov 12
  %v1634 = vld [vmem:[%s1632] ss:$16 sm:%s1633]
  %vm1635 = vcmask 1043458
  %v1636 = vsel %vm1635, %v1634, %v1631
  %s1637 = scalar_lea.vmem %s0, 7
  %s1638 = smov 48
  %v1639 = vld [vmem:[%s1637] ss:$16 sm:%s1638]
  %vm1640 = vcmask 1045508
  %v1641 = vsel %vm1640, %v1639, %v1636
  %s1642 = scalar_lea.vmem %s0, 7
  %s1643 = smov 192
  %v1644 = vld [vmem:[%s1642] ss:$16 sm:%s1643]
  %vm1645 = vcmask 1047558
  %v1646 = vsel %vm1645, %v1644, %v1641
  %1647 = vrot.lane.b32.xlu0 %v1646, 28
  %v1648 = vpop.permute.xlu0 %1647
  %vm1649 = vcmask 261344
  %1650 = vst.msk [vmem:[%s1] sm:$0xff] %vm1649, %v1648
  %s1651 = scalar_lea.vmem %s0, 519
  %s1652 = smov 3
  %v1653 = vld [vmem:[%s1651] ss:$16 sm:%s1652]
  %s1654 = scalar_lea.vmem %s0, 519
  %s1655 = smov 12
  %v1656 = vld [vmem:[%s1654] ss:$16 sm:%s1655]
  %vm1657 = vcmask 1043458
  %v1658 = vsel %vm1657, %v1656, %v1653
  %s1659 = scalar_lea.vmem %s0, 519
  %s1660 = smov 48
  %v1661 = vld [vmem:[%s1659] ss:$16 sm:%s1660]
  %vm1662 = vcmask 1045508
  %v1663 = vsel %vm1662, %v1661, %v1658
  %s1664 = scalar_lea.vmem %s0, 519
  %s1665 = smov 192
  %v1666 = vld [vmem:[%s1664] ss:$16 sm:%s1665]
  %vm1667 = vcmask 1047558
  %v1668 = vsel %vm1667, %v1666, %v1663
  %1669 = vrot.lane.b32.xlu0 %v1668, 28
  %v1670 = vpop.permute.xlu0 %1669
  %vm1671 = vcmask 261344
  %s1672 = scalar_lea.vmem %s1, 32
  %1673 = vst.msk [vmem:[%s1672] sm:$0xff] %vm1671, %v1670
  %s1674 = scalar_lea.vmem %s0, 135
  %s1675 = smov 3
  %v1676 = vld [vmem:[%s1674] ss:$16 sm:%s1675]
  %s1677 = scalar_lea.vmem %s0, 135
  %s1678 = smov 12
  %v1679 = vld [vmem:[%s1677] ss:$16 sm:%s1678]
  %vm1680 = vcmask 1043458
  %v1681 = vsel %vm1680, %v1679, %v1676
  %s1682 = scalar_lea.vmem %s0, 135
  %s1683 = smov 48
  %v1684 = vld [vmem:[%s1682] ss:$16 sm:%s1683]
  %vm1685 = vcmask 1045508
  %v1686 = vsel %vm1685, %v1684, %v1681
  %s1687 = scalar_lea.vmem %s0, 135
  %s1688 = smov 192
  %v1689 = vld [vmem:[%s1687] ss:$16 sm:%s1688]
  %vm1690 = vcmask 1047558
  %v1691 = vsel %vm1690, %v1689, %v1686
  %1692 = vrot.lane.b32.xlu0 %v1691, 28
  %v1693 = vpop.permute.xlu0 %1692
  %vm1694 = vcmask 261344
  %s1695 = scalar_lea.vmem %s1, 8
  %1696 = vst.msk [vmem:[%s1695] sm:$0xff] %vm1694, %v1693
  %s1697 = scalar_lea.vmem %s0, 647
  %s1698 = smov 3
  %v1699 = vld [vmem:[%s1697] ss:$16 sm:%s1698]
  %s1700 = scalar_lea.vmem %s0, 647
  %s1701 = smov 12
  %v1702 = vld [vmem:[%s1700] ss:$16 sm:%s1701]
  %vm1703 = vcmask 1043458
  %v1704 = vsel %vm1703, %v1702, %v1699
  %s1705 = scalar_lea.vmem %s0, 647
  %s1706 = smov 48
  %v1707 = vld [vmem:[%s1705] ss:$16 sm:%s1706]
  %vm1708 = vcmask 1045508
  %v1709 = vsel %vm1708, %v1707, %v1704
  %s1710 = scalar_lea.vmem %s0, 647
  %s1711 = smov 192
  %v1712 = vld [vmem:[%s1710] ss:$16 sm:%s1711]
  %vm1713 = vcmask 1047558
  %v1714 = vsel %vm1713, %v1712, %v1709
  %1715 = vrot.lane.b32.xlu0 %v1714, 28
  %v1716 = vpop.permute.xlu0 %1715
  %vm1717 = vcmask 261344
  %s1718 = scalar_lea.vmem %s1, 40
  %1719 = vst.msk [vmem:[%s1718] sm:$0xff] %vm1717, %v1716
  %s1720 = scalar_lea.vmem %s0, 263
  %s1721 = smov 3
  %v1722 = vld [vmem:[%s1720] ss:$16 sm:%s1721]
  %s1723 = scalar_lea.vmem %s0, 263
  %s1724 = smov 12
  %v1725 = vld [vmem:[%s1723] ss:$16 sm:%s1724]
  %vm1726 = vcmask 1043458
  %v1727 = vsel %vm1726, %v1725, %v1722
  %s1728 = scalar_lea.vmem %s0, 263
  %s1729 = smov 48
  %v1730 = vld [vmem:[%s1728] ss:$16 sm:%s1729]
  %vm1731 = vcmask 1045508
  %v1732 = vsel %vm1731, %v1730, %v1727
  %s1733 = scalar_lea.vmem %s0, 263
  %s1734 = smov 192
  %v1735 = vld [vmem:[%s1733] ss:$16 sm:%s1734]
  %vm1736 = vcmask 1047558
  %v1737 = vsel %vm1736, %v1735, %v1732
  %1738 = vrot.lane.b32.xlu0 %v1737, 28
  %v1739 = vpop.permute.xlu0 %1738
  %vm1740 = vcmask 261344
  %s1741 = scalar_lea.vmem %s1, 16
  %1742 = vst.msk [vmem:[%s1741] sm:$0xff] %vm1740, %v1739
  %s1743 = scalar_lea.vmem %s0, 775
  %s1744 = smov 3
  %v1745 = vld [vmem:[%s1743] ss:$16 sm:%s1744]
  %s1746 = scalar_lea.vmem %s0, 775
  %s1747 = smov 12
  %v1748 = vld [vmem:[%s1746] ss:$16 sm:%s1747]
  %vm1749 = vcmask 1043458
  %v1750 = vsel %vm1749, %v1748, %v1745
  %s1751 = scalar_lea.vmem %s0, 775
  %s1752 = smov 48
  %v1753 = vld [vmem:[%s1751] ss:$16 sm:%s1752]
  %vm1754 = vcmask 1045508
  %v1755 = vsel %vm1754, %v1753, %v1750
  %s1756 = scalar_lea.vmem %s0, 775
  %s1757 = smov 192
  %v1758 = vld [vmem:[%s1756] ss:$16 sm:%s1757]
  %vm1759 = vcmask 1047558
  %v1760 = vsel %vm1759, %v1758, %v1755
  %1761 = vrot.lane.b32.xlu0 %v1760, 28
  %v1762 = vpop.permute.xlu0 %1761
  %vm1763 = vcmask 261344
  %s1764 = scalar_lea.vmem %s1, 48
  %1765 = vst.msk [vmem:[%s1764] sm:$0xff] %vm1763, %v1762
  %s1766 = scalar_lea.vmem %s0, 391
  %s1767 = smov 3
  %v1768 = vld [vmem:[%s1766] ss:$16 sm:%s1767]
  %s1769 = scalar_lea.vmem %s0, 391
  %s1770 = smov 12
  %v1771 = vld [vmem:[%s1769] ss:$16 sm:%s1770]
  %vm1772 = vcmask 1043458
  %v1773 = vsel %vm1772, %v1771, %v1768
  %s1774 = scalar_lea.vmem %s0, 391
  %s1775 = smov 48
  %v1776 = vld [vmem:[%s1774] ss:$16 sm:%s1775]
  %vm1777 = vcmask 1045508
  %v1778 = vsel %vm1777, %v1776, %v1773
  %s1779 = scalar_lea.vmem %s0, 391
  %s1780 = smov 192
  %v1781 = vld [vmem:[%s1779] ss:$16 sm:%s1780]
  %vm1782 = vcmask 1047558
  %v1783 = vsel %vm1782, %v1781, %v1778
  %1784 = vrot.lane.b32.xlu0 %v1783, 28
  %v1785 = vpop.permute.xlu0 %1784
  %vm1786 = vcmask 261344
  %s1787 = scalar_lea.vmem %s1, 24
  %1788 = vst.msk [vmem:[%s1787] sm:$0xff] %vm1786, %v1785
  %s1789 = scalar_lea.vmem %s0, 903
  %s1790 = smov 3
  %v1791 = vld [vmem:[%s1789] ss:$16 sm:%s1790]
  %s1792 = scalar_lea.vmem %s0, 903
  %s1793 = smov 12
  %v1794 = vld [vmem:[%s1792] ss:$16 sm:%s1793]
  %vm1795 = vcmask 1043458
  %v1796 = vsel %vm1795, %v1794, %v1791
  %s1797 = scalar_lea.vmem %s0, 903
  %s1798 = smov 48
  %v1799 = vld [vmem:[%s1797] ss:$16 sm:%s1798]
  %vm1800 = vcmask 1045508
  %v1801 = vsel %vm1800, %v1799, %v1796
  %s1802 = scalar_lea.vmem %s0, 903
  %s1803 = smov 192
  %v1804 = vld [vmem:[%s1802] ss:$16 sm:%s1803]
  %vm1805 = vcmask 1047558
  %v1806 = vsel %vm1805, %v1804, %v1801
  %1807 = vrot.lane.b32.xlu0 %v1806, 28
  %v1808 = vpop.permute.xlu0 %1807
  %vm1809 = vcmask 261344
  %s1810 = scalar_lea.vmem %s1, 56
  %1811 = vst.msk [vmem:[%s1810] sm:$0xff] %vm1809, %v1808
  %s1812 = scalar_lea.vmem %s0, 6
  %s1813 = smov 3
  %v1814 = vld [vmem:[%s1812] ss:$16 sm:%s1813]
  %s1815 = scalar_lea.vmem %s0, 6
  %s1816 = smov 12
  %v1817 = vld [vmem:[%s1815] ss:$16 sm:%s1816]
  %vm1818 = vcmask 1043458
  %v1819 = vsel %vm1818, %v1817, %v1814
  %s1820 = scalar_lea.vmem %s0, 6
  %s1821 = smov 48
  %v1822 = vld [vmem:[%s1820] ss:$16 sm:%s1821]
  %vm1823 = vcmask 1045508
  %v1824 = vsel %vm1823, %v1822, %v1819
  %s1825 = scalar_lea.vmem %s0, 6
  %s1826 = smov 192
  %v1827 = vld [vmem:[%s1825] ss:$16 sm:%s1826]
  %vm1828 = vcmask 1047558
  %v1829 = vsel %vm1828, %v1827, %v1824
  %1830 = vrot.lane.b32.xlu0 %v1829, 24
  %v1831 = vpop.permute.xlu0 %1830
  %vm1832 = vcmask 228544
  %1833 = vst.msk [vmem:[%s1] sm:$0xff] %vm1832, %v1831
  %s1834 = scalar_lea.vmem %s0, 518
  %s1835 = smov 3
  %v1836 = vld [vmem:[%s1834] ss:$16 sm:%s1835]
  %s1837 = scalar_lea.vmem %s0, 518
  %s1838 = smov 12
  %v1839 = vld [vmem:[%s1837] ss:$16 sm:%s1838]
  %vm1840 = vcmask 1043458
  %v1841 = vsel %vm1840, %v1839, %v1836
  %s1842 = scalar_lea.vmem %s0, 518
  %s1843 = smov 48
  %v1844 = vld [vmem:[%s1842] ss:$16 sm:%s1843]
  %vm1845 = vcmask 1045508
  %v1846 = vsel %vm1845, %v1844, %v1841
  %s1847 = scalar_lea.vmem %s0, 518
  %s1848 = smov 192
  %v1849 = vld [vmem:[%s1847] ss:$16 sm:%s1848]
  %vm1850 = vcmask 1047558
  %v1851 = vsel %vm1850, %v1849, %v1846
  %1852 = vrot.lane.b32.xlu0 %v1851, 24
  %v1853 = vpop.permute.xlu0 %1852
  %vm1854 = vcmask 228544
  %s1855 = scalar_lea.vmem %s1, 32
  %1856 = vst.msk [vmem:[%s1855] sm:$0xff] %vm1854, %v1853
  %s1857 = scalar_lea.vmem %s0, 134
  %s1858 = smov 3
  %v1859 = vld [vmem:[%s1857] ss:$16 sm:%s1858]
  %s1860 = scalar_lea.vmem %s0, 134
  %s1861 = smov 12
  %v1862 = vld [vmem:[%s1860] ss:$16 sm:%s1861]
  %vm1863 = vcmask 1043458
  %v1864 = vsel %vm1863, %v1862, %v1859
  %s1865 = scalar_lea.vmem %s0, 134
  %s1866 = smov 48
  %v1867 = vld [vmem:[%s1865] ss:$16 sm:%s1866]
  %vm1868 = vcmask 1045508
  %v1869 = vsel %vm1868, %v1867, %v1864
  %s1870 = scalar_lea.vmem %s0, 134
  %s1871 = smov 192
  %v1872 = vld [vmem:[%s1870] ss:$16 sm:%s1871]
  %vm1873 = vcmask 1047558
  %v1874 = vsel %vm1873, %v1872, %v1869
  %1875 = vrot.lane.b32.xlu0 %v1874, 24
  %v1876 = vpop.permute.xlu0 %1875
  %vm1877 = vcmask 228544
  %s1878 = scalar_lea.vmem %s1, 8
  %1879 = vst.msk [vmem:[%s1878] sm:$0xff] %vm1877, %v1876
  %s1880 = scalar_lea.vmem %s0, 646
  %s1881 = smov 3
  %v1882 = vld [vmem:[%s1880] ss:$16 sm:%s1881]
  %s1883 = scalar_lea.vmem %s0, 646
  %s1884 = smov 12
  %v1885 = vld [vmem:[%s1883] ss:$16 sm:%s1884]
  %vm1886 = vcmask 1043458
  %v1887 = vsel %vm1886, %v1885, %v1882
  %s1888 = scalar_lea.vmem %s0, 646
  %s1889 = smov 48
  %v1890 = vld [vmem:[%s1888] ss:$16 sm:%s1889]
  %vm1891 = vcmask 1045508
  %v1892 = vsel %vm1891, %v1890, %v1887
  %s1893 = scalar_lea.vmem %s0, 646
  %s1894 = smov 192
  %v1895 = vld [vmem:[%s1893] ss:$16 sm:%s1894]
  %vm1896 = vcmask 1047558
  %v1897 = vsel %vm1896, %v1895, %v1892
  %1898 = vrot.lane.b32.xlu0 %v1897, 24
  %v1899 = vpop.permute.xlu0 %1898
  %vm1900 = vcmask 228544
  %s1901 = scalar_lea.vmem %s1, 40
  %1902 = vst.msk [vmem:[%s1901] sm:$0xff] %vm1900, %v1899
  %s1903 = scalar_lea.vmem %s0, 262
  %s1904 = smov 3
  %v1905 = vld [vmem:[%s1903] ss:$16 sm:%s1904]
  %s1906 = scalar_lea.vmem %s0, 262
  %s1907 = smov 12
  %v1908 = vld [vmem:[%s1906] ss:$16 sm:%s1907]
  %vm1909 = vcmask 1043458
  %v1910 = vsel %vm1909, %v1908, %v1905
  %s1911 = scalar_lea.vmem %s0, 262
  %s1912 = smov 48
  %v1913 = vld [vmem:[%s1911] ss:$16 sm:%s1912]
  %vm1914 = vcmask 1045508
  %v1915 = vsel %vm1914, %v1913, %v1910
  %s1916 = scalar_lea.vmem %s0, 262
  %s1917 = smov 192
  %v1918 = vld [vmem:[%s1916] ss:$16 sm:%s1917]
  %vm1919 = vcmask 1047558
  %v1920 = vsel %vm1919, %v1918, %v1915
  %1921 = vrot.lane.b32.xlu0 %v1920, 24
  %v1922 = vpop.permute.xlu0 %1921
  %vm1923 = vcmask 228544
  %s1924 = scalar_lea.vmem %s1, 16
  %1925 = vst.msk [vmem:[%s1924] sm:$0xff] %vm1923, %v1922
  %s1926 = scalar_lea.vmem %s0, 774
  %s1927 = smov 3
  %v1928 = vld [vmem:[%s1926] ss:$16 sm:%s1927]
  %s1929 = scalar_lea.vmem %s0, 774
  %s1930 = smov 12
  %v1931 = vld [vmem:[%s1929] ss:$16 sm:%s1930]
  %vm1932 = vcmask 1043458
  %v1933 = vsel %vm1932, %v1931, %v1928
  %s1934 = scalar_lea.vmem %s0, 774
  %s1935 = smov 48
  %v1936 = vld [vmem:[%s1934] ss:$16 sm:%s1935]
  %vm1937 = vcmask 1045508
  %v1938 = vsel %vm1937, %v1936, %v1933
  %s1939 = scalar_lea.vmem %s0, 774
  %s1940 = smov 192
  %v1941 = vld [vmem:[%s1939] ss:$16 sm:%s1940]
  %vm1942 = vcmask 1047558
  %v1943 = vsel %vm1942, %v1941, %v1938
  %1944 = vrot.lane.b32.xlu0 %v1943, 24
  %v1945 = vpop.permute.xlu0 %1944
  %vm1946 = vcmask 228544
  %s1947 = scalar_lea.vmem %s1, 48
  %1948 = vst.msk [vmem:[%s1947] sm:$0xff] %vm1946, %v1945
  %s1949 = scalar_lea.vmem %s0, 390
  %s1950 = smov 3
  %v1951 = vld [vmem:[%s1949] ss:$16 sm:%s1950]
  %s1952 = scalar_lea.vmem %s0, 390
  %s1953 = smov 12
  %v1954 = vld [vmem:[%s1952] ss:$16 sm:%s1953]
  %vm1955 = vcmask 1043458
  %v1956 = vsel %vm1955, %v1954, %v1951
  %s1957 = scalar_lea.vmem %s0, 390
  %s1958 = smov 48
  %v1959 = vld [vmem:[%s1957] ss:$16 sm:%s1958]
  %vm1960 = vcmask 1045508
  %v1961 = vsel %vm1960, %v1959, %v1956
  %s1962 = scalar_lea.vmem %s0, 390
  %s1963 = smov 192
  %v1964 = vld [vmem:[%s1962] ss:$16 sm:%s1963]
  %vm1965 = vcmask 1047558
  %v1966 = vsel %vm1965, %v1964, %v1961
  %1967 = vrot.lane.b32.xlu0 %v1966, 24
  %v1968 = vpop.permute.xlu0 %1967
  %vm1969 = vcmask 228544
  %s1970 = scalar_lea.vmem %s1, 24
  %1971 = vst.msk [vmem:[%s1970] sm:$0xff] %vm1969, %v1968
  %s1972 = scalar_lea.vmem %s0, 902
  %s1973 = smov 3
  %v1974 = vld [vmem:[%s1972] ss:$16 sm:%s1973]
  %s1975 = scalar_lea.vmem %s0, 902
  %s1976 = smov 12
  %v1977 = vld [vmem:[%s1975] ss:$16 sm:%s1976]
  %vm1978 = vcmask 1043458
  %v1979 = vsel %vm1978, %v1977, %v1974
  %s1980 = scalar_lea.vmem %s0, 902
  %s1981 = smov 48
  %v1982 = vld [vmem:[%s1980] ss:$16 sm:%s1981]
  %vm1983 = vcmask 1045508
  %v1984 = vsel %vm1983, %v1982, %v1979
  %s1985 = scalar_lea.vmem %s0, 902
  %s1986 = smov 192
  %v1987 = vld [vmem:[%s1985] ss:$16 sm:%s1986]
  %vm1988 = vcmask 1047558
  %v1989 = vsel %vm1988, %v1987, %v1984
  %1990 = vrot.lane.b32.xlu0 %v1989, 24
  %v1991 = vpop.permute.xlu0 %1990
  %vm1992 = vcmask 228544
  %s1993 = scalar_lea.vmem %s1, 56
  %1994 = vst.msk [vmem:[%s1993] sm:$0xff] %vm1992, %v1991
  %s1995 = scalar_lea.vmem %s0, 5
  %s1996 = smov 3
  %v1997 = vld [vmem:[%s1995] ss:$16 sm:%s1996]
  %s1998 = scalar_lea.vmem %s0, 5
  %s1999 = smov 12
  %v2000 = vld [vmem:[%s1998] ss:$16 sm:%s1999]
  %vm2001 = vcmask 1043458
  %v2002 = vsel %vm2001, %v2000, %v1997
  %s2003 = scalar_lea.vmem %s0, 5
  %s2004 = smov 48
  %v2005 = vld [vmem:[%s2003] ss:$16 sm:%s2004]
  %vm2006 = vcmask 1045508
  %v2007 = vsel %vm2006, %v2005, %v2002
  %s2008 = scalar_lea.vmem %s0, 5
  %s2009 = smov 192
  %v2010 = vld [vmem:[%s2008] ss:$16 sm:%s2009]
  %vm2011 = vcmask 1047558
  %v2012 = vsel %vm2011, %v2010, %v2007
  %2013 = vrot.lane.b32.xlu0 %v2012, 20
  %v2014 = vpop.permute.xlu0 %2013
  %vm2015 = vcmask 195744
  %2016 = vst.msk [vmem:[%s1] sm:$0xff] %vm2015, %v2014
  %s2017 = scalar_lea.vmem %s0, 517
  %s2018 = smov 3
  %v2019 = vld [vmem:[%s2017] ss:$16 sm:%s2018]
  %s2020 = scalar_lea.vmem %s0, 517
  %s2021 = smov 12
  %v2022 = vld [vmem:[%s2020] ss:$16 sm:%s2021]
  %vm2023 = vcmask 1043458
  %v2024 = vsel %vm2023, %v2022, %v2019
  %s2025 = scalar_lea.vmem %s0, 517
  %s2026 = smov 48
  %v2027 = vld [vmem:[%s2025] ss:$16 sm:%s2026]
  %vm2028 = vcmask 1045508
  %v2029 = vsel %vm2028, %v2027, %v2024
  %s2030 = scalar_lea.vmem %s0, 517
  %s2031 = smov 192
  %v2032 = vld [vmem:[%s2030] ss:$16 sm:%s2031]
  %vm2033 = vcmask 1047558
  %v2034 = vsel %vm2033, %v2032, %v2029
  %2035 = vrot.lane.b32.xlu0 %v2034, 20
  %v2036 = vpop.permute.xlu0 %2035
  %vm2037 = vcmask 195744
  %s2038 = scalar_lea.vmem %s1, 32
  %2039 = vst.msk [vmem:[%s2038] sm:$0xff] %vm2037, %v2036
  %s2040 = scalar_lea.vmem %s0, 133
  %s2041 = smov 3
  %v2042 = vld [vmem:[%s2040] ss:$16 sm:%s2041]
  %s2043 = scalar_lea.vmem %s0, 133
  %s2044 = smov 12
  %v2045 = vld [vmem:[%s2043] ss:$16 sm:%s2044]
  %vm2046 = vcmask 1043458
  %v2047 = vsel %vm2046, %v2045, %v2042
  %s2048 = scalar_lea.vmem %s0, 133
  %s2049 = smov 48
  %v2050 = vld [vmem:[%s2048] ss:$16 sm:%s2049]
  %vm2051 = vcmask 1045508
  %v2052 = vsel %vm2051, %v2050, %v2047
  %s2053 = scalar_lea.vmem %s0, 133
  %s2054 = smov 192
  %v2055 = vld [vmem:[%s2053] ss:$16 sm:%s2054]
  %vm2056 = vcmask 1047558
  %v2057 = vsel %vm2056, %v2055, %v2052
  %2058 = vrot.lane.b32.xlu0 %v2057, 20
  %v2059 = vpop.permute.xlu0 %2058
  %vm2060 = vcmask 195744
  %s2061 = scalar_lea.vmem %s1, 8
  %2062 = vst.msk [vmem:[%s2061] sm:$0xff] %vm2060, %v2059
  %s2063 = scalar_lea.vmem %s0, 645
  %s2064 = smov 3
  %v2065 = vld [vmem:[%s2063] ss:$16 sm:%s2064]
  %s2066 = scalar_lea.vmem %s0, 645
  %s2067 = smov 12
  %v2068 = vld [vmem:[%s2066] ss:$16 sm:%s2067]
  %vm2069 = vcmask 1043458
  %v2070 = vsel %vm2069, %v2068, %v2065
  %s2071 = scalar_lea.vmem %s0, 645
  %s2072 = smov 48
  %v2073 = vld [vmem:[%s2071] ss:$16 sm:%s2072]
  %vm2074 = vcmask 1045508
  %v2075 = vsel %vm2074, %v2073, %v2070
  %s2076 = scalar_lea.vmem %s0, 645
  %s2077 = smov 192
  %v2078 = vld [vmem:[%s2076] ss:$16 sm:%s2077]
  %vm2079 = vcmask 1047558
  %v2080 = vsel %vm2079, %v2078, %v2075
  %2081 = vrot.lane.b32.xlu0 %v2080, 20
  %v2082 = vpop.permute.xlu0 %2081
  %vm2083 = vcmask 195744
  %s2084 = scalar_lea.vmem %s1, 40
  %2085 = vst.msk [vmem:[%s2084] sm:$0xff] %vm2083, %v2082
  %s2086 = scalar_lea.vmem %s0, 261
  %s2087 = smov 3
  %v2088 = vld [vmem:[%s2086] ss:$16 sm:%s2087]
  %s2089 = scalar_lea.vmem %s0, 261
  %s2090 = smov 12
  %v2091 = vld [vmem:[%s2089] ss:$16 sm:%s2090]
  %vm2092 = vcmask 1043458
  %v2093 = vsel %vm2092, %v2091, %v2088
  %s2094 = scalar_lea.vmem %s0, 261
  %s2095 = smov 48
  %v2096 = vld [vmem:[%s2094] ss:$16 sm:%s2095]
  %vm2097 = vcmask 1045508
  %v2098 = vsel %vm2097, %v2096, %v2093
  %s2099 = scalar_lea.vmem %s0, 261
  %s2100 = smov 192
  %v2101 = vld [vmem:[%s2099] ss:$16 sm:%s2100]
  %vm2102 = vcmask 1047558
  %v2103 = vsel %vm2102, %v2101, %v2098
  %2104 = vrot.lane.b32.xlu0 %v2103, 20
  %v2105 = vpop.permute.xlu0 %2104
  %vm2106 = vcmask 195744
  %s2107 = scalar_lea.vmem %s1, 16
  %2108 = vst.msk [vmem:[%s2107] sm:$0xff] %vm2106, %v2105
  %s2109 = scalar_lea.vmem %s0, 773
  %s2110 = smov 3
  %v2111 = vld [vmem:[%s2109] ss:$16 sm:%s2110]
  %s2112 = scalar_lea.vmem %s0, 773
  %s2113 = smov 12
  %v2114 = vld [vmem:[%s2112] ss:$16 sm:%s2113]
  %vm2115 = vcmask 1043458
  %v2116 = vsel %vm2115, %v2114, %v2111
  %s2117 = scalar_lea.vmem %s0, 773
  %s2118 = smov 48
  %v2119 = vld [vmem:[%s2117] ss:$16 sm:%s2118]
  %vm2120 = vcmask 1045508
  %v2121 = vsel %vm2120, %v2119, %v2116
  %s2122 = scalar_lea.vmem %s0, 773
  %s2123 = smov 192
  %v2124 = vld [vmem:[%s2122] ss:$16 sm:%s2123]
  %vm2125 = vcmask 1047558
  %v2126 = vsel %vm2125, %v2124, %v2121
  %2127 = vrot.lane.b32.xlu0 %v2126, 20
  %v2128 = vpop.permute.xlu0 %2127
  %vm2129 = vcmask 195744
  %s2130 = scalar_lea.vmem %s1, 48
  %2131 = vst.msk [vmem:[%s2130] sm:$0xff] %vm2129, %v2128
  %s2132 = scalar_lea.vmem %s0, 389
  %s2133 = smov 3
  %v2134 = vld [vmem:[%s2132] ss:$16 sm:%s2133]
  %s2135 = scalar_lea.vmem %s0, 389
  %s2136 = smov 12
  %v2137 = vld [vmem:[%s2135] ss:$16 sm:%s2136]
  %vm2138 = vcmask 1043458
  %v2139 = vsel %vm2138, %v2137, %v2134
  %s2140 = scalar_lea.vmem %s0, 389
  %s2141 = smov 48
  %v2142 = vld [vmem:[%s2140] ss:$16 sm:%s2141]
  %vm2143 = vcmask 1045508
  %v2144 = vsel %vm2143, %v2142, %v2139
  %s2145 = scalar_lea.vmem %s0, 389
  %s2146 = smov 192
  %v2147 = vld [vmem:[%s2145] ss:$16 sm:%s2146]
  %vm2148 = vcmask 1047558
  %v2149 = vsel %vm2148, %v2147, %v2144
  %2150 = vrot.lane.b32.xlu0 %v2149, 20
  %v2151 = vpop.permute.xlu0 %2150
  %vm2152 = vcmask 195744
  %s2153 = scalar_lea.vmem %s1, 24
  %2154 = vst.msk [vmem:[%s2153] sm:$0xff] %vm2152, %v2151
  %s2155 = scalar_lea.vmem %s0, 901
  %s2156 = smov 3
  %v2157 = vld [vmem:[%s2155] ss:$16 sm:%s2156]
  %s2158 = scalar_lea.vmem %s0, 901
  %s2159 = smov 12
  %v2160 = vld [vmem:[%s2158] ss:$16 sm:%s2159]
  %vm2161 = vcmask 1043458
  %v2162 = vsel %vm2161, %v2160, %v2157
  %s2163 = scalar_lea.vmem %s0, 901
  %s2164 = smov 48
  %v2165 = vld [vmem:[%s2163] ss:$16 sm:%s2164]
  %vm2166 = vcmask 1045508
  %v2167 = vsel %vm2166, %v2165, %v2162
  %s2168 = scalar_lea.vmem %s0, 901
  %s2169 = smov 192
  %v2170 = vld [vmem:[%s2168] ss:$16 sm:%s2169]
  %vm2171 = vcmask 1047558
  %v2172 = vsel %vm2171, %v2170, %v2167
  %2173 = vrot.lane.b32.xlu0 %v2172, 20
  %v2174 = vpop.permute.xlu0 %2173
  %vm2175 = vcmask 195744
  %s2176 = scalar_lea.vmem %s1, 56
  %2177 = vst.msk [vmem:[%s2176] sm:$0xff] %vm2175, %v2174
  %s2178 = scalar_lea.vmem %s0, 4
  %s2179 = smov 3
  %v2180 = vld [vmem:[%s2178] ss:$16 sm:%s2179]
  %s2181 = scalar_lea.vmem %s0, 4
  %s2182 = smov 12
  %v2183 = vld [vmem:[%s2181] ss:$16 sm:%s2182]
  %vm2184 = vcmask 1043458
  %v2185 = vsel %vm2184, %v2183, %v2180
  %s2186 = scalar_lea.vmem %s0, 4
  %s2187 = smov 48
  %v2188 = vld [vmem:[%s2186] ss:$16 sm:%s2187]
  %vm2189 = vcmask 1045508
  %v2190 = vsel %vm2189, %v2188, %v2185
  %s2191 = scalar_lea.vmem %s0, 4
  %s2192 = smov 192
  %v2193 = vld [vmem:[%s2191] ss:$16 sm:%s2192]
  %vm2194 = vcmask 1047558
  %v2195 = vsel %vm2194, %v2193, %v2190
  %2196 = vrot.lane.b32.xlu0 %v2195, 16
  %v2197 = vpop.permute.xlu0 %2196
  %vm2198 = vcmask 162944
  %2199 = vst.msk [vmem:[%s1] sm:$0xff] %vm2198, %v2197
  %s2200 = scalar_lea.vmem %s0, 516
  %s2201 = smov 3
  %v2202 = vld [vmem:[%s2200] ss:$16 sm:%s2201]
  %s2203 = scalar_lea.vmem %s0, 516
  %s2204 = smov 12
  %v2205 = vld [vmem:[%s2203] ss:$16 sm:%s2204]
  %vm2206 = vcmask 1043458
  %v2207 = vsel %vm2206, %v2205, %v2202
  %s2208 = scalar_lea.vmem %s0, 516
  %s2209 = smov 48
  %v2210 = vld [vmem:[%s2208] ss:$16 sm:%s2209]
  %vm2211 = vcmask 1045508
  %v2212 = vsel %vm2211, %v2210, %v2207
  %s2213 = scalar_lea.vmem %s0, 516
  %s2214 = smov 192
  %v2215 = vld [vmem:[%s2213] ss:$16 sm:%s2214]
  %vm2216 = vcmask 1047558
  %v2217 = vsel %vm2216, %v2215, %v2212
  %2218 = vrot.lane.b32.xlu0 %v2217, 16
  %v2219 = vpop.permute.xlu0 %2218
  %vm2220 = vcmask 162944
  %s2221 = scalar_lea.vmem %s1, 32
  %2222 = vst.msk [vmem:[%s2221] sm:$0xff] %vm2220, %v2219
  %s2223 = scalar_lea.vmem %s0, 132
  %s2224 = smov 3
  %v2225 = vld [vmem:[%s2223] ss:$16 sm:%s2224]
  %s2226 = scalar_lea.vmem %s0, 132
  %s2227 = smov 12
  %v2228 = vld [vmem:[%s2226] ss:$16 sm:%s2227]
  %vm2229 = vcmask 1043458
  %v2230 = vsel %vm2229, %v2228, %v2225
  %s2231 = scalar_lea.vmem %s0, 132
  %s2232 = smov 48
  %v2233 = vld [vmem:[%s2231] ss:$16 sm:%s2232]
  %vm2234 = vcmask 1045508
  %v2235 = vsel %vm2234, %v2233, %v2230
  %s2236 = scalar_lea.vmem %s0, 132
  %s2237 = smov 192
  %v2238 = vld [vmem:[%s2236] ss:$16 sm:%s2237]
  %vm2239 = vcmask 1047558
  %v2240 = vsel %vm2239, %v2238, %v2235
  %2241 = vrot.lane.b32.xlu0 %v2240, 16
  %v2242 = vpop.permute.xlu0 %2241
  %vm2243 = vcmask 162944
  %s2244 = scalar_lea.vmem %s1, 8
  %2245 = vst.msk [vmem:[%s2244] sm:$0xff] %vm2243, %v2242
  %s2246 = scalar_lea.vmem %s0, 644
  %s2247 = smov 3
  %v2248 = vld [vmem:[%s2246] ss:$16 sm:%s2247]
  %s2249 = scalar_lea.vmem %s0, 644
  %s2250 = smov 12
  %v2251 = vld [vmem:[%s2249] ss:$16 sm:%s2250]
  %vm2252 = vcmask 1043458
  %v2253 = vsel %vm2252, %v2251, %v2248
  %s2254 = scalar_lea.vmem %s0, 644
  %s2255 = smov 48
  %v2256 = vld [vmem:[%s2254] ss:$16 sm:%s2255]
  %vm2257 = vcmask 1045508
  %v2258 = vsel %vm2257, %v2256, %v2253
  %s2259 = scalar_lea.vmem %s0, 644
  %s2260 = smov 192
  %v2261 = vld [vmem:[%s2259] ss:$16 sm:%s2260]
  %vm2262 = vcmask 1047558
  %v2263 = vsel %vm2262, %v2261, %v2258
  %2264 = vrot.lane.b32.xlu0 %v2263, 16
  %v2265 = vpop.permute.xlu0 %2264
  %vm2266 = vcmask 162944
  %s2267 = scalar_lea.vmem %s1, 40
  %2268 = vst.msk [vmem:[%s2267] sm:$0xff] %vm2266, %v2265
  %s2269 = scalar_lea.vmem %s0, 260
  %s2270 = smov 3
  %v2271 = vld [vmem:[%s2269] ss:$16 sm:%s2270]
  %s2272 = scalar_lea.vmem %s0, 260
  %s2273 = smov 12
  %v2274 = vld [vmem:[%s2272] ss:$16 sm:%s2273]
  %vm2275 = vcmask 1043458
  %v2276 = vsel %vm2275, %v2274, %v2271
  %s2277 = scalar_lea.vmem %s0, 260
  %s2278 = smov 48
  %v2279 = vld [vmem:[%s2277] ss:$16 sm:%s2278]
  %vm2280 = vcmask 1045508
  %v2281 = vsel %vm2280, %v2279, %v2276
  %s2282 = scalar_lea.vmem %s0, 260
  %s2283 = smov 192
  %v2284 = vld [vmem:[%s2282] ss:$16 sm:%s2283]
  %vm2285 = vcmask 1047558
  %v2286 = vsel %vm2285, %v2284, %v2281
  %2287 = vrot.lane.b32.xlu0 %v2286, 16
  %v2288 = vpop.permute.xlu0 %2287
  %vm2289 = vcmask 162944
  %s2290 = scalar_lea.vmem %s1, 16
  %2291 = vst.msk [vmem:[%s2290] sm:$0xff] %vm2289, %v2288
  %s2292 = scalar_lea.vmem %s0, 772
  %s2293 = smov 3
  %v2294 = vld [vmem:[%s2292] ss:$16 sm:%s2293]
  %s2295 = scalar_lea.vmem %s0, 772
  %s2296 = smov 12
  %v2297 = vld [vmem:[%s2295] ss:$16 sm:%s2296]
  %vm2298 = vcmask 1043458
  %v2299 = vsel %vm2298, %v2297, %v2294
  %s2300 = scalar_lea.vmem %s0, 772
  %s2301 = smov 48
  %v2302 = vld [vmem:[%s2300] ss:$16 sm:%s2301]
  %vm2303 = vcmask 1045508
  %v2304 = vsel %vm2303, %v2302, %v2299
  %s2305 = scalar_lea.vmem %s0, 772
  %s2306 = smov 192
  %v2307 = vld [vmem:[%s2305] ss:$16 sm:%s2306]
  %vm2308 = vcmask 1047558
  %v2309 = vsel %vm2308, %v2307, %v2304
  %2310 = vrot.lane.b32.xlu0 %v2309, 16
  %v2311 = vpop.permute.xlu0 %2310
  %vm2312 = vcmask 162944
  %s2313 = scalar_lea.vmem %s1, 48
  %2314 = vst.msk [vmem:[%s2313] sm:$0xff] %vm2312, %v2311
  %s2315 = scalar_lea.vmem %s0, 388
  %s2316 = smov 3
  %v2317 = vld [vmem:[%s2315] ss:$16 sm:%s2316]
  %s2318 = scalar_lea.vmem %s0, 388
  %s2319 = smov 12
  %v2320 = vld [vmem:[%s2318] ss:$16 sm:%s2319]
  %vm2321 = vcmask 1043458
  %v2322 = vsel %vm2321, %v2320, %v2317
  %s2323 = scalar_lea.vmem %s0, 388
  %s2324 = smov 48
  %v2325 = vld [vmem:[%s2323] ss:$16 sm:%s2324]
  %vm2326 = vcmask 1045508
  %v2327 = vsel %vm2326, %v2325, %v2322
  %s2328 = scalar_lea.vmem %s0, 388
  %s2329 = smov 192
  %v2330 = vld [vmem:[%s2328] ss:$16 sm:%s2329]
  %vm2331 = vcmask 1047558
  %v2332 = vsel %vm2331, %v2330, %v2327
  %2333 = vrot.lane.b32.xlu0 %v2332, 16
  %v2334 = vpop.permute.xlu0 %2333
  %vm2335 = vcmask 162944
  %s2336 = scalar_lea.vmem %s1, 24
  %2337 = vst.msk [vmem:[%s2336] sm:$0xff] %vm2335, %v2334
  %s2338 = scalar_lea.vmem %s0, 900
  %s2339 = smov 3
  %v2340 = vld [vmem:[%s2338] ss:$16 sm:%s2339]
  %s2341 = scalar_lea.vmem %s0, 900
  %s2342 = smov 12
  %v2343 = vld [vmem:[%s2341] ss:$16 sm:%s2342]
  %vm2344 = vcmask 1043458
  %v2345 = vsel %vm2344, %v2343, %v2340
  %s2346 = scalar_lea.vmem %s0, 900
  %s2347 = smov 48
  %v2348 = vld [vmem:[%s2346] ss:$16 sm:%s2347]
  %vm2349 = vcmask 1045508
  %v2350 = vsel %vm2349, %v2348, %v2345
  %s2351 = scalar_lea.vmem %s0, 900
  %s2352 = smov 192
  %v2353 = vld [vmem:[%s2351] ss:$16 sm:%s2352]
  %vm2354 = vcmask 1047558
  %v2355 = vsel %vm2354, %v2353, %v2350
  %2356 = vrot.lane.b32.xlu0 %v2355, 16
  %v2357 = vpop.permute.xlu0 %2356
  %vm2358 = vcmask 162944
  %s2359 = scalar_lea.vmem %s1, 56
  %2360 = vst.msk [vmem:[%s2359] sm:$0xff] %vm2358, %v2357
  %s2361 = scalar_lea.vmem %s0, 3
  %s2362 = smov 3
  %v2363 = vld [vmem:[%s2361] ss:$16 sm:%s2362]
  %s2364 = scalar_lea.vmem %s0, 3
  %s2365 = smov 12
  %v2366 = vld [vmem:[%s2364] ss:$16 sm:%s2365]
  %vm2367 = vcmask 1043458
  %v2368 = vsel %vm2367, %v2366, %v2363
  %s2369 = scalar_lea.vmem %s0, 3
  %s2370 = smov 48
  %v2371 = vld [vmem:[%s2369] ss:$16 sm:%s2370]
  %vm2372 = vcmask 1045508
  %v2373 = vsel %vm2372, %v2371, %v2368
  %s2374 = scalar_lea.vmem %s0, 3
  %s2375 = smov 192
  %v2376 = vld [vmem:[%s2374] ss:$16 sm:%s2375]
  %vm2377 = vcmask 1047558
  %v2378 = vsel %vm2377, %v2376, %v2373
  %2379 = vrot.lane.b32.xlu0 %v2378, 12
  %v2380 = vpop.permute.xlu0 %2379
  %vm2381 = vcmask 130144
  %2382 = vst.msk [vmem:[%s1] sm:$0xff] %vm2381, %v2380
  %s2383 = scalar_lea.vmem %s0, 515
  %s2384 = smov 3
  %v2385 = vld [vmem:[%s2383] ss:$16 sm:%s2384]
  %s2386 = scalar_lea.vmem %s0, 515
  %s2387 = smov 12
  %v2388 = vld [vmem:[%s2386] ss:$16 sm:%s2387]
  %vm2389 = vcmask 1043458
  %v2390 = vsel %vm2389, %v2388, %v2385
  %s2391 = scalar_lea.vmem %s0, 515
  %s2392 = smov 48
  %v2393 = vld [vmem:[%s2391] ss:$16 sm:%s2392]
  %vm2394 = vcmask 1045508
  %v2395 = vsel %vm2394, %v2393, %v2390
  %s2396 = scalar_lea.vmem %s0, 515
  %s2397 = smov 192
  %v2398 = vld [vmem:[%s2396] ss:$16 sm:%s2397]
  %vm2399 = vcmask 1047558
  %v2400 = vsel %vm2399, %v2398, %v2395
  %2401 = vrot.lane.b32.xlu0 %v2400, 12
  %v2402 = vpop.permute.xlu0 %2401
  %vm2403 = vcmask 130144
  %s2404 = scalar_lea.vmem %s1, 32
  %2405 = vst.msk [vmem:[%s2404] sm:$0xff] %vm2403, %v2402
  %s2406 = scalar_lea.vmem %s0, 131
  %s2407 = smov 3
  %v2408 = vld [vmem:[%s2406] ss:$16 sm:%s2407]
  %s2409 = scalar_lea.vmem %s0, 131
  %s2410 = smov 12
  %v2411 = vld [vmem:[%s2409] ss:$16 sm:%s2410]
  %vm2412 = vcmask 1043458
  %v2413 = vsel %vm2412, %v2411, %v2408
  %s2414 = scalar_lea.vmem %s0, 131
  %s2415 = smov 48
  %v2416 = vld [vmem:[%s2414] ss:$16 sm:%s2415]
  %vm2417 = vcmask 1045508
  %v2418 = vsel %vm2417, %v2416, %v2413
  %s2419 = scalar_lea.vmem %s0, 131
  %s2420 = smov 192
  %v2421 = vld [vmem:[%s2419] ss:$16 sm:%s2420]
  %vm2422 = vcmask 1047558
  %v2423 = vsel %vm2422, %v2421, %v2418
  %2424 = vrot.lane.b32.xlu0 %v2423, 12
  %v2425 = vpop.permute.xlu0 %2424
  %vm2426 = vcmask 130144
  %s2427 = scalar_lea.vmem %s1, 8
  %2428 = vst.msk [vmem:[%s2427] sm:$0xff] %vm2426, %v2425
  %s2429 = scalar_lea.vmem %s0, 643
  %s2430 = smov 3
  %v2431 = vld [vmem:[%s2429] ss:$16 sm:%s2430]
  %s2432 = scalar_lea.vmem %s0, 643
  %s2433 = smov 12
  %v2434 = vld [vmem:[%s2432] ss:$16 sm:%s2433]
  %vm2435 = vcmask 1043458
  %v2436 = vsel %vm2435, %v2434, %v2431
  %s2437 = scalar_lea.vmem %s0, 643
  %s2438 = smov 48
  %v2439 = vld [vmem:[%s2437] ss:$16 sm:%s2438]
  %vm2440 = vcmask 1045508
  %v2441 = vsel %vm2440, %v2439, %v2436
  %s2442 = scalar_lea.vmem %s0, 643
  %s2443 = smov 192
  %v2444 = vld [vmem:[%s2442] ss:$16 sm:%s2443]
  %vm2445 = vcmask 1047558
  %v2446 = vsel %vm2445, %v2444, %v2441
  %2447 = vrot.lane.b32.xlu0 %v2446, 12
  %v2448 = vpop.permute.xlu0 %2447
  %vm2449 = vcmask 130144
  %s2450 = scalar_lea.vmem %s1, 40
  %2451 = vst.msk [vmem:[%s2450] sm:$0xff] %vm2449, %v2448
  %s2452 = scalar_lea.vmem %s0, 259
  %s2453 = smov 3
  %v2454 = vld [vmem:[%s2452] ss:$16 sm:%s2453]
  %s2455 = scalar_lea.vmem %s0, 259
  %s2456 = smov 12
  %v2457 = vld [vmem:[%s2455] ss:$16 sm:%s2456]
  %vm2458 = vcmask 1043458
  %v2459 = vsel %vm2458, %v2457, %v2454
  %s2460 = scalar_lea.vmem %s0, 259
  %s2461 = smov 48
  %v2462 = vld [vmem:[%s2460] ss:$16 sm:%s2461]
  %vm2463 = vcmask 1045508
  %v2464 = vsel %vm2463, %v2462, %v2459
  %s2465 = scalar_lea.vmem %s0, 259
  %s2466 = smov 192
  %v2467 = vld [vmem:[%s2465] ss:$16 sm:%s2466]
  %vm2468 = vcmask 1047558
  %v2469 = vsel %vm2468, %v2467, %v2464
  %2470 = vrot.lane.b32.xlu0 %v2469, 12
  %v2471 = vpop.permute.xlu0 %2470
  %vm2472 = vcmask 130144
  %s2473 = scalar_lea.vmem %s1, 16
  %2474 = vst.msk [vmem:[%s2473] sm:$0xff] %vm2472, %v2471
  %s2475 = scalar_lea.vmem %s0, 771
  %s2476 = smov 3
  %v2477 = vld [vmem:[%s2475] ss:$16 sm:%s2476]
  %s2478 = scalar_lea.vmem %s0, 771
  %s2479 = smov 12
  %v2480 = vld [vmem:[%s2478] ss:$16 sm:%s2479]
  %vm2481 = vcmask 1043458
  %v2482 = vsel %vm2481, %v2480, %v2477
  %s2483 = scalar_lea.vmem %s0, 771
  %s2484 = smov 48
  %v2485 = vld [vmem:[%s2483] ss:$16 sm:%s2484]
  %vm2486 = vcmask 1045508
  %v2487 = vsel %vm2486, %v2485, %v2482
  %s2488 = scalar_lea.vmem %s0, 771
  %s2489 = smov 192
  %v2490 = vld [vmem:[%s2488] ss:$16 sm:%s2489]
  %vm2491 = vcmask 1047558
  %v2492 = vsel %vm2491, %v2490, %v2487
  %2493 = vrot.lane.b32.xlu0 %v2492, 12
  %v2494 = vpop.permute.xlu0 %2493
  %vm2495 = vcmask 130144
  %s2496 = scalar_lea.vmem %s1, 48
  %2497 = vst.msk [vmem:[%s2496] sm:$0xff] %vm2495, %v2494
  %s2498 = scalar_lea.vmem %s0, 387
  %s2499 = smov 3
  %v2500 = vld [vmem:[%s2498] ss:$16 sm:%s2499]
  %s2501 = scalar_lea.vmem %s0, 387
  %s2502 = smov 12
  %v2503 = vld [vmem:[%s2501] ss:$16 sm:%s2502]
  %vm2504 = vcmask 1043458
  %v2505 = vsel %vm2504, %v2503, %v2500
  %s2506 = scalar_lea.vmem %s0, 387
  %s2507 = smov 48
  %v2508 = vld [vmem:[%s2506] ss:$16 sm:%s2507]
  %vm2509 = vcmask 1045508
  %v2510 = vsel %vm2509, %v2508, %v2505
  %s2511 = scalar_lea.vmem %s0, 387
  %s2512 = smov 192
  %v2513 = vld [vmem:[%s2511] ss:$16 sm:%s2512]
  %vm2514 = vcmask 1047558
  %v2515 = vsel %vm2514, %v2513, %v2510
  %2516 = vrot.lane.b32.xlu0 %v2515, 12
  %v2517 = vpop.permute.xlu0 %2516
  %vm2518 = vcmask 130144
  %s2519 = scalar_lea.vmem %s1, 24
  %2520 = vst.msk [vmem:[%s2519] sm:$0xff] %vm2518, %v2517
  %s2521 = scalar_lea.vmem %s0, 899
  %s2522 = smov 3
  %v2523 = vld [vmem:[%s2521] ss:$16 sm:%s2522]
  %s2524 = scalar_lea.vmem %s0, 899
  %s2525 = smov 12
  %v2526 = vld [vmem:[%s2524] ss:$16 sm:%s2525]
  %vm2527 = vcmask 1043458
  %v2528 = vsel %vm2527, %v2526, %v2523
  %s2529 = scalar_lea.vmem %s0, 899
  %s2530 = smov 48
  %v2531 = vld [vmem:[%s2529] ss:$16 sm:%s2530]
  %vm2532 = vcmask 1045508
  %v2533 = vsel %vm2532, %v2531, %v2528
  %s2534 = scalar_lea.vmem %s0, 899
  %s2535 = smov 192
  %v2536 = vld [vmem:[%s2534] ss:$16 sm:%s2535]
  %vm2537 = vcmask 1047558
  %v2538 = vsel %vm2537, %v2536, %v2533
  %2539 = vrot.lane.b32.xlu0 %v2538, 12
  %v2540 = vpop.permute.xlu0 %2539
  %vm2541 = vcmask 130144
  %s2542 = scalar_lea.vmem %s1, 56
  %2543 = vst.msk [vmem:[%s2542] sm:$0xff] %vm2541, %v2540
  %s2544 = scalar_lea.vmem %s0, 2
  %s2545 = smov 3
  %v2546 = vld [vmem:[%s2544] ss:$16 sm:%s2545]
  %s2547 = scalar_lea.vmem %s0, 2
  %s2548 = smov 12
  %v2549 = vld [vmem:[%s2547] ss:$16 sm:%s2548]
  %vm2550 = vcmask 1043458
  %v2551 = vsel %vm2550, %v2549, %v2546
  %s2552 = scalar_lea.vmem %s0, 2
  %s2553 = smov 48
  %v2554 = vld [vmem:[%s2552] ss:$16 sm:%s2553]
  %vm2555 = vcmask 1045508
  %v2556 = vsel %vm2555, %v2554, %v2551
  %s2557 = scalar_lea.vmem %s0, 2
  %s2558 = smov 192
  %v2559 = vld [vmem:[%s2557] ss:$16 sm:%s2558]
  %vm2560 = vcmask 1047558
  %v2561 = vsel %vm2560, %v2559, %v2556
  %2562 = vrot.lane.b32.xlu0 %v2561, 8
  %v2563 = vpop.permute.xlu0 %2562
  %vm2564 = vcmask 97344
  %2565 = vst.msk [vmem:[%s1] sm:$0xff] %vm2564, %v2563
  %s2566 = scalar_lea.vmem %s0, 514
  %s2567 = smov 3
  %v2568 = vld [vmem:[%s2566] ss:$16 sm:%s2567]
  %s2569 = scalar_lea.vmem %s0, 514
  %s2570 = smov 12
  %v2571 = vld [vmem:[%s2569] ss:$16 sm:%s2570]
  %vm2572 = vcmask 1043458
  %v2573 = vsel %vm2572, %v2571, %v2568
  %s2574 = scalar_lea.vmem %s0, 514
  %s2575 = smov 48
  %v2576 = vld [vmem:[%s2574] ss:$16 sm:%s2575]
  %vm2577 = vcmask 1045508
  %v2578 = vsel %vm2577, %v2576, %v2573
  %s2579 = scalar_lea.vmem %s0, 514
  %s2580 = smov 192
  %v2581 = vld [vmem:[%s2579] ss:$16 sm:%s2580]
  %vm2582 = vcmask 1047558
  %v2583 = vsel %vm2582, %v2581, %v2578
  %2584 = vrot.lane.b32.xlu0 %v2583, 8
  %v2585 = vpop.permute.xlu0 %2584
  %vm2586 = vcmask 97344
  %s2587 = scalar_lea.vmem %s1, 32
  %2588 = vst.msk [vmem:[%s2587] sm:$0xff] %vm2586, %v2585
  %s2589 = scalar_lea.vmem %s0, 130
  %s2590 = smov 3
  %v2591 = vld [vmem:[%s2589] ss:$16 sm:%s2590]
  %s2592 = scalar_lea.vmem %s0, 130
  %s2593 = smov 12
  %v2594 = vld [vmem:[%s2592] ss:$16 sm:%s2593]
  %vm2595 = vcmask 1043458
  %v2596 = vsel %vm2595, %v2594, %v2591
  %s2597 = scalar_lea.vmem %s0, 130
  %s2598 = smov 48
  %v2599 = vld [vmem:[%s2597] ss:$16 sm:%s2598]
  %vm2600 = vcmask 1045508
  %v2601 = vsel %vm2600, %v2599, %v2596
  %s2602 = scalar_lea.vmem %s0, 130
  %s2603 = smov 192
  %v2604 = vld [vmem:[%s2602] ss:$16 sm:%s2603]
  %vm2605 = vcmask 1047558
  %v2606 = vsel %vm2605, %v2604, %v2601
  %2607 = vrot.lane.b32.xlu0 %v2606, 8
  %v2608 = vpop.permute.xlu0 %2607
  %vm2609 = vcmask 97344
  %s2610 = scalar_lea.vmem %s1, 8
  %2611 = vst.msk [vmem:[%s2610] sm:$0xff] %vm2609, %v2608
  %s2612 = scalar_lea.vmem %s0, 642
  %s2613 = smov 3
  %v2614 = vld [vmem:[%s2612] ss:$16 sm:%s2613]
  %s2615 = scalar_lea.vmem %s0, 642
  %s2616 = smov 12
  %v2617 = vld [vmem:[%s2615] ss:$16 sm:%s2616]
  %vm2618 = vcmask 1043458
  %v2619 = vsel %vm2618, %v2617, %v2614
  %s2620 = scalar_lea.vmem %s0, 642
  %s2621 = smov 48
  %v2622 = vld [vmem:[%s2620] ss:$16 sm:%s2621]
  %vm2623 = vcmask 1045508
  %v2624 = vsel %vm2623, %v2622, %v2619
  %s2625 = scalar_lea.vmem %s0, 642
  %s2626 = smov 192
  %v2627 = vld [vmem:[%s2625] ss:$16 sm:%s2626]
  %vm2628 = vcmask 1047558
  %v2629 = vsel %vm2628, %v2627, %v2624
  %2630 = vrot.lane.b32.xlu0 %v2629, 8
  %v2631 = vpop.permute.xlu0 %2630
  %vm2632 = vcmask 97344
  %s2633 = scalar_lea.vmem %s1, 40
  %2634 = vst.msk [vmem:[%s2633] sm:$0xff] %vm2632, %v2631
  %s2635 = scalar_lea.vmem %s0, 258
  %s2636 = smov 3
  %v2637 = vld [vmem:[%s2635] ss:$16 sm:%s2636]
  %s2638 = scalar_lea.vmem %s0, 258
  %s2639 = smov 12
  %v2640 = vld [vmem:[%s2638] ss:$16 sm:%s2639]
  %vm2641 = vcmask 1043458
  %v2642 = vsel %vm2641, %v2640, %v2637
  %s2643 = scalar_lea.vmem %s0, 258
  %s2644 = smov 48
  %v2645 = vld [vmem:[%s2643] ss:$16 sm:%s2644]
  %vm2646 = vcmask 1045508
  %v2647 = vsel %vm2646, %v2645, %v2642
  %s2648 = scalar_lea.vmem %s0, 258
  %s2649 = smov 192
  %v2650 = vld [vmem:[%s2648] ss:$16 sm:%s2649]
  %vm2651 = vcmask 1047558
  %v2652 = vsel %vm2651, %v2650, %v2647
  %2653 = vrot.lane.b32.xlu0 %v2652, 8
  %v2654 = vpop.permute.xlu0 %2653
  %vm2655 = vcmask 97344
  %s2656 = scalar_lea.vmem %s1, 16
  %2657 = vst.msk [vmem:[%s2656] sm:$0xff] %vm2655, %v2654
  %s2658 = scalar_lea.vmem %s0, 770
  %s2659 = smov 3
  %v2660 = vld [vmem:[%s2658] ss:$16 sm:%s2659]
  %s2661 = scalar_lea.vmem %s0, 770
  %s2662 = smov 12
  %v2663 = vld [vmem:[%s2661] ss:$16 sm:%s2662]
  %vm2664 = vcmask 1043458
  %v2665 = vsel %vm2664, %v2663, %v2660
  %s2666 = scalar_lea.vmem %s0, 770
  %s2667 = smov 48
  %v2668 = vld [vmem:[%s2666] ss:$16 sm:%s2667]
  %vm2669 = vcmask 1045508
  %v2670 = vsel %vm2669, %v2668, %v2665
  %s2671 = scalar_lea.vmem %s0, 770
  %s2672 = smov 192
  %v2673 = vld [vmem:[%s2671] ss:$16 sm:%s2672]
  %vm2674 = vcmask 1047558
  %v2675 = vsel %vm2674, %v2673, %v2670
  %2676 = vrot.lane.b32.xlu0 %v2675, 8
  %v2677 = vpop.permute.xlu0 %2676
  %vm2678 = vcmask 97344
  %s2679 = scalar_lea.vmem %s1, 48
  %2680 = vst.msk [vmem:[%s2679] sm:$0xff] %vm2678, %v2677
  %s2681 = scalar_lea.vmem %s0, 386
  %s2682 = smov 3
  %v2683 = vld [vmem:[%s2681] ss:$16 sm:%s2682]
  %s2684 = scalar_lea.vmem %s0, 386
  %s2685 = smov 12
  %v2686 = vld [vmem:[%s2684] ss:$16 sm:%s2685]
  %vm2687 = vcmask 1043458
  %v2688 = vsel %vm2687, %v2686, %v2683
  %s2689 = scalar_lea.vmem %s0, 386
  %s2690 = smov 48
  %v2691 = vld [vmem:[%s2689] ss:$16 sm:%s2690]
  %vm2692 = vcmask 1045508
  %v2693 = vsel %vm2692, %v2691, %v2688
  %s2694 = scalar_lea.vmem %s0, 386
  %s2695 = smov 192
  %v2696 = vld [vmem:[%s2694] ss:$16 sm:%s2695]
  %vm2697 = vcmask 1047558
  %v2698 = vsel %vm2697, %v2696, %v2693
  %2699 = vrot.lane.b32.xlu0 %v2698, 8
  %v2700 = vpop.permute.xlu0 %2699
  %vm2701 = vcmask 97344
  %s2702 = scalar_lea.vmem %s1, 24
  %2703 = vst.msk [vmem:[%s2702] sm:$0xff] %vm2701, %v2700
  %s2704 = scalar_lea.vmem %s0, 898
  %s2705 = smov 3
  %v2706 = vld [vmem:[%s2704] ss:$16 sm:%s2705]
  %s2707 = scalar_lea.vmem %s0, 898
  %s2708 = smov 12
  %v2709 = vld [vmem:[%s2707] ss:$16 sm:%s2708]
  %vm2710 = vcmask 1043458
  %v2711 = vsel %vm2710, %v2709, %v2706
  %s2712 = scalar_lea.vmem %s0, 898
  %s2713 = smov 48
  %v2714 = vld [vmem:[%s2712] ss:$16 sm:%s2713]
  %vm2715 = vcmask 1045508
  %v2716 = vsel %vm2715, %v2714, %v2711
  %s2717 = scalar_lea.vmem %s0, 898
  %s2718 = smov 192
  %v2719 = vld [vmem:[%s2717] ss:$16 sm:%s2718]
  %vm2720 = vcmask 1047558
  %v2721 = vsel %vm2720, %v2719, %v2716
  %2722 = vrot.lane.b32.xlu0 %v2721, 8
  %v2723 = vpop.permute.xlu0 %2722
  %vm2724 = vcmask 97344
  %s2725 = scalar_lea.vmem %s1, 56
  %2726 = vst.msk [vmem:[%s2725] sm:$0xff] %vm2724, %v2723
  %s2727 = scalar_lea.vmem %s0, 1
  %s2728 = smov 3
  %v2729 = vld [vmem:[%s2727] ss:$16 sm:%s2728]
  %s2730 = scalar_lea.vmem %s0, 1
  %s2731 = smov 12
  %v2732 = vld [vmem:[%s2730] ss:$16 sm:%s2731]
  %vm2733 = vcmask 1043458
  %v2734 = vsel %vm2733, %v2732, %v2729
  %s2735 = scalar_lea.vmem %s0, 1
  %s2736 = smov 48
  %v2737 = vld [vmem:[%s2735] ss:$16 sm:%s2736]
  %vm2738 = vcmask 1045508
  %v2739 = vsel %vm2738, %v2737, %v2734
  %s2740 = scalar_lea.vmem %s0, 1
  %s2741 = smov 192
  %v2742 = vld [vmem:[%s2740] ss:$16 sm:%s2741]
  %vm2743 = vcmask 1047558
  %v2744 = vsel %vm2743, %v2742, %v2739
  %2745 = vrot.lane.b32.xlu0 %v2744, 4
  %v2746 = vpop.permute.xlu0 %2745
  %vm2747 = vcmask 64544
  %2748 = vst.msk [vmem:[%s1] sm:$0xff] %vm2747, %v2746
  %s2749 = scalar_lea.vmem %s0, 513
  %s2750 = smov 3
  %v2751 = vld [vmem:[%s2749] ss:$16 sm:%s2750]
  %s2752 = scalar_lea.vmem %s0, 513
  %s2753 = smov 12
  %v2754 = vld [vmem:[%s2752] ss:$16 sm:%s2753]
  %vm2755 = vcmask 1043458
  %v2756 = vsel %vm2755, %v2754, %v2751
  %s2757 = scalar_lea.vmem %s0, 513
  %s2758 = smov 48
  %v2759 = vld [vmem:[%s2757] ss:$16 sm:%s2758]
  %vm2760 = vcmask 1045508
  %v2761 = vsel %vm2760, %v2759, %v2756
  %s2762 = scalar_lea.vmem %s0, 513
  %s2763 = smov 192
  %v2764 = vld [vmem:[%s2762] ss:$16 sm:%s2763]
  %vm2765 = vcmask 1047558
  %v2766 = vsel %vm2765, %v2764, %v2761
  %2767 = vrot.lane.b32.xlu0 %v2766, 4
  %v2768 = vpop.permute.xlu0 %2767
  %vm2769 = vcmask 64544
  %s2770 = scalar_lea.vmem %s1, 32
  %2771 = vst.msk [vmem:[%s2770] sm:$0xff] %vm2769, %v2768
  %s2772 = scalar_lea.vmem %s0, 129
  %s2773 = smov 3
  %v2774 = vld [vmem:[%s2772] ss:$16 sm:%s2773]
  %s2775 = scalar_lea.vmem %s0, 129
  %s2776 = smov 12
  %v2777 = vld [vmem:[%s2775] ss:$16 sm:%s2776]
  %vm2778 = vcmask 1043458
  %v2779 = vsel %vm2778, %v2777, %v2774
  %s2780 = scalar_lea.vmem %s0, 129
  %s2781 = smov 48
  %v2782 = vld [vmem:[%s2780] ss:$16 sm:%s2781]
  %vm2783 = vcmask 1045508
  %v2784 = vsel %vm2783, %v2782, %v2779
  %s2785 = scalar_lea.vmem %s0, 129
  %s2786 = smov 192
  %v2787 = vld [vmem:[%s2785] ss:$16 sm:%s2786]
  %vm2788 = vcmask 1047558
  %v2789 = vsel %vm2788, %v2787, %v2784
  %2790 = vrot.lane.b32.xlu0 %v2789, 4
  %v2791 = vpop.permute.xlu0 %2790
  %vm2792 = vcmask 64544
  %s2793 = scalar_lea.vmem %s1, 8
  %2794 = vst.msk [vmem:[%s2793] sm:$0xff] %vm2792, %v2791
  %s2795 = scalar_lea.vmem %s0, 641
  %s2796 = smov 3
  %v2797 = vld [vmem:[%s2795] ss:$16 sm:%s2796]
  %s2798 = scalar_lea.vmem %s0, 641
  %s2799 = smov 12
  %v2800 = vld [vmem:[%s2798] ss:$16 sm:%s2799]
  %vm2801 = vcmask 1043458
  %v2802 = vsel %vm2801, %v2800, %v2797
  %s2803 = scalar_lea.vmem %s0, 641
  %s2804 = smov 48
  %v2805 = vld [vmem:[%s2803] ss:$16 sm:%s2804]
  %vm2806 = vcmask 1045508
  %v2807 = vsel %vm2806, %v2805, %v2802
  %s2808 = scalar_lea.vmem %s0, 641
  %s2809 = smov 192
  %v2810 = vld [vmem:[%s2808] ss:$16 sm:%s2809]
  %vm2811 = vcmask 1047558
  %v2812 = vsel %vm2811, %v2810, %v2807
  %2813 = vrot.lane.b32.xlu0 %v2812, 4
  %v2814 = vpop.permute.xlu0 %2813
  %vm2815 = vcmask 64544
  %s2816 = scalar_lea.vmem %s1, 40
  %2817 = vst.msk [vmem:[%s2816] sm:$0xff] %vm2815, %v2814
  %s2818 = scalar_lea.vmem %s0, 257
  %s2819 = smov 3
  %v2820 = vld [vmem:[%s2818] ss:$16 sm:%s2819]
  %s2821 = scalar_lea.vmem %s0, 257
  %s2822 = smov 12
  %v2823 = vld [vmem:[%s2821] ss:$16 sm:%s2822]
  %vm2824 = vcmask 1043458
  %v2825 = vsel %vm2824, %v2823, %v2820
  %s2826 = scalar_lea.vmem %s0, 257
  %s2827 = smov 48
  %v2828 = vld [vmem:[%s2826] ss:$16 sm:%s2827]
  %vm2829 = vcmask 1045508
  %v2830 = vsel %vm2829, %v2828, %v2825
  %s2831 = scalar_lea.vmem %s0, 257
  %s2832 = smov 192
  %v2833 = vld [vmem:[%s2831] ss:$16 sm:%s2832]
  %vm2834 = vcmask 1047558
  %v2835 = vsel %vm2834, %v2833, %v2830
  %2836 = vrot.lane.b32.xlu0 %v2835, 4
  %v2837 = vpop.permute.xlu0 %2836
  %vm2838 = vcmask 64544
  %s2839 = scalar_lea.vmem %s1, 16
  %2840 = vst.msk [vmem:[%s2839] sm:$0xff] %vm2838, %v2837
  %s2841 = scalar_lea.vmem %s0, 769
  %s2842 = smov 3
  %v2843 = vld [vmem:[%s2841] ss:$16 sm:%s2842]
  %s2844 = scalar_lea.vmem %s0, 769
  %s2845 = smov 12
  %v2846 = vld [vmem:[%s2844] ss:$16 sm:%s2845]
  %vm2847 = vcmask 1043458
  %v2848 = vsel %vm2847, %v2846, %v2843
  %s2849 = scalar_lea.vmem %s0, 769
  %s2850 = smov 48
  %v2851 = vld [vmem:[%s2849] ss:$16 sm:%s2850]
  %vm2852 = vcmask 1045508
  %v2853 = vsel %vm2852, %v2851, %v2848
  %s2854 = scalar_lea.vmem %s0, 769
  %s2855 = smov 192
  %v2856 = vld [vmem:[%s2854] ss:$16 sm:%s2855]
  %vm2857 = vcmask 1047558
  %v2858 = vsel %vm2857, %v2856, %v2853
  %2859 = vrot.lane.b32.xlu0 %v2858, 4
  %v2860 = vpop.permute.xlu0 %2859
  %vm2861 = vcmask 64544
  %s2862 = scalar_lea.vmem %s1, 48
  %2863 = vst.msk [vmem:[%s2862] sm:$0xff] %vm2861, %v2860
  %s2864 = scalar_lea.vmem %s0, 385
  %s2865 = smov 3
  %v2866 = vld [vmem:[%s2864] ss:$16 sm:%s2865]
  %s2867 = scalar_lea.vmem %s0, 385
  %s2868 = smov 12
  %v2869 = vld [vmem:[%s2867] ss:$16 sm:%s2868]
  %vm2870 = vcmask 1043458
  %v2871 = vsel %vm2870, %v2869, %v2866
  %s2872 = scalar_lea.vmem %s0, 385
  %s2873 = smov 48
  %v2874 = vld [vmem:[%s2872] ss:$16 sm:%s2873]
  %vm2875 = vcmask 1045508
  %v2876 = vsel %vm2875, %v2874, %v2871
  %s2877 = scalar_lea.vmem %s0, 385
  %s2878 = smov 192
  %v2879 = vld [vmem:[%s2877] ss:$16 sm:%s2878]
  %vm2880 = vcmask 1047558
  %v2881 = vsel %vm2880, %v2879, %v2876
  %2882 = vrot.lane.b32.xlu0 %v2881, 4
  %v2883 = vpop.permute.xlu0 %2882
  %vm2884 = vcmask 64544
  %s2885 = scalar_lea.vmem %s1, 24
  %2886 = vst.msk [vmem:[%s2885] sm:$0xff] %vm2884, %v2883
  %s2887 = scalar_lea.vmem %s0, 897
  %s2888 = smov 3
  %v2889 = vld [vmem:[%s2887] ss:$16 sm:%s2888]
  %s2890 = scalar_lea.vmem %s0, 897
  %s2891 = smov 12
  %v2892 = vld [vmem:[%s2890] ss:$16 sm:%s2891]
  %vm2893 = vcmask 1043458
  %v2894 = vsel %vm2893, %v2892, %v2889
  %s2895 = scalar_lea.vmem %s0, 897
  %s2896 = smov 48
  %v2897 = vld [vmem:[%s2895] ss:$16 sm:%s2896]
  %vm2898 = vcmask 1045508
  %v2899 = vsel %vm2898, %v2897, %v2894
  %s2900 = scalar_lea.vmem %s0, 897
  %s2901 = smov 192
  %v2902 = vld [vmem:[%s2900] ss:$16 sm:%s2901]
  %vm2903 = vcmask 1047558
  %v2904 = vsel %vm2903, %v2902, %v2899
  %2905 = vrot.lane.b32.xlu0 %v2904, 4
  %v2906 = vpop.permute.xlu0 %2905
  %vm2907 = vcmask 64544
  %s2908 = scalar_lea.vmem %s1, 56
  %2909 = vst.msk [vmem:[%s2908] sm:$0xff] %vm2907, %v2906

// kernel: tile.39
$region0: #{tile.39}
  %s0 = inlined_call_operand.vmem [shape: f32[4,16,4], index: 0, kind: input, shape index: {}]
  %s1 = inlined_call_operand.vmem [shape: f32[4,64], index: 1, kind: output, shape index: {}]
  $region1: #{tile.39} parent=0
    #allocation0 [shape = 'u8[4096]{0}', space=vmem, size = 0x1000, scoped, tag = 'scoped mem for output reshape']
    %s2 = smov 3
    %v3 = vld [vmem:[%s0] ss:$16 sm:%s2]
    %s4 = smov 12
    %v5 = vld [vmem:[%s0] ss:$16 sm:%s4]
    %vm6 = vcmask 1043458
    %v7 = vsel %vm6, %v5, %v3
    %vm8 = vcmask 31744
    %9 = vst.msk [vmem:[#allocation0] sm:$0xf] %vm8, %v7
    %s10 = scalar_lea.vmem %s0, 15
    %s11 = smov 3
    %v12 = vld [vmem:[%s10] ss:$16 sm:%s11]
    %s13 = scalar_lea.vmem %s0, 15
    %s14 = smov 12
    %v15 = vld [vmem:[%s13] ss:$16 sm:%s14]
    %vm16 = vcmask 1043458
    %v17 = vsel %vm16, %v15, %v12
    %18 = vrot.lane.b32.xlu0 %v17, 60
    %v19 = vpop.permute.xlu0 %18
    %vm20 = vcmask 523744
    %21 = vst.msk [vmem:[#allocation0] sm:$0xf] %vm20, %v19
    %s22 = scalar_lea.vmem %s0, 14
    %s23 = smov 3
    %v24 = vld [vmem:[%s22] ss:$16 sm:%s23]
    %s25 = scalar_lea.vmem %s0, 14
    %s26 = smov 12
    %v27 = vld [vmem:[%s25] ss:$16 sm:%s26]
    %vm28 = vcmask 1043458
    %v29 = vsel %vm28, %v27, %v24
    %30 = vrot.lane.b32.xlu0 %v29, 56
    %v31 = vpop.permute.xlu0 %30
    %vm32 = vcmask 490944
    %33 = vst.msk [vmem:[#allocation0] sm:$0xf] %vm32, %v31
    %s34 = scalar_lea.vmem %s0, 13
    %s35 = smov 3
    %v36 = vld [vmem:[%s34] ss:$16 sm:%s35]
    %s37 = scalar_lea.vmem %s0, 13
    %s38 = smov 12
    %v39 = vld [vmem:[%s37] ss:$16 sm:%s38]
    %vm40 = vcmask 1043458
    %v41 = vsel %vm40, %v39, %v36
    %42 = vrot.lane.b32.xlu0 %v41, 52
    %v43 = vpop.permute.xlu0 %42
    %vm44 = vcmask 458144
    %45 = vst.msk [vmem:[#allocation0] sm:$0xf] %vm44, %v43
    %s46 = scalar_lea.vmem %s0, 12
    %s47 = smov 3
    %v48 = vld [vmem:[%s46] ss:$16 sm:%s47]
    %s49 = scalar_lea.vmem %s0, 12
    %s50 = smov 12
    %v51 = vld [vmem:[%s49] ss:$16 sm:%s50]
    %vm52 = vcmask 1043458
    %v53 = vsel %vm52, %v51, %v48
    %54 = vrot.lane.b32.xlu0 %v53, 48
    %v55 = vpop.permute.xlu0 %54
    %vm56 = vcmask 425344
    %57 = vst.msk [vmem:[#allocation0] sm:$0xf] %vm56, %v55
    %s58 = scalar_lea.vmem %s0, 11
    %s59 = smov 3
    %v60 = vld [vmem:[%s58] ss:$16 sm:%s59]
    %s61 = scalar_lea.vmem %s0, 11
    %s62 = smov 12
    %v63 = vld [vmem:[%s61] ss:$16 sm:%s62]
    %vm64 = vcmask 1043458
    %v65 = vsel %vm64, %v63, %v60
    %66 = vrot.lane.b32.xlu0 %v65, 44
    %v67 = vpop.permute.xlu0 %66
    %vm68 = vcmask 392544
    %69 = vst.msk [vmem:[#allocation0] sm:$0xf] %vm68, %v67
    %s70 = scalar_lea.vmem %s0, 10
    %s71 = smov 3
    %v72 = vld [vmem:[%s70] ss:$16 sm:%s71]
    %s73 = scalar_lea.vmem %s0, 10
    %s74 = smov 12
    %v75 = vld [vmem:[%s73] ss:$16 sm:%s74]
    %vm76 = vcmask 1043458
    %v77 = vsel %vm76, %v75, %v72
    %78 = vrot.lane.b32.xlu0 %v77, 40
    %v79 = vpop.permute.xlu0 %78
    %vm80 = vcmask 359744
    %81 = vst.msk [vmem:[#allocation0] sm:$0xf] %vm80, %v79
    %s82 = scalar_lea.vmem %s0, 9
    %s83 = smov 3
    %v84 = vld [vmem:[%s82] ss:$16 sm:%s83]
    %s85 = scalar_lea.vmem %s0, 9
    %s86 = smov 12
    %v87 = vld [vmem:[%s85] ss:$16 sm:%s86]
    %vm88 = vcmask 1043458
    %v89 = vsel %vm88, %v87, %v84
    %90 = vrot.lane.b32.xlu0 %v89, 36
    %v91 = vpop.permute.xlu0 %90
    %vm92 = vcmask 326944
    %93 = vst.msk [vmem:[#allocation0] sm:$0xf] %vm92, %v91
    %s94 = scalar_lea.vmem %s0, 8
    %s95 = smov 3
    %v96 = vld [vmem:[%s94] ss:$16 sm:%s95]
    %s97 = scalar_lea.vmem %s0, 8
    %s98 = smov 12
    %v99 = vld [vmem:[%s97] ss:$16 sm:%s98]
    %vm100 = vcmask 1043458
    %v101 = vsel %vm100, %v99, %v96
    %102 = vrot.lane.b32.xlu0 %v101, 32
    %v103 = vpop.permute.xlu0 %102
    %vm104 = vcmask 294144
    %105 = vst.msk [vmem:[#allocation0] sm:$0xf] %vm104, %v103
    %s106 = scalar_lea.vmem %s0, 7
    %s107 = smov 3
    %v108 = vld [vmem:[%s106] ss:$16 sm:%s107]
    %s109 = scalar_lea.vmem %s0, 7
    %s110 = smov 12
    %v111 = vld [vmem:[%s109] ss:$16 sm:%s110]
    %vm112 = vcmask 1043458
    %v113 = vsel %vm112, %v111, %v108
    %114 = vrot.lane.b32.xlu0 %v113, 28
    %v115 = vpop.permute.xlu0 %114
    %vm116 = vcmask 261344
    %117 = vst.msk [vmem:[#allocation0] sm:$0xf] %vm116, %v115
    %s118 = scalar_lea.vmem %s0, 6
    %s119 = smov 3
    %v120 = vld [vmem:[%s118] ss:$16 sm:%s119]
    %s121 = scalar_lea.vmem %s0, 6
    %s122 = smov 12
    %v123 = vld [vmem:[%s121] ss:$16 sm:%s122]
    %vm124 = vcmask 1043458
    %v125 = vsel %vm124, %v123, %v120
    %126 = vrot.lane.b32.xlu0 %v125, 24
    %v127 = vpop.permute.xlu0 %126
    %vm128 = vcmask 228544
    %129 = vst.msk [vmem:[#allocation0] sm:$0xf] %vm128, %v127
    %s130 = scalar_lea.vmem %s0, 5
    %s131 = smov 3
    %v132 = vld [vmem:[%s130] ss:$16 sm:%s131]
    %s133 = scalar_lea.vmem %s0, 5
    %s134 = smov 12
    %v135 = vld [vmem:[%s133] ss:$16 sm:%s134]
    %vm136 = vcmask 1043458
    %v137 = vsel %vm136, %v135, %v132
    %138 = vrot.lane.b32.xlu0 %v137, 20
    %v139 = vpop.permute.xlu0 %138
    %vm140 = vcmask 195744
    %141 = vst.msk [vmem:[#allocation0] sm:$0xf] %vm140, %v139
    %s142 = scalar_lea.vmem %s0, 4
    %s143 = smov 3
    %v144 = vld [vmem:[%s142] ss:$16 sm:%s143]
    %s145 = scalar_lea.vmem %s0, 4
    %s146 = smov 12
    %v147 = vld [vmem:[%s145] ss:$16 sm:%s146]
    %vm148 = vcmask 1043458
    %v149 = vsel %vm148, %v147, %v144
    %150 = vrot.lane.b32.xlu0 %v149, 16
    %v151 = vpop.permute.xlu0 %150
    %vm152 = vcmask 162944
    %153 = vst.msk [vmem:[#allocation0] sm:$0xf] %vm152, %v151
    %s154 = scalar_lea.vmem %s0, 3
    %s155 = smov 3
    %v156 = vld [vmem:[%s154] ss:$16 sm:%s155]
    %s157 = scalar_lea.vmem %s0, 3
    %s158 = smov 12
    %v159 = vld [vmem:[%s157] ss:$16 sm:%s158]
    %vm160 = vcmask 1043458
    %v161 = vsel %vm160, %v159, %v156
    %162 = vrot.lane.b32.xlu0 %v161, 12
    %v163 = vpop.permute.xlu0 %162
    %vm164 = vcmask 130144
    %165 = vst.msk [vmem:[#allocation0] sm:$0xf] %vm164, %v163
    %s166 = scalar_lea.vmem %s0, 2
    %s167 = smov 3
    %v168 = vld [vmem:[%s166] ss:$16 sm:%s167]
    %s169 = scalar_lea.vmem %s0, 2
    %s170 = smov 12
    %v171 = vld [vmem:[%s169] ss:$16 sm:%s170]
    %vm172 = vcmask 1043458
    %v173 = vsel %vm172, %v171, %v168
    %174 = vrot.lane.b32.xlu0 %v173, 8
    %v175 = vpop.permute.xlu0 %174
    %vm176 = vcmask 97344
    %177 = vst.msk [vmem:[#allocation0] sm:$0xf] %vm176, %v175
    %s178 = scalar_lea.vmem %s0, 1
    %s179 = smov 3
    %v180 = vld [vmem:[%s178] ss:$16 sm:%s179]
    %s181 = scalar_lea.vmem %s0, 1
    %s182 = smov 12
    %v183 = vld [vmem:[%s181] ss:$16 sm:%s182]
    %vm184 = vcmask 1043458
    %v185 = vsel %vm184, %v183, %v180
    %186 = vrot.lane.b32.xlu0 %v185, 4
    %v187 = vpop.permute.xlu0 %186
    %vm188 = vcmask 64544
    %189 = vst.msk [vmem:[#allocation0] sm:$0xf] %vm188, %v187
    %s191 = sshllo.u32 0, 4
    %v193 = vld [vmem:[#allocation0] sm:%s191]
    %s194 = sshllo.u32 0, 4
    %195 = vst [vmem:[%s1] sm:%s194] %v193

// kernel: basic_block_forward.1
$region0: #{basic_block_forward.1}
  #allocation0 [shape = 'u32[]', space=smem, size = 0x4, offset = 0x4, fixed_abs, tag = 'smem constant byte address 0x4 - core index']
  #allocation1 [shape = 'u32[144,128]{1,0:T(1,128)}', space=vmem, size = 0x12000, scoped, tag = 'internal scratch']
  #allocation2 [shape = 'f32[2,18,64]{2,1,0:T(8,128)}', space=vmem, size = 0x6000, scoped, tag = 'scratch operand']
  #allocation3 [shape = 'f32[2,22,32]{2,1,0:T(8,128)}', space=vmem, size = 0x6000, scoped, tag = 'scratch operand']
  %s0 = inlined_call_operand.vmem [shape: f32[2,18,64], index: 0, kind: input, shape index: {}]
  %s1 = inlined_call_operand.vmem [shape: f32[3,64,64], index: 1, kind: input, shape index: {}]
  %s2 = inlined_call_operand.vmem [shape: f32[1,64], index: 2, kind: input, shape index: {}]
  %s3 = inlined_call_operand.vmem [shape: f32[1,64], index: 3, kind: input, shape index: {}]
  %s4 = inlined_call_operand.vmem [shape: f32[3,64,64], index: 4, kind: input, shape index: {}]
  %s5 = inlined_call_operand.vmem [shape: f32[1,64], index: 5, kind: input, shape index: {}]
  %s6 = inlined_call_operand.vmem [shape: f32[1,64], index: 6, kind: input, shape index: {}]
  %s7 = inlined_call_operand.vmem [shape: f32[7,32,16], index: 7, kind: input, shape index: {}]
  %s8 = inlined_call_operand.vmem [shape: f32[64,64], index: 8, kind: input, shape index: {}]
  %s9 = inlined_call_operand.vmem [shape: f32[64,16], index: 9, kind: input, shape index: {}]
  %s10 = inlined_call_operand.vmem [shape: f32[16,64], index: 10, kind: input, shape index: {}]
  %s11 = inlined_call_operand.vmem [shape: f32[4,64], index: 11, kind: input, shape index: {}]
  %s12 = inlined_call_operand.vmem [shape: f32[32,64], index: 12, kind: output, shape index: {}]
  %s13 = sld [smem:[#allocation0]]
  $region58: #{basic_block_forward.1} parent=0
    _
  %s15 = ssub.s32 1, %s13
  %s16 = scalar_select 0, %s15, %s13
  // Predicated region
  $region2: #{basic_block_forward.1} parent=0 // pred_check
    _
  $region3: #{basic_block_forward.1} parent=0 // pred_check_branch
    %18 = sbr.rel (0) target = $region5
  $region4: #{basic_block_forward.1} parent=0 // pred_region
    _
  $region5: #{basic_block_forward.1} parent=0 // pred_fallthru
    _
  // Predicated region
  $region6: #{basic_block_forward.1} parent=0 // pred_check
    _
  $region7: #{basic_block_forward.1} parent=0 // pred_check_branch
    %20 = sbr.rel (0) target = $region9
  $region8: #{basic_block_forward.1} parent=0 // pred_region
    _
  $region9: #{basic_block_forward.1} parent=0 // pred_fallthru
    _
  // Predicated region
  $region10: #{basic_block_forward.1} parent=0 // pred_check
    _
  $region11: #{basic_block_forward.1} parent=0 // pred_check_branch
    %22 = sbr.rel (0) target = $region13
  $region12: #{basic_block_forward.1} parent=0 // pred_region
    _
  $region13: #{basic_block_forward.1} parent=0 // pred_fallthru
    _
  // Predicated region
  $region14: #{basic_block_forward.1} parent=0 // pred_check
    _
  $region15: #{basic_block_forward.1} parent=0 // pred_check_branch
    %24 = sbr.rel (0) target = $region17
  $region16: #{basic_block_forward.1} parent=0 // pred_region
    _
  $region17: #{basic_block_forward.1} parent=0 // pred_fallthru
    _
  // Predicated region
  $region18: #{basic_block_forward.1} parent=0 // pred_check
    _
  $region19: #{basic_block_forward.1} parent=0 // pred_check_branch
    %26 = sbr.rel (0) target = $region21
  $region20: #{basic_block_forward.1} parent=0 // pred_region
    _
  $region21: #{basic_block_forward.1} parent=0 // pred_fallthru
    _
  // Predicated region
  $region22: #{basic_block_forward.1} parent=0 // pred_check
    _
  $region23: #{basic_block_forward.1} parent=0 // pred_check_branch
    %28 = sbr.rel (0) target = $region25
  $region24: #{basic_block_forward.1} parent=0 // pred_region
    _
  $region25: #{basic_block_forward.1} parent=0 // pred_fallthru
    _
  // Predicated region
  $region26: #{basic_block_forward.1} parent=0 // pred_check
    _
  $region27: #{basic_block_forward.1} parent=0 // pred_check_branch
    %30 = sbr.rel (0) target = $region29
  $region28: #{basic_block_forward.1} parent=0 // pred_region
    _
  $region29: #{basic_block_forward.1} parent=0 // pred_fallthru
    _
  // Predicated region
  $region30: #{basic_block_forward.1} parent=0 // pred_check
    _
  $region31: #{basic_block_forward.1} parent=0 // pred_check_branch
    %32 = sbr.rel (0) target = $region33
  $region32: #{basic_block_forward.1} parent=0 // pred_region
    _
  $region33: #{basic_block_forward.1} parent=0 // pred_fallthru
    _
  // Predicated region
  $region34: #{basic_block_forward.1} parent=0 // pred_check
    _
  $region35: #{basic_block_forward.1} parent=0 // pred_check_branch
    %34 = sbr.rel (0) target = $region37
  $region36: #{basic_block_forward.1} parent=0 // pred_region
    _
  $region37: #{basic_block_forward.1} parent=0 // pred_fallthru
    _
  // Predicated region
  $region38: #{basic_block_forward.1} parent=0 // pred_check
    _
  $region39: #{basic_block_forward.1} parent=0 // pred_check_branch
    %36 = sbr.rel (0) target = $region41
  $region40: #{basic_block_forward.1} parent=0 // pred_region
    _
  $region41: #{basic_block_forward.1} parent=0 // pred_fallthru
    _
  // Predicated region
  $region42: #{basic_block_forward.1} parent=0 // pred_check
    _
  $region43: #{basic_block_forward.1} parent=0 // pred_check_branch
    %38 = sbr.rel (0) target = $region45
  $region44: #{basic_block_forward.1} parent=0 // pred_region
    _
  $region45: #{basic_block_forward.1} parent=0 // pred_fallthru
    _
  // Predicated region
  $region46: #{basic_block_forward.1} parent=0 // pred_check
    _
  $region47: #{basic_block_forward.1} parent=0 // pred_check_branch
    %40 = sbr.rel (0) target = $region49
  $region48: #{basic_block_forward.1} parent=0 // pred_region
    _
  $region49: #{basic_block_forward.1} parent=0 // pred_fallthru
    _
  %v41 = vld [vmem:[%s0 + $0x1] sm:$0xff]
  %v42 = vld [vmem:[%s0 + $0x9] sm:$0xff]
  %v43 = vld [vmem:[%s0 + $0x19] sm:$0xff]
  %v44 = vld [vmem:[%s0 + $0x21] sm:$0xff]
  %s45 = scalar_lea.vmem %s1, 64
  %v46 = vld [vmem:[%s45] sm:$0xff]
  %v47 = vld [vmem:[%s45 + $0x8] sm:$0xff]
  %v48 = vld [vmem:[%s45 + $0x10] sm:$0xff]
  %v49 = vld [vmem:[%s45 + $0x18] sm:$0xff]
  %v50 = vld [vmem:[%s45 + $0x20] sm:$0xff]
  %v51 = vld [vmem:[%s45 + $0x28] sm:$0xff]
  %v52 = vld [vmem:[%s45 + $0x30] sm:$0xff]
  %v53 = vld [vmem:[%s45 + $0x38] sm:$0xff]
  %v54 = vld [vmem:[%s0] sm:$0xff]
  %v55 = vld [vmem:[%s0 + $0x8] sm:$0xff]
  %v56 = vld [vmem:[%s0 + $0x18] sm:$0xff]
  %v57 = vld [vmem:[%s0 + $0x20] sm:$0xff]
  %v58 = vld [vmem:[%s1] sm:$0xff]
  %v59 = vld [vmem:[%s1 + $0x8] sm:$0xff]
  %v60 = vld [vmem:[%s1 + $0x10] sm:$0xff]
  %v61 = vld [vmem:[%s1 + $0x18] sm:$0xff]
  %v62 = vld [vmem:[%s1 + $0x20] sm:$0xff]
  %v63 = vld [vmem:[%s1 + $0x28] sm:$0xff]
  %v64 = vld [vmem:[%s1 + $0x30] sm:$0xff]
  %v65 = vld [vmem:[%s1 + $0x38] sm:$0xff]
  %vm66 = vcmask 523264
  %v68 = vsel %vm66, %v54, 0
  %v71 = vsel %vm66, %v55, 0
  %v74 = vsel %vm66, %v56, 0
  %v77 = vsel %vm66, %v57, 0
  %79 = vmatprep.subr.mxu0 0.0
  %80 = vmatpush1.msra.mxu0 %v58
  %81 = vmatprep.subr.mxu0 0.0
  %82 = vmatpush1.msra.mxu0 %v59
  %83 = vmatprep.subr.mxu0 0.0
  %84 = vmatpush1.msra.mxu0 %v60
  %85 = vmatprep.subr.mxu0 0.0
  %86 = vmatpush1.msra.mxu0 %v61
  %87 = vmatprep.subr.mxu0 0.0
  %88 = vmatpush1.msra.mxu0 %v62
  %89 = vmatprep.subr.mxu0 0.0
  %90 = vmatpush1.msra.mxu0 %v63
  %91 = vmatprep.subr.mxu0 0.0
  %92 = vmatpush1.msra.mxu0 %v64
  %93 = vmatprep.subr.mxu0 0.0
  %94 = vmatpush1.msra.mxu0 %v65
  %95 = vmatprep.subr.mxu0 0.0
  %96 = vmatpush1.msra.mxu0 0.0
  %97 = vmatprep.subr.mxu0 0.0
  %98 = vmatpush1.msra.mxu0 0.0
  %99 = vmatprep.subr.mxu0 0.0
  %100 = vmatpush1.msra.mxu0 0.0
  %101 = vmatprep.subr.mxu0 0.0
  %102 = vmatpush1.msra.mxu0 0.0
  %103 = vmatprep.subr.mxu0 0.0
  %104 = vmatpush1.msra.mxu0 0.0
  %105 = vmatprep.subr.mxu0 0.0
  %106 = vmatpush1.msra.mxu0 0.0
  %107 = vmatprep.subr.mxu0 0.0
  %108 = vmatpush1.msra.mxu0 0.0
  %109 = vmatprep.subr.mxu0 0.0
  %110 = vmatpush1.msra.mxu0 0.0
  %111 = vmatprep.subr.mxu0 0.0
  %112 = vmatpush1.msra.mxu0 0.0
  %113 = vmatprep.subr.mxu0 0.0
  %114 = vmatpush1.msra.mxu0 0.0
  %115 = vmatprep.subr.mxu0 0.0
  %116 = vmatpush1.msra.mxu0 0.0
  %117 = vmatprep.subr.mxu0 0.0
  %118 = vmatpush1.msra.mxu0 0.0
  %119 = vmatprep.subr.mxu0 0.0
  %120 = vmatpush1.msra.mxu0 0.0
  %121 = vmatprep.subr.mxu0 0.0
  %122 = vmatpush1.msra.mxu0 0.0
  %123 = vmatprep.subr.mxu0 0.0
  %124 = vmatpush1.msra.mxu0 0.0
  %125 = vmatprep.subr.mxu0 0.0
  %126 = vmatpush1.msra.mxu0 0.0
  %127 = vmatprep.subr.mxu0 0.0
  %128 = vmatpush1.msra.mxu0 0.0
  %129 = vmatprep.subr.mxu0 0.0
  %130 = vmatpush1.msra.mxu0 0.0
  %131 = vmatprep.subr.mxu0 0.0
  %132 = vmatpush1.msra.mxu0 0.0
  %133 = vmatprep.subr.mxu0 0.0
  %134 = vmatpush1.msra.mxu0 0.0
  %135 = vmatprep.subr.mxu0 0.0
  %136 = vmatpush1.msra.mxu0 0.0
  %137 = vmatprep.subr.mxu0 0.0
  %138 = vmatpush1.msra.mxu0 0.0
  %139 = vmatprep.subr.mxu0 0.0
  %140 = vmatpush1.msra.mxu0 0.0
  %141 = vmatprep.subr.mxu0 0.0
  %142 = vmatpush1.msra.mxu0 0.0
  %143 = vmatprep.mubr.f32.mxu0 0.0
  %144 = vmatmul.mubr.f32.gmra.mrb[0].mxu0 %v68
  %v145 = vpop.f32.mrb[0].mxu0
  %v146 = vadd.f32 0.0, %v145
  %v147 = vpop.f32.mrb[0].mxu0
  %148 = vmatprep.mubr.f32.mxu0 0.0
  %149 = vmatmul.mubr.f32.gmra.mrb[0].mxu0 %v71
  %v150 = vpop.f32.mrb[0].mxu0
  %v151 = vadd.f32 0.0, %v150
  %v152 = vpop.f32.mrb[0].mxu0
  %153 = vmatprep.mubr.f32.mxu0 0.0
  %154 = vmatmul.mubr.f32.gmra.mrb[0].mxu0 %v74
  %v155 = vpop.f32.mrb[0].mxu0
  %v156 = vadd.f32 0.0, %v155
  %v157 = vpop.f32.mrb[0].mxu0
  %158 = vmatprep.mubr.f32.mxu0 0.0
  %159 = vmatmul.mubr.f32.gmra.mrb[0].mxu0 %v77
  %v160 = vpop.f32.mrb[0].mxu0
  %v161 = vadd.f32 0.0, %v160
  %v162 = vpop.f32.mrb[0].mxu0
  %163 = vdwg.mxu0
  %v165 = vsel %vm66, %v41, 0
  %v168 = vsel %vm66, %v42, 0
  %v171 = vsel %vm66, %v43, 0
  %v174 = vsel %vm66, %v44, 0
  %176 = vmatprep.subr.mxu0 0.0
  %177 = vmatpush1.msra.mxu0 %v46
  %178 = vmatprep.subr.mxu0 0.0
  %179 = vmatpush1.msra.mxu0 %v47
  %180 = vmatprep.subr.mxu0 0.0
  %181 = vmatpush1.msra.mxu0 %v48
  %182 = vmatprep.subr.mxu0 0.0
  %183 = vmatpush1.msra.mxu0 %v49
  %184 = vmatprep.subr.mxu0 0.0
  %185 = vmatpush1.msra.mxu0 %v50
  %186 = vmatprep.subr.mxu0 0.0
  %187 = vmatpush1.msra.mxu0 %v51
  %188 = vmatprep.subr.mxu0 0.0
  %189 = vmatpush1.msra.mxu0 %v52
  %190 = vmatprep.subr.mxu0 0.0
  %191 = vmatpush1.msra.mxu0 %v53
  %192 = vmatprep.subr.mxu0 0.0
  %193 = vmatpush1.msra.mxu0 0.0
  %194 = vmatprep.subr.mxu0 0.0
  %195 = vmatpush1.msra.mxu0 0.0
  %196 = vmatprep.subr.mxu0 0.0
  %197 = vmatpush1.msra.mxu0 0.0
  %198 = vmatprep.subr.mxu0 0.0
  %199 = vmatpush1.msra.mxu0 0.0
  %200 = vmatprep.subr.mxu0 0.0
  %201 = vmatpush1.msra.mxu0 0.0
  %202 = vmatprep.subr.mxu0 0.0
  %203 = vmatpush1.msra.mxu0 0.0
  %204 = vmatprep.subr.mxu0 0.0
  %205 = vmatpush1.msra.mxu0 0.0
  %206 = vmatprep.subr.mxu0 0.0
  %207 = vmatpush1.msra.mxu0 0.0
  %208 = vmatprep.subr.mxu0 0.0
  %209 = vmatpush1.msra.mxu0 0.0
  %210 = vmatprep.subr.mxu0 0.0
  %211 = vmatpush1.msra.mxu0 0.0
  %212 = vmatprep.subr.mxu0 0.0
  %213 = vmatpush1.msra.mxu0 0.0
  %214 = vmatprep.subr.mxu0 0.0
  %215 = vmatpush1.msra.mxu0 0.0
  %216 = vmatprep.subr.mxu0 0.0
  %217 = vmatpush1.msra.mxu0 0.0
  %218 = vmatprep.subr.mxu0 0.0
  %219 = vmatpush1.msra.mxu0 0.0
  %220 = vmatprep.subr.mxu0 0.0
  %221 = vmatpush1.msra.mxu0 0.0
  %222 = vmatprep.subr.mxu0 0.0
  %223 = vmatpush1.msra.mxu0 0.0
  %224 = vmatprep.subr.mxu0 0.0
  %225 = vmatpush1.msra.mxu0 0.0
  %226 = vmatprep.subr.mxu0 0.0
  %227 = vmatpush1.msra.mxu0 0.0
  %228 = vmatprep.subr.mxu0 0.0
  %229 = vmatpush1.msra.mxu0 0.0
  %230 = vmatprep.subr.mxu0 0.0
  %231 = vmatpush1.msra.mxu0 0.0
  %232 = vmatprep.subr.mxu0 0.0
  %233 = vmatpush1.msra.mxu0 0.0
  %234 = vmatprep.subr.mxu0 0.0
  %235 = vmatpush1.msra.mxu0 0.0
  %236 = vmatprep.subr.mxu0 0.0
  %237 = vmatpush1.msra.mxu0 0.0
  %238 = vmatprep.subr.mxu0 0.0
  %239 = vmatpush1.msra.mxu0 0.0
  %240 = vmatprep.mubr.f32.mxu0 0.0
  %241 = vmatmul.mubr.f32.gmra.mrb[0].mxu0 %v165
  %v242 = vpop.f32.mrb[0].mxu0
  %v243 = vadd.f32 %v146, %v242
  %v244 = vpop.f32.mrb[0].mxu0
  %245 = vmatprep.mubr.f32.mxu0 0.0
  %246 = vmatmul.mubr.f32.gmra.mrb[0].mxu0 %v168
  %v247 = vpop.f32.mrb[0].mxu0
  %v248 = vadd.f32 %v151, %v247
  %v249 = vpop.f32.mrb[0].mxu0
  %250 = vmatprep.mubr.f32.mxu0 0.0
  %251 = vmatmul.mubr.f32.gmra.mrb[0].mxu0 %v171
  %v252 = vpop.f32.mrb[0].mxu0
  %v253 = vadd.f32 %v156, %v252
  %v254 = vpop.f32.mrb[0].mxu0
  %255 = vmatprep.mubr.f32.mxu0 0.0
  %256 = vmatmul.mubr.f32.gmra.mrb[0].mxu0 %v174
  %v257 = vpop.f32.mrb[0].mxu0
  %v258 = vadd.f32 %v161, %v257
  %v259 = vpop.f32.mrb[0].mxu0
  %260 = vdwg.mxu0
  %v261 = vld [vmem:[%s0 + $0x2] sm:$0xff]
  %v262 = vld [vmem:[%s0 + $0xa] sm:$0xff]
  %v263 = vld [vmem:[%s0 + $0x1a] sm:$0xff]
  %v264 = vld [vmem:[%s0 + $0x22] sm:$0xff]
  %s265 = scalar_lea.vmem %s1, 128
  %v266 = vld [vmem:[%s265] sm:$0xff]
  %v267 = vld [vmem:[%s265 + $0x8] sm:$0xff]
  %v268 = vld [vmem:[%s265 + $0x10] sm:$0xff]
  %v269 = vld [vmem:[%s265 + $0x18] sm:$0xff]
  %v270 = vld [vmem:[%s265 + $0x20] sm:$0xff]
  %v271 = vld [vmem:[%s265 + $0x28] sm:$0xff]
  %v272 = vld [vmem:[%s265 + $0x30] sm:$0xff]
  %v273 = vld [vmem:[%s265 + $0x38] sm:$0xff]
  %v275 = vsel %vm66, %v261, 0
  %v278 = vsel %vm66, %v262, 0
  %v281 = vsel %vm66, %v263, 0
  %v284 = vsel %vm66, %v264, 0
  %286 = vmatprep.subr.mxu0 0.0
  %287 = vmatpush1.msra.mxu0 %v266
  %288 = vmatprep.subr.mxu0 0.0
  %289 = vmatpush1.msra.mxu0 %v267
  %290 = vmatprep.subr.mxu0 0.0
  %291 = vmatpush1.msra.mxu0 %v268
  %292 = vmatprep.subr.mxu0 0.0
  %293 = vmatpush1.msra.mxu0 %v269
  %294 = vmatprep.subr.mxu0 0.0
  %295 = vmatpush1.msra.mxu0 %v270
  %296 = vmatprep.subr.mxu0 0.0
  %297 = vmatpush1.msra.mxu0 %v271
  %298 = vmatprep.subr.mxu0 0.0
  %299 = vmatpush1.msra.mxu0 %v272
  %300 = vmatprep.subr.mxu0 0.0
  %301 = vmatpush1.msra.mxu0 %v273
  %302 = vmatprep.subr.mxu0 0.0
  %303 = vmatpush1.msra.mxu0 0.0
  %304 = vmatprep.subr.mxu0 0.0
  %305 = vmatpush1.msra.mxu0 0.0
  %306 = vmatprep.subr.mxu0 0.0
  %307 = vmatpush1.msra.mxu0 0.0
  %308 = vmatprep.subr.mxu0 0.0
  %309 = vmatpush1.msra.mxu0 0.0
  %310 = vmatprep.subr.mxu0 0.0
  %311 = vmatpush1.msra.mxu0 0.0
  %312 = vmatprep.subr.mxu0 0.0
  %313 = vmatpush1.msra.mxu0 0.0
  %314 = vmatprep.subr.mxu0 0.0
  %315 = vmatpush1.msra.mxu0 0.0
  %316 = vmatprep.subr.mxu0 0.0
  %317 = vmatpush1.msra.mxu0 0.0
  %318 = vmatprep.subr.mxu0 0.0
  %319 = vmatpush1.msra.mxu0 0.0
  %320 = vmatprep.subr.mxu0 0.0
  %321 = vmatpush1.msra.mxu0 0.0
  %322 = vmatprep.subr.mxu0 0.0
  %323 = vmatpush1.msra.mxu0 0.0
  %324 = vmatprep.subr.mxu0 0.0
  %325 = vmatpush1.msra.mxu0 0.0
  %326 = vmatprep.subr.mxu0 0.0
  %327 = vmatpush1.msra.mxu0 0.0
  %328 = vmatprep.subr.mxu0 0.0
  %329 = vmatpush1.msra.mxu0 0.0
  %330 = vmatprep.subr.mxu0 0.0
  %331 = vmatpush1.msra.mxu0 0.0
  %332 = vmatprep.subr.mxu0 0.0
  %333 = vmatpush1.msra.mxu0 0.0
  %334 = vmatprep.subr.mxu0 0.0
  %335 = vmatpush1.msra.mxu0 0.0
  %336 = vmatprep.subr.mxu0 0.0
  %337 = vmatpush1.msra.mxu0 0.0
  %338 = vmatprep.subr.mxu0 0.0
  %339 = vmatpush1.msra.mxu0 0.0
  %340 = vmatprep.subr.mxu0 0.0
  %341 = vmatpush1.msra.mxu0 0.0
  %342 = vmatprep.subr.mxu0 0.0
  %343 = vmatpush1.msra.mxu0 0.0
  %344 = vmatprep.subr.mxu0 0.0
  %345 = vmatpush1.msra.mxu0 0.0
  %346 = vmatprep.subr.mxu0 0.0
  %347 = vmatpush1.msra.mxu0 0.0
  %348 = vmatprep.subr.mxu0 0.0
  %349 = vmatpush1.msra.mxu0 0.0
  %350 = vmatprep.mubr.f32.mxu0 0.0
  %351 = vmatmul.mubr.f32.gmra.mrb[0].mxu0 %v275
  %v352 = vpop.f32.mrb[0].mxu0
  %v353 = vadd.f32 0.0, %v352
  %v354 = vpop.f32.mrb[0].mxu0
  %355 = vmatprep.mubr.f32.mxu0 0.0
  %356 = vmatmul.mubr.f32.gmra.mrb[0].mxu0 %v278
  %v357 = vpop.f32.mrb[0].mxu0
  %v358 = vadd.f32 0.0, %v357
  %v359 = vpop.f32.mrb[0].mxu0
  %360 = vmatprep.mubr.f32.mxu0 0.0
  %361 = vmatmul.mubr.f32.gmra.mrb[0].mxu0 %v281
  %v362 = vpop.f32.mrb[0].mxu0
  %v363 = vadd.f32 0.0, %v362
  %v364 = vpop.f32.mrb[0].mxu0
  %365 = vmatprep.mubr.f32.mxu0 0.0
  %366 = vmatmul.mubr.f32.gmra.mrb[0].mxu0 %v284
  %v367 = vpop.f32.mrb[0].mxu0
  %v368 = vadd.f32 0.0, %v367
  %v369 = vpop.f32.mrb[0].mxu0
  %370 = vdwg.mxu0
  %v371 = vadd.f32 %v243, %v353
  %v372 = vadd.f32 %v248, %v358
  %v373 = vadd.f32 %v253, %v363
  %v374 = vadd.f32 %v258, %v368
  %v375 = vsel %vm66, %v371, 0.0
  %v376 = vsel %vm66, %v372, 0.0
  %v377 = vadd.f32 %v375, %v376
  %v378 = vsel %vm66, %v373, 0.0
  %v379 = vadd.f32 %v377, %v378
  %v380 = vsel %vm66, %v374, 0.0
  %v381 = vadd.f32 %v379, %v380
  %v382 = vrot.slane %v381, 4
  %v383 = vadd.f32 %v381, %v382
  %v384 = vrot.slane %v383, 2
  %v385 = vadd.f32 %v383, %v384
  %v386 = vrot.slane %v385, 1
  %v387 = vadd.f32 %v385, %v386
  %v388 = vmul.f32 %v371, %v371
  %v389 = vmul.f32 %v372, %v372
  %v390 = vmul.f32 %v373, %v373
  %v391 = vmul.f32 %v374, %v374
  %v392 = vsel %vm66, %v388, 0.0
  %v393 = vsel %vm66, %v389, 0.0
  %v394 = vadd.f32 %v392, %v393
  %v395 = vsel %vm66, %v390, 0.0
  %v396 = vadd.f32 %v394, %v395
  %v397 = vsel %vm66, %v391, 0.0
  %v398 = vadd.f32 %v396, %v397
  %v399 = vrot.slane %v398, 4
  %v400 = vadd.f32 %v398, %v399
  %v401 = vrot.slane %v400, 2
  %v402 = vadd.f32 %v400, %v401
  %v403 = vrot.slane %v402, 1
  %v404 = vadd.f32 %v402, %v403
  %v405 = vld [vmem:[%s8] sm:$0xff]
  %v406 = vld [vmem:[%s8 + $0x8] sm:$0xff]
  %v407 = vld [vmem:[%s8 + $0x10] sm:$0xff]
  %v408 = vld [vmem:[%s8 + $0x18] sm:$0xff]
  %v409 = vld [vmem:[%s8 + $0x20] sm:$0xff]
  %v410 = vld [vmem:[%s8 + $0x28] sm:$0xff]
  %v411 = vld [vmem:[%s8 + $0x30] sm:$0xff]
  %v412 = vld [vmem:[%s8 + $0x38] sm:$0xff]
  %v414 = vsel %vm66, %v387, 0
  %416 = vmatprep.subr.mxu0 0.0
  %417 = vmatpush1.msra.mxu0 %v405
  %418 = vmatprep.subr.mxu0 0.0
  %419 = vmatpush1.msra.mxu0 %v406
  %420 = vmatprep.subr.mxu0 0.0
  %421 = vmatpush1.msra.mxu0 %v407
  %422 = vmatprep.subr.mxu0 0.0
  %423 = vmatpush1.msra.mxu0 %v408
  %424 = vmatprep.subr.mxu0 0.0
  %425 = vmatpush1.msra.mxu0 %v409
  %426 = vmatprep.subr.mxu0 0.0
  %427 = vmatpush1.msra.mxu0 %v410
  %428 = vmatprep.subr.mxu0 0.0
  %429 = vmatpush1.msra.mxu0 %v411
  %430 = vmatprep.subr.mxu0 0.0
  %431 = vmatpush1.msra.mxu0 %v412
  %432 = vmatprep.subr.mxu0 0.0
  %433 = vmatpush1.msra.mxu0 0.0
  %434 = vmatprep.subr.mxu0 0.0
  %435 = vmatpush1.msra.mxu0 0.0
  %436 = vmatprep.subr.mxu0 0.0
  %437 = vmatpush1.msra.mxu0 0.0
  %438 = vmatprep.subr.mxu0 0.0
  %439 = vmatpush1.msra.mxu0 0.0
  %440 = vmatprep.subr.mxu0 0.0
  %441 = vmatpush1.msra.mxu0 0.0
  %442 = vmatprep.subr.mxu0 0.0
  %443 = vmatpush1.msra.mxu0 0.0
  %444 = vmatprep.subr.mxu0 0.0
  %445 = vmatpush1.msra.mxu0 0.0
  %446 = vmatprep.subr.mxu0 0.0
  %447 = vmatpush1.msra.mxu0 0.0
  %448 = vmatprep.subr.mxu0 0.0
  %449 = vmatpush1.msra.mxu0 0.0
  %450 = vmatprep.subr.mxu0 0.0
  %451 = vmatpush1.msra.mxu0 0.0
  %452 = vmatprep.subr.mxu0 0.0
  %453 = vmatpush1.msra.mxu0 0.0
  %454 = vmatprep.subr.mxu0 0.0
  %455 = vmatpush1.msra.mxu0 0.0
  %456 = vmatprep.subr.mxu0 0.0
  %457 = vmatpush1.msra.mxu0 0.0
  %458 = vmatprep.subr.mxu0 0.0
  %459 = vmatpush1.msra.mxu0 0.0
  %460 = vmatprep.subr.mxu0 0.0
  %461 = vmatpush1.msra.mxu0 0.0
  %462 = vmatprep.subr.mxu0 0.0
  %463 = vmatpush1.msra.mxu0 0.0
  %464 = vmatprep.subr.mxu0 0.0
  %465 = vmatpush1.msra.mxu0 0.0
  %466 = vmatprep.subr.mxu0 0.0
  %467 = vmatpush1.msra.mxu0 0.0
  %468 = vmatprep.subr.mxu0 0.0
  %469 = vmatpush1.msra.mxu0 0.0
  %470 = vmatprep.subr.mxu0 0.0
  %471 = vmatpush1.msra.mxu0 0.0
  %472 = vmatprep.subr.mxu0 0.0
  %473 = vmatpush1.msra.mxu0 0.0
  %474 = vmatprep.subr.mxu0 0.0
  %475 = vmatpush1.msra.mxu0 0.0
  %476 = vmatprep.subr.mxu0 0.0
  %477 = vmatpush1.msra.mxu0 0.0
  %478 = vmatprep.subr.mxu0 0.0
  %479 = vmatpush1.msra.mxu0 0.0
  %480 = vmatprep.mubr.f32.mxu0 0.0
  %481 = vmatmul.mubr.f32.gmra.mrb[0].mxu0 %v414
  %v482 = vpop.f32.mrb[0].mxu0
  %v483 = vadd.f32 0.0, %v482
  %v484 = vpop.f32.mrb[0].mxu0
  %485 = vdwg.mxu0
  %v486 = vmul.f32 %v483, 0.001953125
  %v488 = vsel %vm66, %v404, 0
  %490 = vmatprep.subr.mxu0 0.0
  %491 = vmatpush1.msra.mxu0 %v405
  %492 = vmatprep.subr.mxu0 0.0
  %493 = vmatpush1.msra.mxu0 %v406
  %494 = vmatprep.subr.mxu0 0.0
  %495 = vmatpush1.msra.mxu0 %v407
  %496 = vmatprep.subr.mxu0 0.0
  %497 = vmatpush1.msra.mxu0 %v408
  %498 = vmatprep.subr.mxu0 0.0
  %499 = vmatpush1.msra.mxu0 %v409
  %500 = vmatprep.subr.mxu0 0.0
  %501 = vmatpush1.msra.mxu0 %v410
  %502 = vmatprep.subr.mxu0 0.0
  %503 = vmatpush1.msra.mxu0 %v411
  %504 = vmatprep.subr.mxu0 0.0
  %505 = vmatpush1.msra.mxu0 %v412
  %506 = vmatprep.subr.mxu0 0.0
  %507 = vmatpush1.msra.mxu0 0.0
  %508 = vmatprep.subr.mxu0 0.0
  %509 = vmatpush1.msra.mxu0 0.0
  %510 = vmatprep.subr.mxu0 0.0
  %511 = vmatpush1.msra.mxu0 0.0
  %512 = vmatprep.subr.mxu0 0.0
  %513 = vmatpush1.msra.mxu0 0.0
  %514 = vmatprep.subr.mxu0 0.0
  %515 = vmatpush1.msra.mxu0 0.0
  %516 = vmatprep.subr.mxu0 0.0
  %517 = vmatpush1.msra.mxu0 0.0
  %518 = vmatprep.subr.mxu0 0.0
  %519 = vmatpush1.msra.mxu0 0.0
  %520 = vmatprep.subr.mxu0 0.0
  %521 = vmatpush1.msra.mxu0 0.0
  %522 = vmatprep.subr.mxu0 0.0
  %523 = vmatpush1.msra.mxu0 0.0
  %524 = vmatprep.subr.mxu0 0.0
  %525 = vmatpush1.msra.mxu0 0.0
  %526 = vmatprep.subr.mxu0 0.0
  %527 = vmatpush1.msra.mxu0 0.0
  %528 = vmatprep.subr.mxu0 0.0
  %529 = vmatpush1.msra.mxu0 0.0
  %530 = vmatprep.subr.mxu0 0.0
  %531 = vmatpush1.msra.mxu0 0.0
  %532 = vmatprep.subr.mxu0 0.0
  %533 = vmatpush1.msra.mxu0 0.0
  %534 = vmatprep.subr.mxu0 0.0
  %535 = vmatpush1.msra.mxu0 0.0
  %536 = vmatprep.subr.mxu0 0.0
  %537 = vmatpush1.msra.mxu0 0.0
  %538 = vmatprep.subr.mxu0 0.0
  %539 = vmatpush1.msra.mxu0 0.0
  %540 = vmatprep.subr.mxu0 0.0
  %541 = vmatpush1.msra.mxu0 0.0
  %542 = vmatprep.subr.mxu0 0.0
  %543 = vmatpush1.msra.mxu0 0.0
  %544 = vmatprep.subr.mxu0 0.0
  %545 = vmatpush1.msra.mxu0 0.0
  %546 = vmatprep.subr.mxu0 0.0
  %547 = vmatpush1.msra.mxu0 0.0
  %548 = vmatprep.subr.mxu0 0.0
  %549 = vmatpush1.msra.mxu0 0.0
  %550 = vmatprep.subr.mxu0 0.0
  %551 = vmatpush1.msra.mxu0 0.0
  %552 = vmatprep.subr.mxu0 0.0
  %553 = vmatpush1.msra.mxu0 0.0
  %554 = vmatprep.mubr.f32.mxu0 0.0
  %555 = vmatmul.mubr.f32.gmra.mrb[0].mxu0 %v488
  %v556 = vpop.f32.mrb[0].mxu0
  %v557 = vadd.f32 0.0, %v556
  %v558 = vpop.f32.mrb[0].mxu0
  %559 = vdwg.mxu0
  %v560 = vmul.f32 %v557, 0.001953125
  %v561 = vmul.f32 %v486, %v486
  %v562 = vsub.f32 %v560, %v561
  %v563 = vld [vmem:[%s2] sm:$0x1]
  %v564 = vadd.f32 %v562, 1e-05
  %v565 = vrsqrt.pop %v564
  %v566 = vmul.f32 %v563, %v565
  %v567 = vlaneseq
  %v568 = vshrl.u32 %v567, 7
  %v569 = vsub.s32 0, %v568
  %v570 = vrot.slane %v486, %v569
  %v571 = vsub.f32 %v371, %v570
  %v572 = vsub.f32 %v372, %v570
  %v573 = vsub.f32 %v373, %v570
  %v574 = vsub.f32 %v374, %v570
  %v576 = vlaneseq
  %v577 = vshrl.u32 %v576, 7
  %v578 = vsub.s32 0, %v577
  %v579 = vrot.slane %v566, %v578
  %v581 = vmul.f32 %v571, %v579
  %v582 = vmul.f32 %v572, %v579
  %v583 = vmul.f32 %v573, %v579
  %v584 = vmul.f32 %v574, %v579
  %v585 = vld [vmem:[%s3] sm:$0x1]
  %v587 = vlaneseq
  %v588 = vshrl.u32 %v587, 7
  %v589 = vsub.s32 0, %v588
  %v590 = vrot.slane %v585, %v589
  %v592 = vadd.f32 %v581, %v590
  %v593 = vadd.f32 %v582, %v590
  %v594 = vadd.f32 %v583, %v590
  %v595 = vadd.f32 %v584, %v590
  %v596 = vmax.f32 %v592, 0.0
  %v597 = vmax.f32 %v593, 0.0
  %v598 = vmax.f32 %v594, 0.0
  %v599 = vmax.f32 %v595, 0.0
  %vm600 = vcmask 516096
  %601 = vst.msk [vmem:[#allocation2] sm:$0x1] %vm600, 0.0
  %602 = vst.msk [vmem:[#allocation2 + $0x18] sm:$0x1] %vm600, 0.0
  %603 = vst.msk [vmem:[#allocation2 + $0x11] sm:$0x1] %vm600, 0.0
  %604 = vst.msk [vmem:[#allocation2 + $0x29] sm:$0x1] %vm600, 0.0
  %605 = vst.msk [vmem:[#allocation2 + $0x1] sm:$0xff] %vm66, %v596
  %606 = vst.msk [vmem:[#allocation2 + $0x9] sm:$0xff] %vm66, %v597
  %607 = vst.msk [vmem:[#allocation2 + $0x19] sm:$0xff] %vm66, %v598
  %608 = vst.msk [vmem:[#allocation2 + $0x21] sm:$0xff] %vm66, %v599
  %s609 = scalar_lea.vmem %s4, 64
  %v610 = vld [vmem:[%s609] sm:$0xff]
  %v611 = vld [vmem:[%s609 + $0x8] sm:$0xff]
  %v612 = vld [vmem:[%s609 + $0x10] sm:$0xff]
  %v613 = vld [vmem:[%s609 + $0x18] sm:$0xff]
  %v614 = vld [vmem:[%s609 + $0x20] sm:$0xff]
  %v615 = vld [vmem:[%s609 + $0x28] sm:$0xff]
  %v616 = vld [vmem:[%s609 + $0x30] sm:$0xff]
  %v617 = vld [vmem:[%s609 + $0x38] sm:$0xff]
  %v618 = vld [vmem:[#allocation2] sm:$0xff]
  %v619 = vld [vmem:[#allocation2 + $0x8] sm:$0xff]
  %v620 = vld [vmem:[#allocation2 + $0x18] sm:$0xff]
  %v621 = vld [vmem:[#allocation2 + $0x20] sm:$0xff]
  %v622 = vld [vmem:[%s4] sm:$0xff]
  %v623 = vld [vmem:[%s4 + $0x8] sm:$0xff]
  %v624 = vld [vmem:[%s4 + $0x10] sm:$0xff]
  %v625 = vld [vmem:[%s4 + $0x18] sm:$0xff]
  %v626 = vld [vmem:[%s4 + $0x20] sm:$0xff]
  %v627 = vld [vmem:[%s4 + $0x28] sm:$0xff]
  %v628 = vld [vmem:[%s4 + $0x30] sm:$0xff]
  %v629 = vld [vmem:[%s4 + $0x38] sm:$0xff]
  %v631 = vsel %vm66, %v618, 0
  %v634 = vsel %vm66, %v619, 0
  %v637 = vsel %vm66, %v620, 0
  %v640 = vsel %vm66, %v621, 0
  %642 = vmatprep.subr.mxu0 0.0
  %643 = vmatpush1.msra.mxu0 %v622
  %644 = vmatprep.subr.mxu0 0.0
  %645 = vmatpush1.msra.mxu0 %v623
  %646 = vmatprep.subr.mxu0 0.0
  %647 = vmatpush1.msra.mxu0 %v624
  %648 = vmatprep.subr.mxu0 0.0
  %649 = vmatpush1.msra.mxu0 %v625
  %650 = vmatprep.subr.mxu0 0.0
  %651 = vmatpush1.msra.mxu0 %v626
  %652 = vmatprep.subr.mxu0 0.0
  %653 = vmatpush1.msra.mxu0 %v627
  %654 = vmatprep.subr.mxu0 0.0
  %655 = vmatpush1.msra.mxu0 %v628
  %656 = vmatprep.subr.mxu0 0.0
  %657 = vmatpush1.msra.mxu0 %v629
  %658 = vmatprep.subr.mxu0 0.0
  %659 = vmatpush1.msra.mxu0 0.0
  %660 = vmatprep.subr.mxu0 0.0
  %661 = vmatpush1.msra.mxu0 0.0
  %662 = vmatprep.subr.mxu0 0.0
  %663 = vmatpush1.msra.mxu0 0.0
  %664 = vmatprep.subr.mxu0 0.0
  %665 = vmatpush1.msra.mxu0 0.0
  %666 = vmatprep.subr.mxu0 0.0
  %667 = vmatpush1.msra.mxu0 0.0
  %668 = vmatprep.subr.mxu0 0.0
  %669 = vmatpush1.msra.mxu0 0.0
  %670 = vmatprep.subr.mxu0 0.0
  %671 = vmatpush1.msra.mxu0 0.0
  %672 = vmatprep.subr.mxu0 0.0
  %673 = vmatpush1.msra.mxu0 0.0
  %674 = vmatprep.subr.mxu0 0.0
  %675 = vmatpush1.msra.mxu0 0.0
  %676 = vmatprep.subr.mxu0 0.0
  %677 = vmatpush1.msra.mxu0 0.0
  %678 = vmatprep.subr.mxu0 0.0
  %679 = vmatpush1.msra.mxu0 0.0
  %680 = vmatprep.subr.mxu0 0.0
  %681 = vmatpush1.msra.mxu0 0.0
  %682 = vmatprep.subr.mxu0 0.0
  %683 = vmatpush1.msra.mxu0 0.0
  %684 = vmatprep.subr.mxu0 0.0
  %685 = vmatpush1.msra.mxu0 0.0
  %686 = vmatprep.subr.mxu0 0.0
  %687 = vmatpush1.msra.mxu0 0.0
  %688 = vmatprep.subr.mxu0 0.0
  %689 = vmatpush1.msra.mxu0 0.0
  %690 = vmatprep.subr.mxu0 0.0
  %691 = vmatpush1.msra.mxu0 0.0
  %692 = vmatprep.subr.mxu0 0.0
  %693 = vmatpush1.msra.mxu0 0.0
  %694 = vmatprep.subr.mxu0 0.0
  %695 = vmatpush1.msra.mxu0 0.0
  %696 = vmatprep.subr.mxu0 0.0
  %697 = vmatpush1.msra.mxu0 0.0
  %698 = vmatprep.subr.mxu0 0.0
  %699 = vmatpush1.msra.mxu0 0.0
  %700 = vmatprep.subr.mxu0 0.0
  %701 = vmatpush1.msra.mxu0 0.0
  %702 = vmatprep.subr.mxu0 0.0
  %703 = vmatpush1.msra.mxu0 0.0
  %704 = vmatprep.subr.mxu0 0.0
  %705 = vmatpush1.msra.mxu0 0.0
  %706 = vmatprep.mubr.f32.mxu0 0.0
  %707 = vmatmul.mubr.f32.gmra.mrb[0].mxu0 %v631
  %v708 = vpop.f32.mrb[0].mxu0
  %v709 = vadd.f32 0.0, %v708
  %v710 = vpop.f32.mrb[0].mxu0
  %711 = vmatprep.mubr.f32.mxu0 0.0
  %712 = vmatmul.mubr.f32.gmra.mrb[0].mxu0 %v634
  %v713 = vpop.f32.mrb[0].mxu0
  %v714 = vadd.f32 0.0, %v713
  %v715 = vpop.f32.mrb[0].mxu0
  %716 = vmatprep.mubr.f32.mxu0 0.0
  %717 = vmatmul.mubr.f32.gmra.mrb[0].mxu0 %v637
  %v718 = vpop.f32.mrb[0].mxu0
  %v719 = vadd.f32 0.0, %v718
  %v720 = vpop.f32.mrb[0].mxu0
  %721 = vmatprep.mubr.f32.mxu0 0.0
  %722 = vmatmul.mubr.f32.gmra.mrb[0].mxu0 %v640
  %v723 = vpop.f32.mrb[0].mxu0
  %v724 = vadd.f32 0.0, %v723
  %v725 = vpop.f32.mrb[0].mxu0
  %726 = vdwg.mxu0
  %v728 = vsel %vm66, %v596, 0
  %v731 = vsel %vm66, %v597, 0
  %v734 = vsel %vm66, %v598, 0
  %v737 = vsel %vm66, %v599, 0
  %739 = vmatprep.subr.mxu0 0.0
  %740 = vmatpush1.msra.mxu0 %v610
  %741 = vmatprep.subr.mxu0 0.0
  %742 = vmatpush1.msra.mxu0 %v611
  %743 = vmatprep.subr.mxu0 0.0
  %744 = vmatpush1.msra.mxu0 %v612
  %745 = vmatprep.subr.mxu0 0.0
  %746 = vmatpush1.msra.mxu0 %v613
  %747 = vmatprep.subr.mxu0 0.0
  %748 = vmatpush1.msra.mxu0 %v614
  %749 = vmatprep.subr.mxu0 0.0
  %750 = vmatpush1.msra.mxu0 %v615
  %751 = vmatprep.subr.mxu0 0.0
  %752 = vmatpush1.msra.mxu0 %v616
  %753 = vmatprep.subr.mxu0 0.0
  %754 = vmatpush1.msra.mxu0 %v617
  %755 = vmatprep.subr.mxu0 0.0
  %756 = vmatpush1.msra.mxu0 0.0
  %757 = vmatprep.subr.mxu0 0.0
  %758 = vmatpush1.msra.mxu0 0.0
  %759 = vmatprep.subr.mxu0 0.0
  %760 = vmatpush1.msra.mxu0 0.0
  %761 = vmatprep.subr.mxu0 0.0
  %762 = vmatpush1.msra.mxu0 0.0
  %763 = vmatprep.subr.mxu0 0.0
  %764 = vmatpush1.msra.mxu0 0.0
  %765 = vmatprep.subr.mxu0 0.0
  %766 = vmatpush1.msra.mxu0 0.0
  %767 = vmatprep.subr.mxu0 0.0
  %768 = vmatpush1.msra.mxu0 0.0
  %769 = vmatprep.subr.mxu0 0.0
  %770 = vmatpush1.msra.mxu0 0.0
  %771 = vmatprep.subr.mxu0 0.0
  %772 = vmatpush1.msra.mxu0 0.0
  %773 = vmatprep.subr.mxu0 0.0
  %774 = vmatpush1.msra.mxu0 0.0
  %775 = vmatprep.subr.mxu0 0.0
  %776 = vmatpush1.msra.mxu0 0.0
  %777 = vmatprep.subr.mxu0 0.0
  %778 = vmatpush1.msra.mxu0 0.0
  %779 = vmatprep.subr.mxu0 0.0
  %780 = vmatpush1.msra.mxu0 0.0
  %781 = vmatprep.subr.mxu0 0.0
  %782 = vmatpush1.msra.mxu0 0.0
  %783 = vmatprep.subr.mxu0 0.0
  %784 = vmatpush1.msra.mxu0 0.0
  %785 = vmatprep.subr.mxu0 0.0
  %786 = vmatpush1.msra.mxu0 0.0
  %787 = vmatprep.subr.mxu0 0.0
  %788 = vmatpush1.msra.mxu0 0.0
  %789 = vmatprep.subr.mxu0 0.0
  %790 = vmatpush1.msra.mxu0 0.0
  %791 = vmatprep.subr.mxu0 0.0
  %792 = vmatpush1.msra.mxu0 0.0
  %793 = vmatprep.subr.mxu0 0.0
  %794 = vmatpush1.msra.mxu0 0.0
  %795 = vmatprep.subr.mxu0 0.0
  %796 = vmatpush1.msra.mxu0 0.0
  %797 = vmatprep.subr.mxu0 0.0
  %798 = vmatpush1.msra.mxu0 0.0
  %799 = vmatprep.subr.mxu0 0.0
  %800 = vmatpush1.msra.mxu0 0.0
  %801 = vmatprep.subr.mxu0 0.0
  %802 = vmatpush1.msra.mxu0 0.0
  %803 = vmatprep.mubr.f32.mxu0 0.0
  %804 = vmatmul.mubr.f32.gmra.mrb[0].mxu0 %v728
  %v805 = vpop.f32.mrb[0].mxu0
  %v806 = vadd.f32 %v709, %v805
  %v807 = vpop.f32.mrb[0].mxu0
  %808 = vmatprep.mubr.f32.mxu0 0.0
  %809 = vmatmul.mubr.f32.gmra.mrb[0].mxu0 %v731
  %v810 = vpop.f32.mrb[0].mxu0
  %v811 = vadd.f32 %v714, %v810
  %v812 = vpop.f32.mrb[0].mxu0
  %813 = vmatprep.mubr.f32.mxu0 0.0
  %814 = vmatmul.mubr.f32.gmra.mrb[0].mxu0 %v734
  %v815 = vpop.f32.mrb[0].mxu0
  %v816 = vadd.f32 %v719, %v815
  %v817 = vpop.f32.mrb[0].mxu0
  %818 = vmatprep.mubr.f32.mxu0 0.0
  %819 = vmatmul.mubr.f32.gmra.mrb[0].mxu0 %v737
  %v820 = vpop.f32.mrb[0].mxu0
  %v821 = vadd.f32 %v724, %v820
  %v822 = vpop.f32.mrb[0].mxu0
  %823 = vdwg.mxu0
  %v824 = vld [vmem:[#allocation2 + $0x2] sm:$0xff]
  %v825 = vld [vmem:[#allocation2 + $0xa] sm:$0xff]
  %v826 = vld [vmem:[#allocation2 + $0x1a] sm:$0xff]
  %v827 = vld [vmem:[#allocation2 + $0x22] sm:$0xff]
  %s828 = scalar_lea.vmem %s4, 128
  %v829 = vld [vmem:[%s828] sm:$0xff]
  %v830 = vld [vmem:[%s828 + $0x8] sm:$0xff]
  %v831 = vld [vmem:[%s828 + $0x10] sm:$0xff]
  %v832 = vld [vmem:[%s828 + $0x18] sm:$0xff]
  %v833 = vld [vmem:[%s828 + $0x20] sm:$0xff]
  %v834 = vld [vmem:[%s828 + $0x28] sm:$0xff]
  %v835 = vld [vmem:[%s828 + $0x30] sm:$0xff]
  %v836 = vld [vmem:[%s828 + $0x38] sm:$0xff]
  %v838 = vsel %vm66, %v824, 0
  %v841 = vsel %vm66, %v825, 0
  %v844 = vsel %vm66, %v826, 0
  %v847 = vsel %vm66, %v827, 0
  %849 = vmatprep.subr.mxu0 0.0
  %850 = vmatpush1.msra.mxu0 %v829
  %851 = vmatprep.subr.mxu0 0.0
  %852 = vmatpush1.msra.mxu0 %v830
  %853 = vmatprep.subr.mxu0 0.0
  %854 = vmatpush1.msra.mxu0 %v831
  %855 = vmatprep.subr.mxu0 0.0
  %856 = vmatpush1.msra.mxu0 %v832
  %857 = vmatprep.subr.mxu0 0.0
  %858 = vmatpush1.msra.mxu0 %v833
  %859 = vmatprep.subr.mxu0 0.0
  %860 = vmatpush1.msra.mxu0 %v834
  %861 = vmatprep.subr.mxu0 0.0
  %862 = vmatpush1.msra.mxu0 %v835
  %863 = vmatprep.subr.mxu0 0.0
  %864 = vmatpush1.msra.mxu0 %v836
  %865 = vmatprep.subr.mxu0 0.0
  %866 = vmatpush1.msra.mxu0 0.0
  %867 = vmatprep.subr.mxu0 0.0
  %868 = vmatpush1.msra.mxu0 0.0
  %869 = vmatprep.subr.mxu0 0.0
  %870 = vmatpush1.msra.mxu0 0.0
  %871 = vmatprep.subr.mxu0 0.0
  %872 = vmatpush1.msra.mxu0 0.0
  %873 = vmatprep.subr.mxu0 0.0
  %874 = vmatpush1.msra.mxu0 0.0
  %875 = vmatprep.subr.mxu0 0.0
  %876 = vmatpush1.msra.mxu0 0.0
  %877 = vmatprep.subr.mxu0 0.0
  %878 = vmatpush1.msra.mxu0 0.0
  %879 = vmatprep.subr.mxu0 0.0
  %880 = vmatpush1.msra.mxu0 0.0
  %881 = vmatprep.subr.mxu0 0.0
  %882 = vmatpush1.msra.mxu0 0.0
  %883 = vmatprep.subr.mxu0 0.0
  %884 = vmatpush1.msra.mxu0 0.0
  %885 = vmatprep.subr.mxu0 0.0
  %886 = vmatpush1.msra.mxu0 0.0
  %887 = vmatprep.subr.mxu0 0.0
  %888 = vmatpush1.msra.mxu0 0.0
  %889 = vmatprep.subr.mxu0 0.0
  %890 = vmatpush1.msra.mxu0 0.0
  %891 = vmatprep.subr.mxu0 0.0
  %892 = vmatpush1.msra.mxu0 0.0
  %893 = vmatprep.subr.mxu0 0.0
  %894 = vmatpush1.msra.mxu0 0.0
  %895 = vmatprep.subr.mxu0 0.0
  %896 = vmatpush1.msra.mxu0 0.0
  %897 = vmatprep.subr.mxu0 0.0
  %898 = vmatpush1.msra.mxu0 0.0
  %899 = vmatprep.subr.mxu0 0.0
  %900 = vmatpush1.msra.mxu0 0.0
  %901 = vmatprep.subr.mxu0 0.0
  %902 = vmatpush1.msra.mxu0 0.0
  %903 = vmatprep.subr.mxu0 0.0
  %904 = vmatpush1.msra.mxu0 0.0
  %905 = vmatprep.subr.mxu0 0.0
  %906 = vmatpush1.msra.mxu0 0.0
  %907 = vmatprep.subr.mxu0 0.0
  %908 = vmatpush1.msra.mxu0 0.0
  %909 = vmatprep.subr.mxu0 0.0
  %910 = vmatpush1.msra.mxu0 0.0
  %911 = vmatprep.subr.mxu0 0.0
  %912 = vmatpush1.msra.mxu0 0.0
  %913 = vmatprep.mubr.f32.mxu0 0.0
  %914 = vmatmul.mubr.f32.gmra.mrb[0].mxu0 %v838
  %v915 = vpop.f32.mrb[0].mxu0
  %v916 = vadd.f32 0.0, %v915
  %v917 = vpop.f32.mrb[0].mxu0
  %918 = vmatprep.mubr.f32.mxu0 0.0
  %919 = vmatmul.mubr.f32.gmra.mrb[0].mxu0 %v841
  %v920 = vpop.f32.mrb[0].mxu0
  %v921 = vadd.f32 0.0, %v920
  %v922 = vpop.f32.mrb[0].mxu0
  %923 = vmatprep.mubr.f32.mxu0 0.0
  %924 = vmatmul.mubr.f32.gmra.mrb[0].mxu0 %v844
  %v925 = vpop.f32.mrb[0].mxu0
  %v926 = vadd.f32 0.0, %v925
  %v927 = vpop.f32.mrb[0].mxu0
  %928 = vmatprep.mubr.f32.mxu0 0.0
  %929 = vmatmul.mubr.f32.gmra.mrb[0].mxu0 %v847
  %v930 = vpop.f32.mrb[0].mxu0
  %v931 = vadd.f32 0.0, %v930
  %v932 = vpop.f32.mrb[0].mxu0
  %933 = vdwg.mxu0
  %v934 = vadd.f32 %v806, %v916
  %v935 = vadd.f32 %v811, %v921
  %v936 = vadd.f32 %v816, %v926
  %v937 = vadd.f32 %v821, %v931
  %v938 = vsel %vm66, %v934, 0.0
  %v939 = vsel %vm66, %v935, 0.0
  %v940 = vadd.f32 %v938, %v939
  %v941 = vsel %vm66, %v936, 0.0
  %v942 = vadd.f32 %v940, %v941
  %v943 = vsel %vm66, %v937, 0.0
  %v944 = vadd.f32 %v942, %v943
  %v945 = vrot.slane %v944, 4
  %v946 = vadd.f32 %v944, %v945
  %v947 = vrot.slane %v946, 2
  %v948 = vadd.f32 %v946, %v947
  %v949 = vrot.slane %v948, 1
  %v950 = vadd.f32 %v948, %v949
  %v951 = vmul.f32 %v934, %v934
  %v952 = vmul.f32 %v935, %v935
  %v953 = vmul.f32 %v936, %v936
  %v954 = vmul.f32 %v937, %v937
  %v955 = vsel %vm66, %v951, 0.0
  %v956 = vsel %vm66, %v952, 0.0
  %v957 = vadd.f32 %v955, %v956
  %v958 = vsel %vm66, %v953, 0.0
  %v959 = vadd.f32 %v957, %v958
  %v960 = vsel %vm66, %v954, 0.0
  %v961 = vadd.f32 %v959, %v960
  %v962 = vrot.slane %v961, 4
  %v963 = vadd.f32 %v961, %v962
  %v964 = vrot.slane %v963, 2
  %v965 = vadd.f32 %v963, %v964
  %v966 = vrot.slane %v965, 1
  %v967 = vadd.f32 %v965, %v966
  %v968 = vld [vmem:[%s8] sm:$0xff]
  %v969 = vld [vmem:[%s8 + $0x8] sm:$0xff]
  %v970 = vld [vmem:[%s8 + $0x10] sm:$0xff]
  %v971 = vld [vmem:[%s8 + $0x18] sm:$0xff]
  %v972 = vld [vmem:[%s8 + $0x20] sm:$0xff]
  %v973 = vld [vmem:[%s8 + $0x28] sm:$0xff]
  %v974 = vld [vmem:[%s8 + $0x30] sm:$0xff]
  %v975 = vld [vmem:[%s8 + $0x38] sm:$0xff]
  %v977 = vsel %vm66, %v950, 0
  %979 = vmatprep.subr.mxu0 0.0
  %980 = vmatpush1.msra.mxu0 %v968
  %981 = vmatprep.subr.mxu0 0.0
  %982 = vmatpush1.msra.mxu0 %v969
  %983 = vmatprep.subr.mxu0 0.0
  %984 = vmatpush1.msra.mxu0 %v970
  %985 = vmatprep.subr.mxu0 0.0
  %986 = vmatpush1.msra.mxu0 %v971
  %987 = vmatprep.subr.mxu0 0.0
  %988 = vmatpush1.msra.mxu0 %v972
  %989 = vmatprep.subr.mxu0 0.0
  %990 = vmatpush1.msra.mxu0 %v973
  %991 = vmatprep.subr.mxu0 0.0
  %992 = vmatpush1.msra.mxu0 %v974
  %993 = vmatprep.subr.mxu0 0.0
  %994 = vmatpush1.msra.mxu0 %v975
  %995 = vmatprep.subr.mxu0 0.0
  %996 = vmatpush1.msra.mxu0 0.0
  %997 = vmatprep.subr.mxu0 0.0
  %998 = vmatpush1.msra.mxu0 0.0
  %999 = vmatprep.subr.mxu0 0.0
  %1000 = vmatpush1.msra.mxu0 0.0
  %1001 = vmatprep.subr.mxu0 0.0
  %1002 = vmatpush1.msra.mxu0 0.0
  %1003 = vmatprep.subr.mxu0 0.0
  %1004 = vmatpush1.msra.mxu0 0.0
  %1005 = vmatprep.subr.mxu0 0.0
  %1006 = vmatpush1.msra.mxu0 0.0
  %1007 = vmatprep.subr.mxu0 0.0
  %1008 = vmatpush1.msra.mxu0 0.0
  %1009 = vmatprep.subr.mxu0 0.0
  %1010 = vmatpush1.msra.mxu0 0.0
  %1011 = vmatprep.subr.mxu0 0.0
  %1012 = vmatpush1.msra.mxu0 0.0
  %1013 = vmatprep.subr.mxu0 0.0
  %1014 = vmatpush1.msra.mxu0 0.0
  %1015 = vmatprep.subr.mxu0 0.0
  %1016 = vmatpush1.msra.mxu0 0.0
  %1017 = vmatprep.subr.mxu0 0.0
  %1018 = vmatpush1.msra.mxu0 0.0
  %1019 = vmatprep.subr.mxu0 0.0
  %1020 = vmatpush1.msra.mxu0 0.0
  %1021 = vmatprep.subr.mxu0 0.0
  %1022 = vmatpush1.msra.mxu0 0.0
  %1023 = vmatprep.subr.mxu0 0.0
  %1024 = vmatpush1.msra.mxu0 0.0
  %1025 = vmatprep.subr.mxu0 0.0
  %1026 = vmatpush1.msra.mxu0 0.0
  %1027 = vmatprep.subr.mxu0 0.0
  %1028 = vmatpush1.msra.mxu0 0.0
  %1029 = vmatprep.subr.mxu0 0.0
  %1030 = vmatpush1.msra.mxu0 0.0
  %1031 = vmatprep.subr.mxu0 0.0
  %1032 = vmatpush1.msra.mxu0 0.0
  %1033 = vmatprep.subr.mxu0 0.0
  %1034 = vmatpush1.msra.mxu0 0.0
  %1035 = vmatprep.subr.mxu0 0.0
  %1036 = vmatpush1.msra.mxu0 0.0
  %1037 = vmatprep.subr.mxu0 0.0
  %1038 = vmatpush1.msra.mxu0 0.0
  %1039 = vmatprep.subr.mxu0 0.0
  %1040 = vmatpush1.msra.mxu0 0.0
  %1041 = vmatprep.subr.mxu0 0.0
  %1042 = vmatpush1.msra.mxu0 0.0
  %1043 = vmatprep.mubr.f32.mxu0 0.0
  %1044 = vmatmul.mubr.f32.gmra.mrb[0].mxu0 %v977
  %v1045 = vpop.f32.mrb[0].mxu0
  %v1046 = vadd.f32 0.0, %v1045
  %v1047 = vpop.f32.mrb[0].mxu0
  %1048 = vdwg.mxu0
  %v1049 = vmul.f32 %v1046, 0.001953125
  %v1051 = vsel %vm66, %v967, 0
  %1053 = vmatprep.subr.mxu0 0.0
  %1054 = vmatpush1.msra.mxu0 %v968
  %1055 = vmatprep.subr.mxu0 0.0
  %1056 = vmatpush1.msra.mxu0 %v969
  %1057 = vmatprep.subr.mxu0 0.0
  %1058 = vmatpush1.msra.mxu0 %v970
  %1059 = vmatprep.subr.mxu0 0.0
  %1060 = vmatpush1.msra.mxu0 %v971
  %1061 = vmatprep.subr.mxu0 0.0
  %1062 = vmatpush1.msra.mxu0 %v972
  %1063 = vmatprep.subr.mxu0 0.0
  %1064 = vmatpush1.msra.mxu0 %v973
  %1065 = vmatprep.subr.mxu0 0.0
  %1066 = vmatpush1.msra.mxu0 %v974
  %1067 = vmatprep.subr.mxu0 0.0
  %1068 = vmatpush1.msra.mxu0 %v975
  %1069 = vmatprep.subr.mxu0 0.0
  %1070 = vmatpush1.msra.mxu0 0.0
  %1071 = vmatprep.subr.mxu0 0.0
  %1072 = vmatpush1.msra.mxu0 0.0
  %1073 = vmatprep.subr.mxu0 0.0
  %1074 = vmatpush1.msra.mxu0 0.0
  %1075 = vmatprep.subr.mxu0 0.0
  %1076 = vmatpush1.msra.mxu0 0.0
  %1077 = vmatprep.subr.mxu0 0.0
  %1078 = vmatpush1.msra.mxu0 0.0
  %1079 = vmatprep.subr.mxu0 0.0
  %1080 = vmatpush1.msra.mxu0 0.0
  %1081 = vmatprep.subr.mxu0 0.0
  %1082 = vmatpush1.msra.mxu0 0.0
  %1083 = vmatprep.subr.mxu0 0.0
  %1084 = vmatpush1.msra.mxu0 0.0
  %1085 = vmatprep.subr.mxu0 0.0
  %1086 = vmatpush1.msra.mxu0 0.0
  %1087 = vmatprep.subr.mxu0 0.0
  %1088 = vmatpush1.msra.mxu0 0.0
  %1089 = vmatprep.subr.mxu0 0.0
  %1090 = vmatpush1.msra.mxu0 0.0
  %1091 = vmatprep.subr.mxu0 0.0
  %1092 = vmatpush1.msra.mxu0 0.0
  %1093 = vmatprep.subr.mxu0 0.0
  %1094 = vmatpush1.msra.mxu0 0.0
  %1095 = vmatprep.subr.mxu0 0.0
  %1096 = vmatpush1.msra.mxu0 0.0
  %1097 = vmatprep.subr.mxu0 0.0
  %1098 = vmatpush1.msra.mxu0 0.0
  %1099 = vmatprep.subr.mxu0 0.0
  %1100 = vmatpush1.msra.mxu0 0.0
  %1101 = vmatprep.subr.mxu0 0.0
  %1102 = vmatpush1.msra.mxu0 0.0
  %1103 = vmatprep.subr.mxu0 0.0
  %1104 = vmatpush1.msra.mxu0 0.0
  %1105 = vmatprep.subr.mxu0 0.0
  %1106 = vmatpush1.msra.mxu0 0.0
  %1107 = vmatprep.subr.mxu0 0.0
  %1108 = vmatpush1.msra.mxu0 0.0
  %1109 = vmatprep.subr.mxu0 0.0
  %1110 = vmatpush1.msra.mxu0 0.0
  %1111 = vmatprep.subr.mxu0 0.0
  %1112 = vmatpush1.msra.mxu0 0.0
  %1113 = vmatprep.subr.mxu0 0.0
  %1114 = vmatpush1.msra.mxu0 0.0
  %1115 = vmatprep.subr.mxu0 0.0
  %1116 = vmatpush1.msra.mxu0 0.0
  %1117 = vmatprep.mubr.f32.mxu0 0.0
  %1118 = vmatmul.mubr.f32.gmra.mrb[0].mxu0 %v1051
  %v1119 = vpop.f32.mrb[0].mxu0
  %v1120 = vadd.f32 0.0, %v1119
  %v1121 = vpop.f32.mrb[0].mxu0
  %1122 = vdwg.mxu0
  %v1123 = vmul.f32 %v1120, 0.001953125
  %v1124 = vmul.f32 %v1049, %v1049
  %v1125 = vsub.f32 %v1123, %v1124
  %v1126 = vld [vmem:[%s5] sm:$0x1]
  %v1127 = vadd.f32 %v1125, 1e-05
  %v1128 = vrsqrt.pop %v1127
  %v1129 = vmul.f32 %v1126, %v1128
  %v1130 = vlaneseq
  %v1131 = vshrl.u32 %v1130, 7
  %v1132 = vsub.s32 0, %v1131
  %v1133 = vrot.slane %v1049, %v1132
  %v1134 = vsub.f32 %v934, %v1133
  %v1135 = vsub.f32 %v935, %v1133
  %v1136 = vsub.f32 %v936, %v1133
  %v1137 = vsub.f32 %v937, %v1133
  %v1139 = vlaneseq
  %v1140 = vshrl.u32 %v1139, 7
  %v1141 = vsub.s32 0, %v1140
  %v1142 = vrot.slane %v1129, %v1141
  %v1144 = vmul.f32 %v1134, %v1142
  %v1145 = vmul.f32 %v1135, %v1142
  %v1146 = vmul.f32 %v1136, %v1142
  %v1147 = vmul.f32 %v1137, %v1142
  %v1148 = vld [vmem:[%s6] sm:$0x1]
  %v1150 = vlaneseq
  %v1151 = vshrl.u32 %v1150, 7
  %v1152 = vsub.s32 0, %v1151
  %v1153 = vrot.slane %v1148, %v1152
  %v1155 = vadd.f32 %v1144, %v1153
  %v1156 = vadd.f32 %v1145, %v1153
  %v1157 = vadd.f32 %v1146, %v1153
  %v1158 = vadd.f32 %v1147, %v1153
  %v1159 = vld [vmem:[%s9] sm:$0xff]
  %v1160 = vld [vmem:[%s9 + $0x8] sm:$0xff]
  %v1161 = vld [vmem:[%s9 + $0x10] sm:$0xff]
  %v1162 = vld [vmem:[%s9 + $0x18] sm:$0xff]
  %v1163 = vld [vmem:[%s9 + $0x20] sm:$0xff]
  %v1164 = vld [vmem:[%s9 + $0x28] sm:$0xff]
  %v1165 = vld [vmem:[%s9 + $0x30] sm:$0xff]
  %v1166 = vld [vmem:[%s9 + $0x38] sm:$0xff]
  %v1168 = vsel %vm66, %v1155, 0
  %v1171 = vsel %vm66, %v1156, 0
  %v1174 = vsel %vm66, %v1157, 0
  %v1177 = vsel %vm66, %v1158, 0
  %1179 = vmatprep.subr.mxu0 0.0
  %1180 = vmatpush1.msra.mxu0 %v1159
  %1181 = vmatprep.subr.mxu0 0.0
  %1182 = vmatpush1.msra.mxu0 %v1160
  %1183 = vmatprep.subr.mxu0 0.0
  %1184 = vmatpush1.msra.mxu0 %v1161
  %1185 = vmatprep.subr.mxu0 0.0
  %1186 = vmatpush1.msra.mxu0 %v1162
  %1187 = vmatprep.subr.mxu0 0.0
  %1188 = vmatpush1.msra.mxu0 %v1163
  %1189 = vmatprep.subr.mxu0 0.0
  %1190 = vmatpush1.msra.mxu0 %v1164
  %1191 = vmatprep.subr.mxu0 0.0
  %1192 = vmatpush1.msra.mxu0 %v1165
  %1193 = vmatprep.subr.mxu0 0.0
  %1194 = vmatpush1.msra.mxu0 %v1166
  %1195 = vmatprep.subr.mxu0 0.0
  %1196 = vmatpush1.msra.mxu0 0.0
  %1197 = vmatprep.subr.mxu0 0.0
  %1198 = vmatpush1.msra.mxu0 0.0
  %1199 = vmatprep.subr.mxu0 0.0
  %1200 = vmatpush1.msra.mxu0 0.0
  %1201 = vmatprep.subr.mxu0 0.0
  %1202 = vmatpush1.msra.mxu0 0.0
  %1203 = vmatprep.subr.mxu0 0.0
  %1204 = vmatpush1.msra.mxu0 0.0
  %1205 = vmatprep.subr.mxu0 0.0
  %1206 = vmatpush1.msra.mxu0 0.0
  %1207 = vmatprep.subr.mxu0 0.0
  %1208 = vmatpush1.msra.mxu0 0.0
  %1209 = vmatprep.subr.mxu0 0.0
  %1210 = vmatpush1.msra.mxu0 0.0
  %1211 = vmatprep.subr.mxu0 0.0
  %1212 = vmatpush1.msra.mxu0 0.0
  %1213 = vmatprep.subr.mxu0 0.0
  %1214 = vmatpush1.msra.mxu0 0.0
  %1215 = vmatprep.subr.mxu0 0.0
  %1216 = vmatpush1.msra.mxu0 0.0
  %1217 = vmatprep.subr.mxu0 0.0
  %1218 = vmatpush1.msra.mxu0 0.0
  %1219 = vmatprep.subr.mxu0 0.0
  %1220 = vmatpush1.msra.mxu0 0.0
  %1221 = vmatprep.subr.mxu0 0.0
  %1222 = vmatpush1.msra.mxu0 0.0
  %1223 = vmatprep.subr.mxu0 0.0
  %1224 = vmatpush1.msra.mxu0 0.0
  %1225 = vmatprep.subr.mxu0 0.0
  %1226 = vmatpush1.msra.mxu0 0.0
  %1227 = vmatprep.subr.mxu0 0.0
  %1228 = vmatpush1.msra.mxu0 0.0
  %1229 = vmatprep.subr.mxu0 0.0
  %1230 = vmatpush1.msra.mxu0 0.0
  %1231 = vmatprep.subr.mxu0 0.0
  %1232 = vmatpush1.msra.mxu0 0.0
  %1233 = vmatprep.subr.mxu0 0.0
  %1234 = vmatpush1.msra.mxu0 0.0
  %1235 = vmatprep.subr.mxu0 0.0
  %1236 = vmatpush1.msra.mxu0 0.0
  %1237 = vmatprep.subr.mxu0 0.0
  %1238 = vmatpush1.msra.mxu0 0.0
  %1239 = vmatprep.subr.mxu0 0.0
  %1240 = vmatpush1.msra.mxu0 0.0
  %1241 = vmatprep.subr.mxu0 0.0
  %1242 = vmatpush1.msra.mxu0 0.0
  %1243 = vmatprep.mubr.f32.mxu0 0.0
  %1244 = vmatmul.mubr.f32.gmra.mrb[0].mxu0 %v1168
  %v1245 = vpop.f32.mrb[0].mxu0
  %v1246 = vadd.f32 0.0, %v1245
  %v1247 = vpop.f32.mrb[0].mxu0
  %1248 = vmatprep.mubr.f32.mxu0 0.0
  %1249 = vmatmul.mubr.f32.gmra.mrb[0].mxu0 %v1171
  %v1250 = vpop.f32.mrb[0].mxu0
  %v1251 = vadd.f32 0.0, %v1250
  %v1252 = vpop.f32.mrb[0].mxu0
  %1253 = vmatprep.mubr.f32.mxu0 0.0
  %1254 = vmatmul.mubr.f32.gmra.mrb[0].mxu0 %v1174
  %v1255 = vpop.f32.mrb[0].mxu0
  %v1256 = vadd.f32 0.0, %v1255
  %v1257 = vpop.f32.mrb[0].mxu0
  %1258 = vmatprep.mubr.f32.mxu0 0.0
  %1259 = vmatmul.mubr.f32.gmra.mrb[0].mxu0 %v1177
  %v1260 = vpop.f32.mrb[0].mxu0
  %v1261 = vadd.f32 0.0, %v1260
  %v1262 = vpop.f32.mrb[0].mxu0
  %1263 = vdwg.mxu0
  %v1264 = vmul.f32 %v1246, 0.25
  %v1265 = vmul.f32 %v1251, 0.25
  %v1266 = vmul.f32 %v1256, 0.25
  %v1267 = vmul.f32 %v1261, 0.25
  %v1268 = vld [vmem:[%s11] sm:$0x1]
  %v1269 = vlaneseq
  %v1270 = vshrl.u32 %v1269, 7
  %v1271 = vsub.s32 0, %v1270
  %v1272 = vrot.slane %v1268, %v1271
  %v1273 = vmul.f32 %v1155, %v1272
  %v1274 = vmul.f32 %v1156, %v1272
  %v1275 = vmul.f32 %v1157, %v1272
  %v1276 = vmul.f32 %v1158, %v1272
  %v1278 = vsel %vm66, %v1273, 0
  %v1281 = vsel %vm66, %v1274, 0
  %v1284 = vsel %vm66, %v1275, 0
  %v1287 = vsel %vm66, %v1276, 0
  %1289 = vmatprep.subr.mxu0 0.0
  %1290 = vmatpush1.msra.mxu0 %v1159
  %1291 = vmatprep.subr.mxu0 0.0
  %1292 = vmatpush1.msra.mxu0 %v1160
  %1293 = vmatprep.subr.mxu0 0.0
  %1294 = vmatpush1.msra.mxu0 %v1161
  %1295 = vmatprep.subr.mxu0 0.0
  %1296 = vmatpush1.msra.mxu0 %v1162
  %1297 = vmatprep.subr.mxu0 0.0
  %1298 = vmatpush1.msra.mxu0 %v1163
  %1299 = vmatprep.subr.mxu0 0.0
  %1300 = vmatpush1.msra.mxu0 %v1164
  %1301 = vmatprep.subr.mxu0 0.0
  %1302 = vmatpush1.msra.mxu0 %v1165
  %1303 = vmatprep.subr.mxu0 0.0
  %1304 = vmatpush1.msra.mxu0 %v1166
  %1305 = vmatprep.subr.mxu0 0.0
  %1306 = vmatpush1.msra.mxu0 0.0
  %1307 = vmatprep.subr.mxu0 0.0
  %1308 = vmatpush1.msra.mxu0 0.0
  %1309 = vmatprep.subr.mxu0 0.0
  %1310 = vmatpush1.msra.mxu0 0.0
  %1311 = vmatprep.subr.mxu0 0.0
  %1312 = vmatpush1.msra.mxu0 0.0
  %1313 = vmatprep.subr.mxu0 0.0
  %1314 = vmatpush1.msra.mxu0 0.0
  %1315 = vmatprep.subr.mxu0 0.0
  %1316 = vmatpush1.msra.mxu0 0.0
  %1317 = vmatprep.subr.mxu0 0.0
  %1318 = vmatpush1.msra.mxu0 0.0
  %1319 = vmatprep.subr.mxu0 0.0
  %1320 = vmatpush1.msra.mxu0 0.0
  %1321 = vmatprep.subr.mxu0 0.0
  %1322 = vmatpush1.msra.mxu0 0.0
  %1323 = vmatprep.subr.mxu0 0.0
  %1324 = vmatpush1.msra.mxu0 0.0
  %1325 = vmatprep.subr.mxu0 0.0
  %1326 = vmatpush1.msra.mxu0 0.0
  %1327 = vmatprep.subr.mxu0 0.0
  %1328 = vmatpush1.msra.mxu0 0.0
  %1329 = vmatprep.subr.mxu0 0.0
  %1330 = vmatpush1.msra.mxu0 0.0
  %1331 = vmatprep.subr.mxu0 0.0
  %1332 = vmatpush1.msra.mxu0 0.0
  %1333 = vmatprep.subr.mxu0 0.0
  %1334 = vmatpush1.msra.mxu0 0.0
  %1335 = vmatprep.subr.mxu0 0.0
  %1336 = vmatpush1.msra.mxu0 0.0
  %1337 = vmatprep.subr.mxu0 0.0
  %1338 = vmatpush1.msra.mxu0 0.0
  %1339 = vmatprep.subr.mxu0 0.0
  %1340 = vmatpush1.msra.mxu0 0.0
  %1341 = vmatprep.subr.mxu0 0.0
  %1342 = vmatpush1.msra.mxu0 0.0
  %1343 = vmatprep.subr.mxu0 0.0
  %1344 = vmatpush1.msra.mxu0 0.0
  %1345 = vmatprep.subr.mxu0 0.0
  %1346 = vmatpush1.msra.mxu0 0.0
  %1347 = vmatprep.subr.mxu0 0.0
  %1348 = vmatpush1.msra.mxu0 0.0
  %1349 = vmatprep.subr.mxu0 0.0
  %1350 = vmatpush1.msra.mxu0 0.0
  %1351 = vmatprep.subr.mxu0 0.0
  %1352 = vmatpush1.msra.mxu0 0.0
  %1353 = vmatprep.mubr.f32.mxu0 0.0
  %1354 = vmatmul.mubr.f32.gmra.mrb[0].mxu0 %v1278
  %v1355 = vpop.f32.mrb[0].mxu0
  %v1356 = vadd.f32 0.0, %v1355
  %v1357 = vpop.f32.mrb[0].mxu0
  %1358 = vmatprep.mubr.f32.mxu0 0.0
  %1359 = vmatmul.mubr.f32.gmra.mrb[0].mxu0 %v1281
  %v1360 = vpop.f32.mrb[0].mxu0
  %v1361 = vadd.f32 0.0, %v1360
  %v1362 = vpop.f32.mrb[0].mxu0
  %1363 = vmatprep.mubr.f32.mxu0 0.0
  %1364 = vmatmul.mubr.f32.gmra.mrb[0].mxu0 %v1284
  %v1365 = vpop.f32.mrb[0].mxu0
  %v1366 = vadd.f32 0.0, %v1365
  %v1367 = vpop.f32.mrb[0].mxu0
  %1368 = vmatprep.mubr.f32.mxu0 0.0
  %1369 = vmatmul.mubr.f32.gmra.mrb[0].mxu0 %v1287
  %v1370 = vpop.f32.mrb[0].mxu0
  %v1371 = vadd.f32 0.0, %v1370
  %v1372 = vpop.f32.mrb[0].mxu0
  %1373 = vdwg.mxu0
  %v1374 = vld [vmem:[%s11 + $0x1] sm:$0x1]
  %v1375 = vlaneseq
  %v1376 = vshrl.u32 %v1375, 7
  %v1377 = vsub.s32 0, %v1376
  %v1378 = vrot.slane %v1374, %v1377
  %v1379 = vmul.f32 %v1155, %v1378
  %v1380 = vmul.f32 %v1156, %v1378
  %v1381 = vmul.f32 %v1157, %v1378
  %v1382 = vmul.f32 %v1158, %v1378
  %v1384 = vsel %vm66, %v1379, 0
  %v1387 = vsel %vm66, %v1380, 0
  %v1390 = vsel %vm66, %v1381, 0
  %v1393 = vsel %vm66, %v1382, 0
  %1395 = vmatprep.subr.mxu0 0.0
  %1396 = vmatpush1.msra.mxu0 %v1159
  %1397 = vmatprep.subr.mxu0 0.0
  %1398 = vmatpush1.msra.mxu0 %v1160
  %1399 = vmatprep.subr.mxu0 0.0
  %1400 = vmatpush1.msra.mxu0 %v1161
  %1401 = vmatprep.subr.mxu0 0.0
  %1402 = vmatpush1.msra.mxu0 %v1162
  %1403 = vmatprep.subr.mxu0 0.0
  %1404 = vmatpush1.msra.mxu0 %v1163
  %1405 = vmatprep.subr.mxu0 0.0
  %1406 = vmatpush1.msra.mxu0 %v1164
  %1407 = vmatprep.subr.mxu0 0.0
  %1408 = vmatpush1.msra.mxu0 %v1165
  %1409 = vmatprep.subr.mxu0 0.0
  %1410 = vmatpush1.msra.mxu0 %v1166
  %1411 = vmatprep.subr.mxu0 0.0
  %1412 = vmatpush1.msra.mxu0 0.0
  %1413 = vmatprep.subr.mxu0 0.0
  %1414 = vmatpush1.msra.mxu0 0.0
  %1415 = vmatprep.subr.mxu0 0.0
  %1416 = vmatpush1.msra.mxu0 0.0
  %1417 = vmatprep.subr.mxu0 0.0
  %1418 = vmatpush1.msra.mxu0 0.0
  %1419 = vmatprep.subr.mxu0 0.0
  %1420 = vmatpush1.msra.mxu0 0.0
  %1421 = vmatprep.subr.mxu0 0.0
  %1422 = vmatpush1.msra.mxu0 0.0
  %1423 = vmatprep.subr.mxu0 0.0
  %1424 = vmatpush1.msra.mxu0 0.0
  %1425 = vmatprep.subr.mxu0 0.0
  %1426 = vmatpush1.msra.mxu0 0.0
  %1427 = vmatprep.subr.mxu0 0.0
  %1428 = vmatpush1.msra.mxu0 0.0
  %1429 = vmatprep.subr.mxu0 0.0
  %1430 = vmatpush1.msra.mxu0 0.0
  %1431 = vmatprep.subr.mxu0 0.0
  %1432 = vmatpush1.msra.mxu0 0.0
  %1433 = vmatprep.subr.mxu0 0.0
  %1434 = vmatpush1.msra.mxu0 0.0
  %1435 = vmatprep.subr.mxu0 0.0
  %1436 = vmatpush1.msra.mxu0 0.0
  %1437 = vmatprep.subr.mxu0 0.0
  %1438 = vmatpush1.msra.mxu0 0.0
  %1439 = vmatprep.subr.mxu0 0.0
  %1440 = vmatpush1.msra.mxu0 0.0
  %1441 = vmatprep.subr.mxu0 0.0
  %1442 = vmatpush1.msra.mxu0 0.0
  %1443 = vmatprep.subr.mxu0 0.0
  %1444 = vmatpush1.msra.mxu0 0.0
  %1445 = vmatprep.subr.mxu0 0.0
  %1446 = vmatpush1.msra.mxu0 0.0
  %1447 = vmatprep.subr.mxu0 0.0
  %1448 = vmatpush1.msra.mxu0 0.0
  %1449 = vmatprep.subr.mxu0 0.0
  %1450 = vmatpush1.msra.mxu0 0.0
  %1451 = vmatprep.subr.mxu0 0.0
  %1452 = vmatpush1.msra.mxu0 0.0
  %1453 = vmatprep.subr.mxu0 0.0
  %1454 = vmatpush1.msra.mxu0 0.0
  %1455 = vmatprep.subr.mxu0 0.0
  %1456 = vmatpush1.msra.mxu0 0.0
  %1457 = vmatprep.subr.mxu0 0.0
  %1458 = vmatpush1.msra.mxu0 0.0
  %1459 = vmatprep.mubr.f32.mxu0 0.0
  %1460 = vmatmul.mubr.f32.gmra.mrb[0].mxu0 %v1384
  %v1461 = vpop.f32.mrb[0].mxu0
  %v1462 = vadd.f32 0.0, %v1461
  %v1463 = vpop.f32.mrb[0].mxu0
  %1464 = vmatprep.mubr.f32.mxu0 0.0
  %1465 = vmatmul.mubr.f32.gmra.mrb[0].mxu0 %v1387
  %v1466 = vpop.f32.mrb[0].mxu0
  %v1467 = vadd.f32 0.0, %v1466
  %v1468 = vpop.f32.mrb[0].mxu0
  %1469 = vmatprep.mubr.f32.mxu0 0.0
  %1470 = vmatmul.mubr.f32.gmra.mrb[0].mxu0 %v1390
  %v1471 = vpop.f32.mrb[0].mxu0
  %v1472 = vadd.f32 0.0, %v1471
  %v1473 = vpop.f32.mrb[0].mxu0
  %1474 = vmatprep.mubr.f32.mxu0 0.0
  %1475 = vmatmul.mubr.f32.gmra.mrb[0].mxu0 %v1393
  %v1476 = vpop.f32.mrb[0].mxu0
  %v1477 = vadd.f32 0.0, %v1476
  %v1478 = vpop.f32.mrb[0].mxu0
  %1479 = vdwg.mxu0
  %v1480 = vmax.f32 %v1356, %v1462
  %v1481 = vmax.f32 %v1361, %v1467
  %v1482 = vmax.f32 %v1366, %v1472
  %v1483 = vmax.f32 %v1371, %v1477
  %v1484 = vld [vmem:[%s11 + $0x2] sm:$0x1]
  %v1485 = vlaneseq
  %v1486 = vshrl.u32 %v1485, 7
  %v1487 = vsub.s32 0, %v1486
  %v1488 = vrot.slane %v1484, %v1487
  %v1489 = vmul.f32 %v1155, %v1488
  %v1490 = vmul.f32 %v1156, %v1488
  %v1491 = vmul.f32 %v1157, %v1488
  %v1492 = vmul.f32 %v1158, %v1488
  %v1494 = vsel %vm66, %v1489, 0
  %v1497 = vsel %vm66, %v1490, 0
  %v1500 = vsel %vm66, %v1491, 0
  %v1503 = vsel %vm66, %v1492, 0
  %1505 = vmatprep.subr.mxu0 0.0
  %1506 = vmatpush1.msra.mxu0 %v1159
  %1507 = vmatprep.subr.mxu0 0.0
  %1508 = vmatpush1.msra.mxu0 %v1160
  %1509 = vmatprep.subr.mxu0 0.0
  %1510 = vmatpush1.msra.mxu0 %v1161
  %1511 = vmatprep.subr.mxu0 0.0
  %1512 = vmatpush1.msra.mxu0 %v1162
  %1513 = vmatprep.subr.mxu0 0.0
  %1514 = vmatpush1.msra.mxu0 %v1163
  %1515 = vmatprep.subr.mxu0 0.0
  %1516 = vmatpush1.msra.mxu0 %v1164
  %1517 = vmatprep.subr.mxu0 0.0
  %1518 = vmatpush1.msra.mxu0 %v1165
  %1519 = vmatprep.subr.mxu0 0.0
  %1520 = vmatpush1.msra.mxu0 %v1166
  %1521 = vmatprep.subr.mxu0 0.0
  %1522 = vmatpush1.msra.mxu0 0.0
  %1523 = vmatprep.subr.mxu0 0.0
  %1524 = vmatpush1.msra.mxu0 0.0
  %1525 = vmatprep.subr.mxu0 0.0
  %1526 = vmatpush1.msra.mxu0 0.0
  %1527 = vmatprep.subr.mxu0 0.0
  %1528 = vmatpush1.msra.mxu0 0.0
  %1529 = vmatprep.subr.mxu0 0.0
  %1530 = vmatpush1.msra.mxu0 0.0
  %1531 = vmatprep.subr.mxu0 0.0
  %1532 = vmatpush1.msra.mxu0 0.0
  %1533 = vmatprep.subr.mxu0 0.0
  %1534 = vmatpush1.msra.mxu0 0.0
  %1535 = vmatprep.subr.mxu0 0.0
  %1536 = vmatpush1.msra.mxu0 0.0
  %1537 = vmatprep.subr.mxu0 0.0
  %1538 = vmatpush1.msra.mxu0 0.0
  %1539 = vmatprep.subr.mxu0 0.0
  %1540 = vmatpush1.msra.mxu0 0.0
  %1541 = vmatprep.subr.mxu0 0.0
  %1542 = vmatpush1.msra.mxu0 0.0
  %1543 = vmatprep.subr.mxu0 0.0
  %1544 = vmatpush1.msra.mxu0 0.0
  %1545 = vmatprep.subr.mxu0 0.0
  %1546 = vmatpush1.msra.mxu0 0.0
  %1547 = vmatprep.subr.mxu0 0.0
  %1548 = vmatpush1.msra.mxu0 0.0
  %1549 = vmatprep.subr.mxu0 0.0
  %1550 = vmatpush1.msra.mxu0 0.0
  %1551 = vmatprep.subr.mxu0 0.0
  %1552 = vmatpush1.msra.mxu0 0.0
  %1553 = vmatprep.subr.mxu0 0.0
  %1554 = vmatpush1.msra.mxu0 0.0
  %1555 = vmatprep.subr.mxu0 0.0
  %1556 = vmatpush1.msra.mxu0 0.0
  %1557 = vmatprep.subr.mxu0 0.0
  %1558 = vmatpush1.msra.mxu0 0.0
  %1559 = vmatprep.subr.mxu0 0.0
  %1560 = vmatpush1.msra.mxu0 0.0
  %1561 = vmatprep.subr.mxu0 0.0
  %1562 = vmatpush1.msra.mxu0 0.0
  %1563 = vmatprep.subr.mxu0 0.0
  %1564 = vmatpush1.msra.mxu0 0.0
  %1565 = vmatprep.subr.mxu0 0.0
  %1566 = vmatpush1.msra.mxu0 0.0
  %1567 = vmatprep.subr.mxu0 0.0
  %1568 = vmatpush1.msra.mxu0 0.0
  %1569 = vmatprep.mubr.f32.mxu0 0.0
  %1570 = vmatmul.mubr.f32.gmra.mrb[0].mxu0 %v1494
  %v1571 = vpop.f32.mrb[0].mxu0
  %v1572 = vadd.f32 0.0, %v1571
  %v1573 = vpop.f32.mrb[0].mxu0
  %1574 = vmatprep.mubr.f32.mxu0 0.0
  %1575 = vmatmul.mubr.f32.gmra.mrb[0].mxu0 %v1497
  %v1576 = vpop.f32.mrb[0].mxu0
  %v1577 = vadd.f32 0.0, %v1576
  %v1578 = vpop.f32.mrb[0].mxu0
  %1579 = vmatprep.mubr.f32.mxu0 0.0
  %1580 = vmatmul.mubr.f32.gmra.mrb[0].mxu0 %v1500
  %v1581 = vpop.f32.mrb[0].mxu0
  %v1582 = vadd.f32 0.0, %v1581
  %v1583 = vpop.f32.mrb[0].mxu0
  %1584 = vmatprep.mubr.f32.mxu0 0.0
  %1585 = vmatmul.mubr.f32.gmra.mrb[0].mxu0 %v1503
  %v1586 = vpop.f32.mrb[0].mxu0
  %v1587 = vadd.f32 0.0, %v1586
  %v1588 = vpop.f32.mrb[0].mxu0
  %1589 = vdwg.mxu0
  %v1590 = vmax.f32 %v1480, %v1572
  %v1591 = vmax.f32 %v1481, %v1577
  %v1592 = vmax.f32 %v1482, %v1582
  %v1593 = vmax.f32 %v1483, %v1587
  %v1594 = vld [vmem:[%s11 + $0x3] sm:$0x1]
  %v1595 = vlaneseq
  %v1596 = vshrl.u32 %v1595, 7
  %v1597 = vsub.s32 0, %v1596
  %v1598 = vrot.slane %v1594, %v1597
  %v1599 = vmul.f32 %v1155, %v1598
  %v1600 = vmul.f32 %v1156, %v1598
  %v1601 = vmul.f32 %v1157, %v1598
  %v1602 = vmul.f32 %v1158, %v1598
  %v1604 = vsel %vm66, %v1599, 0
  %v1607 = vsel %vm66, %v1600, 0
  %v1610 = vsel %vm66, %v1601, 0
  %v1613 = vsel %vm66, %v1602, 0
  %1615 = vmatprep.subr.mxu0 0.0
  %1616 = vmatpush1.msra.mxu0 %v1159
  %1617 = vmatprep.subr.mxu0 0.0
  %1618 = vmatpush1.msra.mxu0 %v1160
  %1619 = vmatprep.subr.mxu0 0.0
  %1620 = vmatpush1.msra.mxu0 %v1161
  %1621 = vmatprep.subr.mxu0 0.0
  %1622 = vmatpush1.msra.mxu0 %v1162
  %1623 = vmatprep.subr.mxu0 0.0
  %1624 = vmatpush1.msra.mxu0 %v1163
  %1625 = vmatprep.subr.mxu0 0.0
  %1626 = vmatpush1.msra.mxu0 %v1164
  %1627 = vmatprep.subr.mxu0 0.0
  %1628 = vmatpush1.msra.mxu0 %v1165
  %1629 = vmatprep.subr.mxu0 0.0
  %1630 = vmatpush1.msra.mxu0 %v1166
  %1631 = vmatprep.subr.mxu0 0.0
  %1632 = vmatpush1.msra.mxu0 0.0
  %1633 = vmatprep.subr.mxu0 0.0
  %1634 = vmatpush1.msra.mxu0 0.0
  %1635 = vmatprep.subr.mxu0 0.0
  %1636 = vmatpush1.msra.mxu0 0.0
  %1637 = vmatprep.subr.mxu0 0.0
  %1638 = vmatpush1.msra.mxu0 0.0
  %1639 = vmatprep.subr.mxu0 0.0
  %1640 = vmatpush1.msra.mxu0 0.0
  %1641 = vmatprep.subr.mxu0 0.0
  %1642 = vmatpush1.msra.mxu0 0.0
  %1643 = vmatprep.subr.mxu0 0.0
  %1644 = vmatpush1.msra.mxu0 0.0
  %1645 = vmatprep.subr.mxu0 0.0
  %1646 = vmatpush1.msra.mxu0 0.0
  %1647 = vmatprep.subr.mxu0 0.0
  %1648 = vmatpush1.msra.mxu0 0.0
  %1649 = vmatprep.subr.mxu0 0.0
  %1650 = vmatpush1.msra.mxu0 0.0
  %1651 = vmatprep.subr.mxu0 0.0
  %1652 = vmatpush1.msra.mxu0 0.0
  %1653 = vmatprep.subr.mxu0 0.0
  %1654 = vmatpush1.msra.mxu0 0.0
  %1655 = vmatprep.subr.mxu0 0.0
  %1656 = vmatpush1.msra.mxu0 0.0
  %1657 = vmatprep.subr.mxu0 0.0
  %1658 = vmatpush1.msra.mxu0 0.0
  %1659 = vmatprep.subr.mxu0 0.0
  %1660 = vmatpush1.msra.mxu0 0.0
  %1661 = vmatprep.subr.mxu0 0.0
  %1662 = vmatpush1.msra.mxu0 0.0
  %1663 = vmatprep.subr.mxu0 0.0
  %1664 = vmatpush1.msra.mxu0 0.0
  %1665 = vmatprep.subr.mxu0 0.0
  %1666 = vmatpush1.msra.mxu0 0.0
  %1667 = vmatprep.subr.mxu0 0.0
  %1668 = vmatpush1.msra.mxu0 0.0
  %1669 = vmatprep.subr.mxu0 0.0
  %1670 = vmatpush1.msra.mxu0 0.0
  %1671 = vmatprep.subr.mxu0 0.0
  %1672 = vmatpush1.msra.mxu0 0.0
  %1673 = vmatprep.subr.mxu0 0.0
  %1674 = vmatpush1.msra.mxu0 0.0
  %1675 = vmatprep.subr.mxu0 0.0
  %1676 = vmatpush1.msra.mxu0 0.0
  %1677 = vmatprep.subr.mxu0 0.0
  %1678 = vmatpush1.msra.mxu0 0.0
  %1679 = vmatprep.mubr.f32.mxu0 0.0
  %1680 = vmatmul.mubr.f32.gmra.mrb[0].mxu0 %v1604
  %v1681 = vpop.f32.mrb[0].mxu0
  %v1682 = vadd.f32 0.0, %v1681
  %v1683 = vpop.f32.mrb[0].mxu0
  %1684 = vmatprep.mubr.f32.mxu0 0.0
  %1685 = vmatmul.mubr.f32.gmra.mrb[0].mxu0 %v1607
  %v1686 = vpop.f32.mrb[0].mxu0
  %v1687 = vadd.f32 0.0, %v1686
  %v1688 = vpop.f32.mrb[0].mxu0
  %1689 = vmatprep.mubr.f32.mxu0 0.0
  %1690 = vmatmul.mubr.f32.gmra.mrb[0].mxu0 %v1610
  %v1691 = vpop.f32.mrb[0].mxu0
  %v1692 = vadd.f32 0.0, %v1691
  %v1693 = vpop.f32.mrb[0].mxu0
  %1694 = vmatprep.mubr.f32.mxu0 0.0
  %1695 = vmatmul.mubr.f32.gmra.mrb[0].mxu0 %v1613
  %v1696 = vpop.f32.mrb[0].mxu0
  %v1697 = vadd.f32 0.0, %v1696
  %v1698 = vpop.f32.mrb[0].mxu0
  %1699 = vdwg.mxu0
  %v1700 = vmax.f32 %v1590, %v1682
  %v1701 = vmax.f32 %v1591, %v1687
  %v1702 = vmax.f32 %v1592, %v1692
  %v1703 = vmax.f32 %v1593, %v1697
  %vm1704 = vcmask 256000
  %1705 = vst.msk [vmem:[#allocation3] sm:$0x7] %vm1704, 0.0
  %1706 = vst.msk [vmem:[#allocation3 + $0x18] sm:$0x7] %vm1704, 0.0
  %1707 = vst.msk [vmem:[#allocation3 + $0x13] sm:$0x7] %vm1704, 0.0
  %1708 = vst.msk [vmem:[#allocation3 + $0x2b] sm:$0x7] %vm1704, 0.0
  %vm1709 = vcmask 130048
  %1710 = vst.msk [vmem:[#allocation3 + $0x3] sm:$0xff] %vm1709, %v1264
  %1711 = vst.msk [vmem:[#allocation3 + $0xb] sm:$0xff] %vm1709, %v1265
  %1712 = vst.msk [vmem:[#allocation3 + $0x1b] sm:$0xff] %vm1709, %v1266
  %1713 = vst.msk [vmem:[#allocation3 + $0x23] sm:$0xff] %vm1709, %v1267
  %1718 = vrot.lane.b32.xlu0 %v1700, 16
  %v1719 = vpop.permute.xlu0 %1718
  %1720 = vrot.lane.b32.xlu0 %v1701, 16
  %v1721 = vpop.permute.xlu0 %1720
  %1722 = vrot.lane.b32.xlu0 %v1702, 16
  %v1723 = vpop.permute.xlu0 %1722
  %1724 = vrot.lane.b32.xlu0 %v1703, 16
  %v1725 = vpop.permute.xlu0 %1724
  %vm1730 = vcmask 261248
  %1731 = vst.msk [vmem:[#allocation3 + $0x3] sm:$0xff] %vm1730, %v1719
  %1732 = vst.msk [vmem:[#allocation3 + $0xb] sm:$0xff] %vm1730, %v1721
  %1733 = vst.msk [vmem:[#allocation3 + $0x1b] sm:$0xff] %vm1730, %v1723
  %1734 = vst.msk [vmem:[#allocation3 + $0x23] sm:$0xff] %vm1730, %v1725
  %v1735 = vld [vmem:[#allocation3] sm:$0xff]
  %v1736 = vld [vmem:[#allocation3 + $0x8] sm:$0xff]
  %v1737 = vld [vmem:[#allocation3 + $0x18] sm:$0xff]
  %v1738 = vld [vmem:[#allocation3 + $0x20] sm:$0xff]
  %v1739 = vld [vmem:[%s7] sm:$0xff]
  %v1740 = vld [vmem:[%s7 + $0x8] sm:$0xff]
  %v1741 = vld [vmem:[%s7 + $0x10] sm:$0xff]
  %v1742 = vld [vmem:[%s7 + $0x18] sm:$0xff]
  %v1743 = vld [vmem:[#allocation3 + $0x1] sm:$0xff]
  %v1744 = vld [vmem:[#allocation3 + $0x9] sm:$0xff]
  %v1745 = vld [vmem:[#allocation3 + $0x19] sm:$0xff]
  %v1746 = vld [vmem:[#allocation3 + $0x21] sm:$0xff]
  %s1747 = scalar_lea.vmem %s7, 32
  %v1748 = vld [vmem:[%s1747] sm:$0xff]
  %v1749 = vld [vmem:[%s1747 + $0x8] sm:$0xff]
  %v1750 = vld [vmem:[%s1747 + $0x10] sm:$0xff]
  %v1751 = vld [vmem:[%s1747 + $0x18] sm:$0xff]
  %vm1752 = vcmask 261120
  %v1754 = vsel %vm1752, %v1743, 0
  %v1757 = vsel %vm1752, %v1744, 0
  %v1760 = vsel %vm1752, %v1745, 0
  %v1763 = vsel %vm1752, %v1746, 0
  %1765 = vmatprep.subr.mxu0 0.0
  %1766 = vmatpush1.msra.mxu0 %v1748
  %1767 = vmatprep.subr.mxu0 0.0
  %1768 = vmatpush1.msra.mxu0 %v1749
  %1769 = vmatprep.subr.mxu0 0.0
  %1770 = vmatpush1.msra.mxu0 %v1750
  %1771 = vmatprep.subr.mxu0 0.0
  %1772 = vmatpush1.msra.mxu0 %v1751
  %1773 = vmatprep.subr.mxu0 0.0
  %1774 = vmatpush1.msra.mxu0 0.0
  %1775 = vmatprep.subr.mxu0 0.0
  %1776 = vmatpush1.msra.mxu0 0.0
  %1777 = vmatprep.subr.mxu0 0.0
  %1778 = vmatpush1.msra.mxu0 0.0
  %1779 = vmatprep.subr.mxu0 0.0
  %1780 = vmatpush1.msra.mxu0 0.0
  %1781 = vmatprep.subr.mxu0 0.0
  %1782 = vmatpush1.msra.mxu0 0.0
  %1783 = vmatprep.subr.mxu0 0.0
  %1784 = vmatpush1.msra.mxu0 0.0
  %1785 = vmatprep.subr.mxu0 0.0
  %1786 = vmatpush1.msra.mxu0 0.0
  %1787 = vmatprep.subr.mxu0 0.0
  %1788 = vmatpush1.msra.mxu0 0.0
  %1789 = vmatprep.subr.mxu0 0.0
  %1790 = vmatpush1.msra.mxu0 0.0
  %1791 = vmatprep.subr.mxu0 0.0
  %1792 = vmatpush1.msra.mxu0 0.0
  %1793 = vmatprep.subr.mxu0 0.0
  %1794 = vmatpush1.msra.mxu0 0.0
  %1795 = vmatprep.subr.mxu0 0.0
  %1796 = vmatpush1.msra.mxu0 0.0
  %1797 = vmatprep.subr.mxu0 0.0
  %1798 = vmatpush1.msra.mxu0 0.0
  %1799 = vmatprep.subr.mxu0 0.0
  %1800 = vmatpush1.msra.mxu0 0.0
  %1801 = vmatprep.subr.mxu0 0.0
  %1802 = vmatpush1.msra.mxu0 0.0
  %1803 = vmatprep.subr.mxu0 0.0
  %1804 = vmatpush1.msra.mxu0 0.0
  %1805 = vmatprep.subr.mxu0 0.0
  %1806 = vmatpush1.msra.mxu0 0.0
  %1807 = vmatprep.subr.mxu0 0.0
  %1808 = vmatpush1.msra.mxu0 0.0
  %1809 = vmatprep.subr.mxu0 0.0
  %1810 = vmatpush1.msra.mxu0 0.0
  %1811 = vmatprep.subr.mxu0 0.0
  %1812 = vmatpush1.msra.mxu0 0.0
  %1813 = vmatprep.subr.mxu0 0.0
  %1814 = vmatpush1.msra.mxu0 0.0
  %1815 = vmatprep.subr.mxu0 0.0
  %1816 = vmatpush1.msra.mxu0 0.0
  %1817 = vmatprep.subr.mxu0 0.0
  %1818 = vmatpush1.msra.mxu0 0.0
  %1819 = vmatprep.subr.mxu0 0.0
  %1820 = vmatpush1.msra.mxu0 0.0
  %1821 = vmatprep.subr.mxu0 0.0
  %1822 = vmatpush1.msra.mxu0 0.0
  %1823 = vmatprep.subr.mxu0 0.0
  %1824 = vmatpush1.msra.mxu0 0.0
  %1825 = vmatprep.subr.mxu0 0.0
  %1826 = vmatpush1.msra.mxu0 0.0
  %1827 = vmatprep.subr.mxu0 0.0
  %1828 = vmatpush1.msra.mxu0 0.0
  %1829 = vmatprep.mubr.f32.mxu0 0.0
  %1830 = vmatmul.mubr.f32.gmra.mrb[0].mxu0 %v1754
  %v1831 = vpop.f32.mrb[0].mxu0
  %v1832 = vadd.f32 0.0, %v1831
  %v1833 = vpop.f32.mrb[0].mxu0
  %1834 = vmatprep.mubr.f32.mxu0 0.0
  %1835 = vmatmul.mubr.f32.gmra.mrb[0].mxu0 %v1757
  %v1836 = vpop.f32.mrb[0].mxu0
  %v1837 = vadd.f32 0.0, %v1836
  %v1838 = vpop.f32.mrb[0].mxu0
  %1839 = vmatprep.mubr.f32.mxu0 0.0
  %1840 = vmatmul.mubr.f32.gmra.mrb[0].mxu0 %v1760
  %v1841 = vpop.f32.mrb[0].mxu0
  %v1842 = vadd.f32 0.0, %v1841
  %v1843 = vpop.f32.mrb[0].mxu0
  %1844 = vmatprep.mubr.f32.mxu0 0.0
  %1845 = vmatmul.mubr.f32.gmra.mrb[0].mxu0 %v1763
  %v1846 = vpop.f32.mrb[0].mxu0
  %v1847 = vadd.f32 0.0, %v1846
  %v1848 = vpop.f32.mrb[0].mxu0
  %1849 = vdwg.mxu0
  %v1851 = vsel %vm1752, %v1735, 0
  %v1854 = vsel %vm1752, %v1736, 0
  %v1857 = vsel %vm1752, %v1737, 0
  %v1860 = vsel %vm1752, %v1738, 0
  %1862 = vmatprep.subr.mxu0 0.0
  %1863 = vmatpush1.msra.mxu0 %v1739
  %1864 = vmatprep.subr.mxu0 0.0
  %1865 = vmatpush1.msra.mxu0 %v1740
  %1866 = vmatprep.subr.mxu0 0.0
  %1867 = vmatpush1.msra.mxu0 %v1741
  %1868 = vmatprep.subr.mxu0 0.0
  %1869 = vmatpush1.msra.mxu0 %v1742
  %1870 = vmatprep.subr.mxu0 0.0
  %1871 = vmatpush1.msra.mxu0 0.0
  %1872 = vmatprep.subr.mxu0 0.0
  %1873 = vmatpush1.msra.mxu0 0.0
  %1874 = vmatprep.subr.mxu0 0.0
  %1875 = vmatpush1.msra.mxu0 0.0
  %1876 = vmatprep.subr.mxu0 0.0
  %1877 = vmatpush1.msra.mxu0 0.0
  %1878 = vmatprep.subr.mxu0 0.0
  %1879 = vmatpush1.msra.mxu0 0.0
  %1880 = vmatprep.subr.mxu0 0.0
  %1881 = vmatpush1.msra.mxu0 0.0
  %1882 = vmatprep.subr.mxu0 0.0
  %1883 = vmatpush1.msra.mxu0 0.0
  %1884 = vmatprep.subr.mxu0 0.0
  %1885 = vmatpush1.msra.mxu0 0.0
  %1886 = vmatprep.subr.mxu0 0.0
  %1887 = vmatpush1.msra.mxu0 0.0
  %1888 = vmatprep.subr.mxu0 0.0
  %1889 = vmatpush1.msra.mxu0 0.0
  %1890 = vmatprep.subr.mxu0 0.0
  %1891 = vmatpush1.msra.mxu0 0.0
  %1892 = vmatprep.subr.mxu0 0.0
  %1893 = vmatpush1.msra.mxu0 0.0
  %1894 = vmatprep.subr.mxu0 0.0
  %1895 = vmatpush1.msra.mxu0 0.0
  %1896 = vmatprep.subr.mxu0 0.0
  %1897 = vmatpush1.msra.mxu0 0.0
  %1898 = vmatprep.subr.mxu0 0.0
  %1899 = vmatpush1.msra.mxu0 0.0
  %1900 = vmatprep.subr.mxu0 0.0
  %1901 = vmatpush1.msra.mxu0 0.0
  %1902 = vmatprep.subr.mxu0 0.0
  %1903 = vmatpush1.msra.mxu0 0.0
  %1904 = vmatprep.subr.mxu0 0.0
  %1905 = vmatpush1.msra.mxu0 0.0
  %1906 = vmatprep.subr.mxu0 0.0
  %1907 = vmatpush1.msra.mxu0 0.0
  %1908 = vmatprep.subr.mxu0 0.0
  %1909 = vmatpush1.msra.mxu0 0.0
  %1910 = vmatprep.subr.mxu0 0.0
  %1911 = vmatpush1.msra.mxu0 0.0
  %1912 = vmatprep.subr.mxu0 0.0
  %1913 = vmatpush1.msra.mxu0 0.0
  %1914 = vmatprep.subr.mxu0 0.0
  %1915 = vmatpush1.msra.mxu0 0.0
  %1916 = vmatprep.subr.mxu0 0.0
  %1917 = vmatpush1.msra.mxu0 0.0
  %1918 = vmatprep.subr.mxu0 0.0
  %1919 = vmatpush1.msra.mxu0 0.0
  %1920 = vmatprep.subr.mxu0 0.0
  %1921 = vmatpush1.msra.mxu0 0.0
  %1922 = vmatprep.subr.mxu0 0.0
  %1923 = vmatpush1.msra.mxu0 0.0
  %1924 = vmatprep.subr.mxu0 0.0
  %1925 = vmatpush1.msra.mxu0 0.0
  %1926 = vmatprep.mubr.f32.mxu0 0.0
  %1927 = vmatmul.mubr.f32.gmra.mrb[0].mxu0 %v1851
  %v1928 = vpop.f32.mrb[0].mxu0
  %v1929 = vadd.f32 %v1832, %v1928
  %v1930 = vpop.f32.mrb[0].mxu0
  %1931 = vmatprep.mubr.f32.mxu0 0.0
  %1932 = vmatmul.mubr.f32.gmra.mrb[0].mxu0 %v1854
  %v1933 = vpop.f32.mrb[0].mxu0
  %v1934 = vadd.f32 %v1837, %v1933
  %v1935 = vpop.f32.mrb[0].mxu0
  %1936 = vmatprep.mubr.f32.mxu0 0.0
  %1937 = vmatmul.mubr.f32.gmra.mrb[0].mxu0 %v1857
  %v1938 = vpop.f32.mrb[0].mxu0
  %v1939 = vadd.f32 %v1842, %v1938
  %v1940 = vpop.f32.mrb[0].mxu0
  %1941 = vmatprep.mubr.f32.mxu0 0.0
  %1942 = vmatmul.mubr.f32.gmra.mrb[0].mxu0 %v1860
  %v1943 = vpop.f32.mrb[0].mxu0
  %v1944 = vadd.f32 %v1847, %v1943
  %v1945 = vpop.f32.mrb[0].mxu0
  %1946 = vdwg.mxu0
  %v1947 = vld [vmem:[#allocation3 + $0x2] sm:$0xff]
  %v1948 = vld [vmem:[#allocation3 + $0xa] sm:$0xff]
  %v1949 = vld [vmem:[#allocation3 + $0x1a] sm:$0xff]
  %v1950 = vld [vmem:[#allocation3 + $0x22] sm:$0xff]
  %s1951 = scalar_lea.vmem %s7, 64
  %v1952 = vld [vmem:[%s1951] sm:$0xff]
  %v1953 = vld [vmem:[%s1951 + $0x8] sm:$0xff]
  %v1954 = vld [vmem:[%s1951 + $0x10] sm:$0xff]
  %v1955 = vld [vmem:[%s1951 + $0x18] sm:$0xff]
  %v1957 = vsel %vm1752, %v1947, 0
  %v1960 = vsel %vm1752, %v1948, 0
  %v1963 = vsel %vm1752, %v1949, 0
  %v1966 = vsel %vm1752, %v1950, 0
  %1968 = vmatprep.subr.mxu0 0.0
  %1969 = vmatpush1.msra.mxu0 %v1952
  %1970 = vmatprep.subr.mxu0 0.0
  %1971 = vmatpush1.msra.mxu0 %v1953
  %1972 = vmatprep.subr.mxu0 0.0
  %1973 = vmatpush1.msra.mxu0 %v1954
  %1974 = vmatprep.subr.mxu0 0.0
  %1975 = vmatpush1.msra.mxu0 %v1955
  %1976 = vmatprep.subr.mxu0 0.0
  %1977 = vmatpush1.msra.mxu0 0.0
  %1978 = vmatprep.subr.mxu0 0.0
  %1979 = vmatpush1.msra.mxu0 0.0
  %1980 = vmatprep.subr.mxu0 0.0
  %1981 = vmatpush1.msra.mxu0 0.0
  %1982 = vmatprep.subr.mxu0 0.0
  %1983 = vmatpush1.msra.mxu0 0.0
  %1984 = vmatprep.subr.mxu0 0.0
  %1985 = vmatpush1.msra.mxu0 0.0
  %1986 = vmatprep.subr.mxu0 0.0
  %1987 = vmatpush1.msra.mxu0 0.0
  %1988 = vmatprep.subr.mxu0 0.0
  %1989 = vmatpush1.msra.mxu0 0.0
  %1990 = vmatprep.subr.mxu0 0.0
  %1991 = vmatpush1.msra.mxu0 0.0
  %1992 = vmatprep.subr.mxu0 0.0
  %1993 = vmatpush1.msra.mxu0 0.0
  %1994 = vmatprep.subr.mxu0 0.0
  %1995 = vmatpush1.msra.mxu0 0.0
  %1996 = vmatprep.subr.mxu0 0.0
  %1997 = vmatpush1.msra.mxu0 0.0
  %1998 = vmatprep.subr.mxu0 0.0
  %1999 = vmatpush1.msra.mxu0 0.0
  %2000 = vmatprep.subr.mxu0 0.0
  %2001 = vmatpush1.msra.mxu0 0.0
  %2002 = vmatprep.subr.mxu0 0.0
  %2003 = vmatpush1.msra.mxu0 0.0
  %2004 = vmatprep.subr.mxu0 0.0
  %2005 = vmatpush1.msra.mxu0 0.0
  %2006 = vmatprep.subr.mxu0 0.0
  %2007 = vmatpush1.msra.mxu0 0.0
  %2008 = vmatprep.subr.mxu0 0.0
  %2009 = vmatpush1.msra.mxu0 0.0
  %2010 = vmatprep.subr.mxu0 0.0
  %2011 = vmatpush1.msra.mxu0 0.0
  %2012 = vmatprep.subr.mxu0 0.0
  %2013 = vmatpush1.msra.mxu0 0.0
  %2014 = vmatprep.subr.mxu0 0.0
  %2015 = vmatpush1.msra.mxu0 0.0
  %2016 = vmatprep.subr.mxu0 0.0
  %2017 = vmatpush1.msra.mxu0 0.0
  %2018 = vmatprep.subr.mxu0 0.0
  %2019 = vmatpush1.msra.mxu0 0.0
  %2020 = vmatprep.subr.mxu0 0.0
  %2021 = vmatpush1.msra.mxu0 0.0
  %2022 = vmatprep.subr.mxu0 0.0
  %2023 = vmatpush1.msra.mxu0 0.0
  %2024 = vmatprep.subr.mxu0 0.0
  %2025 = vmatpush1.msra.mxu0 0.0
  %2026 = vmatprep.subr.mxu0 0.0
  %2027 = vmatpush1.msra.mxu0 0.0
  %2028 = vmatprep.subr.mxu0 0.0
  %2029 = vmatpush1.msra.mxu0 0.0
  %2030 = vmatprep.subr.mxu0 0.0
  %2031 = vmatpush1.msra.mxu0 0.0
  %2032 = vmatprep.mubr.f32.mxu0 0.0
  %2033 = vmatmul.mubr.f32.gmra.mrb[0].mxu0 %v1957
  %v2034 = vpop.f32.mrb[0].mxu0
  %v2035 = vadd.f32 0.0, %v2034
  %v2036 = vpop.f32.mrb[0].mxu0
  %2037 = vmatprep.mubr.f32.mxu0 0.0
  %2038 = vmatmul.mubr.f32.gmra.mrb[0].mxu0 %v1960
  %v2039 = vpop.f32.mrb[0].mxu0
  %v2040 = vadd.f32 0.0, %v2039
  %v2041 = vpop.f32.mrb[0].mxu0
  %2042 = vmatprep.mubr.f32.mxu0 0.0
  %2043 = vmatmul.mubr.f32.gmra.mrb[0].mxu0 %v1963
  %v2044 = vpop.f32.mrb[0].mxu0
  %v2045 = vadd.f32 0.0, %v2044
  %v2046 = vpop.f32.mrb[0].mxu0
  %2047 = vmatprep.mubr.f32.mxu0 0.0
  %2048 = vmatmul.mubr.f32.gmra.mrb[0].mxu0 %v1966
  %v2049 = vpop.f32.mrb[0].mxu0
  %v2050 = vadd.f32 0.0, %v2049
  %v2051 = vpop.f32.mrb[0].mxu0
  %2052 = vdwg.mxu0
  %v2053 = vadd.f32 %v1929, %v2035
  %v2054 = vadd.f32 %v1934, %v2040
  %v2055 = vadd.f32 %v1939, %v2045
  %v2056 = vadd.f32 %v1944, %v2050
  %v2057 = vld [vmem:[#allocation3 + $0x3] sm:$0xff]
  %v2058 = vld [vmem:[#allocation3 + $0xb] sm:$0xff]
  %v2059 = vld [vmem:[#allocation3 + $0x1b] sm:$0xff]
  %v2060 = vld [vmem:[#allocation3 + $0x23] sm:$0xff]
  %s2061 = scalar_lea.vmem %s7, 96
  %v2062 = vld [vmem:[%s2061] sm:$0xff]
  %v2063 = vld [vmem:[%s2061 + $0x8] sm:$0xff]
  %v2064 = vld [vmem:[%s2061 + $0x10] sm:$0xff]
  %v2065 = vld [vmem:[%s2061 + $0x18] sm:$0xff]
  %v2067 = vsel %vm1752, %v2057, 0
  %v2070 = vsel %vm1752, %v2058, 0
  %v2073 = vsel %vm1752, %v2059, 0
  %v2076 = vsel %vm1752, %v2060, 0
  %2078 = vmatprep.subr.mxu0 0.0
  %2079 = vmatpush1.msra.mxu0 %v2062
  %2080 = vmatprep.subr.mxu0 0.0
  %2081 = vmatpush1.msra.mxu0 %v2063
  %2082 = vmatprep.subr.mxu0 0.0
  %2083 = vmatpush1.msra.mxu0 %v2064
  %2084 = vmatprep.subr.mxu0 0.0
  %2085 = vmatpush1.msra.mxu0 %v2065
  %2086 = vmatprep.subr.mxu0 0.0
  %2087 = vmatpush1.msra.mxu0 0.0
  %2088 = vmatprep.subr.mxu0 0.0
  %2089 = vmatpush1.msra.mxu0 0.0
  %2090 = vmatprep.subr.mxu0 0.0
  %2091 = vmatpush1.msra.mxu0 0.0
  %2092 = vmatprep.subr.mxu0 0.0
  %2093 = vmatpush1.msra.mxu0 0.0
  %2094 = vmatprep.subr.mxu0 0.0
  %2095 = vmatpush1.msra.mxu0 0.0
  %2096 = vmatprep.subr.mxu0 0.0
  %2097 = vmatpush1.msra.mxu0 0.0
  %2098 = vmatprep.subr.mxu0 0.0
  %2099 = vmatpush1.msra.mxu0 0.0
  %2100 = vmatprep.subr.mxu0 0.0
  %2101 = vmatpush1.msra.mxu0 0.0
  %2102 = vmatprep.subr.mxu0 0.0
  %2103 = vmatpush1.msra.mxu0 0.0
  %2104 = vmatprep.subr.mxu0 0.0
  %2105 = vmatpush1.msra.mxu0 0.0
  %2106 = vmatprep.subr.mxu0 0.0
  %2107 = vmatpush1.msra.mxu0 0.0
  %2108 = vmatprep.subr.mxu0 0.0
  %2109 = vmatpush1.msra.mxu0 0.0
  %2110 = vmatprep.subr.mxu0 0.0
  %2111 = vmatpush1.msra.mxu0 0.0
  %2112 = vmatprep.subr.mxu0 0.0
  %2113 = vmatpush1.msra.mxu0 0.0
  %2114 = vmatprep.subr.mxu0 0.0
  %2115 = vmatpush1.msra.mxu0 0.0
  %2116 = vmatprep.subr.mxu0 0.0
  %2117 = vmatpush1.msra.mxu0 0.0
  %2118 = vmatprep.subr.mxu0 0.0
  %2119 = vmatpush1.msra.mxu0 0.0
  %2120 = vmatprep.subr.mxu0 0.0
  %2121 = vmatpush1.msra.mxu0 0.0
  %2122 = vmatprep.subr.mxu0 0.0
  %2123 = vmatpush1.msra.mxu0 0.0
  %2124 = vmatprep.subr.mxu0 0.0
  %2125 = vmatpush1.msra.mxu0 0.0
  %2126 = vmatprep.subr.mxu0 0.0
  %2127 = vmatpush1.msra.mxu0 0.0
  %2128 = vmatprep.subr.mxu0 0.0
  %2129 = vmatpush1.msra.mxu0 0.0
  %2130 = vmatprep.subr.mxu0 0.0
  %2131 = vmatpush1.msra.mxu0 0.0
  %2132 = vmatprep.subr.mxu0 0.0
  %2133 = vmatpush1.msra.mxu0 0.0
  %2134 = vmatprep.subr.mxu0 0.0
  %2135 = vmatpush1.msra.mxu0 0.0
  %2136 = vmatprep.subr.mxu0 0.0
  %2137 = vmatpush1.msra.mxu0 0.0
  %2138 = vmatprep.subr.mxu0 0.0
  %2139 = vmatpush1.msra.mxu0 0.0
  %2140 = vmatprep.subr.mxu0 0.0
  %2141 = vmatpush1.msra.mxu0 0.0
  %2142 = vmatprep.mubr.f32.mxu0 0.0
  %2143 = vmatmul.mubr.f32.gmra.mrb[0].mxu0 %v2067
  %v2144 = vpop.f32.mrb[0].mxu0
  %v2145 = vadd.f32 0.0, %v2144
  %v2146 = vpop.f32.mrb[0].mxu0
  %2147 = vmatprep.mubr.f32.mxu0 0.0
  %2148 = vmatmul.mubr.f32.gmra.mrb[0].mxu0 %v2070
  %v2149 = vpop.f32.mrb[0].mxu0
  %v2150 = vadd.f32 0.0, %v2149
  %v2151 = vpop.f32.mrb[0].mxu0
  %2152 = vmatprep.mubr.f32.mxu0 0.0
  %2153 = vmatmul.mubr.f32.gmra.mrb[0].mxu0 %v2073
  %v2154 = vpop.f32.mrb[0].mxu0
  %v2155 = vadd.f32 0.0, %v2154
  %v2156 = vpop.f32.mrb[0].mxu0
  %2157 = vmatprep.mubr.f32.mxu0 0.0
  %2158 = vmatmul.mubr.f32.gmra.mrb[0].mxu0 %v2076
  %v2159 = vpop.f32.mrb[0].mxu0
  %v2160 = vadd.f32 0.0, %v2159
  %v2161 = vpop.f32.mrb[0].mxu0
  %2162 = vdwg.mxu0
  %v2163 = vadd.f32 %v2053, %v2145
  %v2164 = vadd.f32 %v2054, %v2150
  %v2165 = vadd.f32 %v2055, %v2155
  %v2166 = vadd.f32 %v2056, %v2160
  %v2167 = vld [vmem:[#allocation3 + $0x4] sm:$0xff]
  %v2168 = vld [vmem:[#allocation3 + $0xc] sm:$0xff]
  %v2169 = vld [vmem:[#allocation3 + $0x1c] sm:$0xff]
  %v2170 = vld [vmem:[#allocation3 + $0x24] sm:$0xff]
  %s2171 = scalar_lea.vmem %s7, 128
  %v2172 = vld [vmem:[%s2171] sm:$0xff]
  %v2173 = vld [vmem:[%s2171 + $0x8] sm:$0xff]
  %v2174 = vld [vmem:[%s2171 + $0x10] sm:$0xff]
  %v2175 = vld [vmem:[%s2171 + $0x18] sm:$0xff]
  %v2177 = vsel %vm1752, %v2167, 0
  %v2180 = vsel %vm1752, %v2168, 0
  %v2183 = vsel %vm1752, %v2169, 0
  %v2186 = vsel %vm1752, %v2170, 0
  %2188 = vmatprep.subr.mxu0 0.0
  %2189 = vmatpush1.msra.mxu0 %v2172
  %2190 = vmatprep.subr.mxu0 0.0
  %2191 = vmatpush1.msra.mxu0 %v2173
  %2192 = vmatprep.subr.mxu0 0.0
  %2193 = vmatpush1.msra.mxu0 %v2174
  %2194 = vmatprep.subr.mxu0 0.0
  %2195 = vmatpush1.msra.mxu0 %v2175
  %2196 = vmatprep.subr.mxu0 0.0
  %2197 = vmatpush1.msra.mxu0 0.0
  %2198 = vmatprep.subr.mxu0 0.0
  %2199 = vmatpush1.msra.mxu0 0.0
  %2200 = vmatprep.subr.mxu0 0.0
  %2201 = vmatpush1.msra.mxu0 0.0
  %2202 = vmatprep.subr.mxu0 0.0
  %2203 = vmatpush1.msra.mxu0 0.0
  %2204 = vmatprep.subr.mxu0 0.0
  %2205 = vmatpush1.msra.mxu0 0.0
  %2206 = vmatprep.subr.mxu0 0.0
  %2207 = vmatpush1.msra.mxu0 0.0
  %2208 = vmatprep.subr.mxu0 0.0
  %2209 = vmatpush1.msra.mxu0 0.0
  %2210 = vmatprep.subr.mxu0 0.0
  %2211 = vmatpush1.msra.mxu0 0.0
  %2212 = vmatprep.subr.mxu0 0.0
  %2213 = vmatpush1.msra.mxu0 0.0
  %2214 = vmatprep.subr.mxu0 0.0
  %2215 = vmatpush1.msra.mxu0 0.0
  %2216 = vmatprep.subr.mxu0 0.0
  %2217 = vmatpush1.msra.mxu0 0.0
  %2218 = vmatprep.subr.mxu0 0.0
  %2219 = vmatpush1.msra.mxu0 0.0
  %2220 = vmatprep.subr.mxu0 0.0
  %2221 = vmatpush1.msra.mxu0 0.0
  %2222 = vmatprep.subr.mxu0 0.0
  %2223 = vmatpush1.msra.mxu0 0.0
  %2224 = vmatprep.subr.mxu0 0.0
  %2225 = vmatpush1.msra.mxu0 0.0
  %2226 = vmatprep.subr.mxu0 0.0
  %2227 = vmatpush1.msra.mxu0 0.0
  %2228 = vmatprep.subr.mxu0 0.0
  %2229 = vmatpush1.msra.mxu0 0.0
  %2230 = vmatprep.subr.mxu0 0.0
  %2231 = vmatpush1.msra.mxu0 0.0
  %2232 = vmatprep.subr.mxu0 0.0
  %2233 = vmatpush1.msra.mxu0 0.0
  %2234 = vmatprep.subr.mxu0 0.0
  %2235 = vmatpush1.msra.mxu0 0.0
  %2236 = vmatprep.subr.mxu0 0.0
  %2237 = vmatpush1.msra.mxu0 0.0
  %2238 = vmatprep.subr.mxu0 0.0
  %2239 = vmatpush1.msra.mxu0 0.0
  %2240 = vmatprep.subr.mxu0 0.0
  %2241 = vmatpush1.msra.mxu0 0.0
  %2242 = vmatprep.subr.mxu0 0.0
  %2243 = vmatpush1.msra.mxu0 0.0
  %2244 = vmatprep.subr.mxu0 0.0
  %2245 = vmatpush1.msra.mxu0 0.0
  %2246 = vmatprep.subr.mxu0 0.0
  %2247 = vmatpush1.msra.mxu0 0.0
  %2248 = vmatprep.subr.mxu0 0.0
  %2249 = vmatpush1.msra.mxu0 0.0
  %2250 = vmatprep.subr.mxu0 0.0
  %2251 = vmatpush1.msra.mxu0 0.0
  %2252 = vmatprep.mubr.f32.mxu0 0.0
  %2253 = vmatmul.mubr.f32.gmra.mrb[0].mxu0 %v2177
  %v2254 = vpop.f32.mrb[0].mxu0
  %v2255 = vadd.f32 0.0, %v2254
  %v2256 = vpop.f32.mrb[0].mxu0
  %2257 = vmatprep.mubr.f32.mxu0 0.0
  %2258 = vmatmul.mubr.f32.gmra.mrb[0].mxu0 %v2180
  %v2259 = vpop.f32.mrb[0].mxu0
  %v2260 = vadd.f32 0.0, %v2259
  %v2261 = vpop.f32.mrb[0].mxu0
  %2262 = vmatprep.mubr.f32.mxu0 0.0
  %2263 = vmatmul.mubr.f32.gmra.mrb[0].mxu0 %v2183
  %v2264 = vpop.f32.mrb[0].mxu0
  %v2265 = vadd.f32 0.0, %v2264
  %v2266 = vpop.f32.mrb[0].mxu0
  %2267 = vmatprep.mubr.f32.mxu0 0.0
  %2268 = vmatmul.mubr.f32.gmra.mrb[0].mxu0 %v2186
  %v2269 = vpop.f32.mrb[0].mxu0
  %v2270 = vadd.f32 0.0, %v2269
  %v2271 = vpop.f32.mrb[0].mxu0
  %2272 = vdwg.mxu0
  %v2273 = vadd.f32 %v2163, %v2255
  %v2274 = vadd.f32 %v2164, %v2260
  %v2275 = vadd.f32 %v2165, %v2265
  %v2276 = vadd.f32 %v2166, %v2270
  %v2277 = vld [vmem:[#allocation3 + $0x5] sm:$0xff]
  %v2278 = vld [vmem:[#allocation3 + $0xd] sm:$0xff]
  %v2279 = vld [vmem:[#allocation3 + $0x1d] sm:$0xff]
  %v2280 = vld [vmem:[#allocation3 + $0x25] sm:$0xff]
  %s2281 = scalar_lea.vmem %s7, 160
  %v2282 = vld [vmem:[%s2281] sm:$0xff]
  %v2283 = vld [vmem:[%s2281 + $0x8] sm:$0xff]
  %v2284 = vld [vmem:[%s2281 + $0x10] sm:$0xff]
  %v2285 = vld [vmem:[%s2281 + $0x18] sm:$0xff]
  %v2287 = vsel %vm1752, %v2277, 0
  %v2290 = vsel %vm1752, %v2278, 0
  %v2293 = vsel %vm1752, %v2279, 0
  %v2296 = vsel %vm1752, %v2280, 0
  %2298 = vmatprep.subr.mxu0 0.0
  %2299 = vmatpush1.msra.mxu0 %v2282
  %2300 = vmatprep.subr.mxu0 0.0
  %2301 = vmatpush1.msra.mxu0 %v2283
  %2302 = vmatprep.subr.mxu0 0.0
  %2303 = vmatpush1.msra.mxu0 %v2284
  %2304 = vmatprep.subr.mxu0 0.0
  %2305 = vmatpush1.msra.mxu0 %v2285
  %2306 = vmatprep.subr.mxu0 0.0
  %2307 = vmatpush1.msra.mxu0 0.0
  %2308 = vmatprep.subr.mxu0 0.0
  %2309 = vmatpush1.msra.mxu0 0.0
  %2310 = vmatprep.subr.mxu0 0.0
  %2311 = vmatpush1.msra.mxu0 0.0
  %2312 = vmatprep.subr.mxu0 0.0
  %2313 = vmatpush1.msra.mxu0 0.0
  %2314 = vmatprep.subr.mxu0 0.0
  %2315 = vmatpush1.msra.mxu0 0.0
  %2316 = vmatprep.subr.mxu0 0.0
  %2317 = vmatpush1.msra.mxu0 0.0
  %2318 = vmatprep.subr.mxu0 0.0
  %2319 = vmatpush1.msra.mxu0 0.0
  %2320 = vmatprep.subr.mxu0 0.0
  %2321 = vmatpush1.msra.mxu0 0.0
  %2322 = vmatprep.subr.mxu0 0.0
  %2323 = vmatpush1.msra.mxu0 0.0
  %2324 = vmatprep.subr.mxu0 0.0
  %2325 = vmatpush1.msra.mxu0 0.0
  %2326 = vmatprep.subr.mxu0 0.0
  %2327 = vmatpush1.msra.mxu0 0.0
  %2328 = vmatprep.subr.mxu0 0.0
  %2329 = vmatpush1.msra.mxu0 0.0
  %2330 = vmatprep.subr.mxu0 0.0
  %2331 = vmatpush1.msra.mxu0 0.0
  %2332 = vmatprep.subr.mxu0 0.0
  %2333 = vmatpush1.msra.mxu0 0.0
  %2334 = vmatprep.subr.mxu0 0.0
  %2335 = vmatpush1.msra.mxu0 0.0
  %2336 = vmatprep.subr.mxu0 0.0
  %2337 = vmatpush1.msra.mxu0 0.0
  %2338 = vmatprep.subr.mxu0 0.0
  %2339 = vmatpush1.msra.mxu0 0.0
  %2340 = vmatprep.subr.mxu0 0.0
  %2341 = vmatpush1.msra.mxu0 0.0
  %2342 = vmatprep.subr.mxu0 0.0
  %2343 = vmatpush1.msra.mxu0 0.0
  %2344 = vmatprep.subr.mxu0 0.0
  %2345 = vmatpush1.msra.mxu0 0.0
  %2346 = vmatprep.subr.mxu0 0.0
  %2347 = vmatpush1.msra.mxu0 0.0
  %2348 = vmatprep.subr.mxu0 0.0
  %2349 = vmatpush1.msra.mxu0 0.0
  %2350 = vmatprep.subr.mxu0 0.0
  %2351 = vmatpush1.msra.mxu0 0.0
  %2352 = vmatprep.subr.mxu0 0.0
  %2353 = vmatpush1.msra.mxu0 0.0
  %2354 = vmatprep.subr.mxu0 0.0
  %2355 = vmatpush1.msra.mxu0 0.0
  %2356 = vmatprep.subr.mxu0 0.0
  %2357 = vmatpush1.msra.mxu0 0.0
  %2358 = vmatprep.subr.mxu0 0.0
  %2359 = vmatpush1.msra.mxu0 0.0
  %2360 = vmatprep.subr.mxu0 0.0
  %2361 = vmatpush1.msra.mxu0 0.0
  %2362 = vmatprep.mubr.f32.mxu0 0.0
  %2363 = vmatmul.mubr.f32.gmra.mrb[0].mxu0 %v2287
  %v2364 = vpop.f32.mrb[0].mxu0
  %v2365 = vadd.f32 0.0, %v2364
  %v2366 = vpop.f32.mrb[0].mxu0
  %2367 = vmatprep.mubr.f32.mxu0 0.0
  %2368 = vmatmul.mubr.f32.gmra.mrb[0].mxu0 %v2290
  %v2369 = vpop.f32.mrb[0].mxu0
  %v2370 = vadd.f32 0.0, %v2369
  %v2371 = vpop.f32.mrb[0].mxu0
  %2372 = vmatprep.mubr.f32.mxu0 0.0
  %2373 = vmatmul.mubr.f32.gmra.mrb[0].mxu0 %v2293
  %v2374 = vpop.f32.mrb[0].mxu0
  %v2375 = vadd.f32 0.0, %v2374
  %v2376 = vpop.f32.mrb[0].mxu0
  %2377 = vmatprep.mubr.f32.mxu0 0.0
  %2378 = vmatmul.mubr.f32.gmra.mrb[0].mxu0 %v2296
  %v2379 = vpop.f32.mrb[0].mxu0
  %v2380 = vadd.f32 0.0, %v2379
  %v2381 = vpop.f32.mrb[0].mxu0
  %2382 = vdwg.mxu0
  %v2383 = vadd.f32 %v2273, %v2365
  %v2384 = vadd.f32 %v2274, %v2370
  %v2385 = vadd.f32 %v2275, %v2375
  %v2386 = vadd.f32 %v2276, %v2380
  %v2387 = vld [vmem:[#allocation3 + $0x6] sm:$0xff]
  %v2388 = vld [vmem:[#allocation3 + $0xe] sm:$0xff]
  %v2389 = vld [vmem:[#allocation3 + $0x1e] sm:$0xff]
  %v2390 = vld [vmem:[#allocation3 + $0x26] sm:$0xff]
  %s2391 = scalar_lea.vmem %s7, 192
  %v2392 = vld [vmem:[%s2391] sm:$0xff]
  %v2393 = vld [vmem:[%s2391 + $0x8] sm:$0xff]
  %v2394 = vld [vmem:[%s2391 + $0x10] sm:$0xff]
  %v2395 = vld [vmem:[%s2391 + $0x18] sm:$0xff]
  %v2397 = vsel %vm1752, %v2387, 0
  %v2400 = vsel %vm1752, %v2388, 0
  %v2403 = vsel %vm1752, %v2389, 0
  %v2406 = vsel %vm1752, %v2390, 0
  %2408 = vmatprep.subr.mxu0 0.0
  %2409 = vmatpush1.msra.mxu0 %v2392
  %2410 = vmatprep.subr.mxu0 0.0
  %2411 = vmatpush1.msra.mxu0 %v2393
  %2412 = vmatprep.subr.mxu0 0.0
  %2413 = vmatpush1.msra.mxu0 %v2394
  %2414 = vmatprep.subr.mxu0 0.0
  %2415 = vmatpush1.msra.mxu0 %v2395
  %2416 = vmatprep.subr.mxu0 0.0
  %2417 = vmatpush1.msra.mxu0 0.0
  %2418 = vmatprep.subr.mxu0 0.0
  %2419 = vmatpush1.msra.mxu0 0.0
  %2420 = vmatprep.subr.mxu0 0.0
  %2421 = vmatpush1.msra.mxu0 0.0
  %2422 = vmatprep.subr.mxu0 0.0
  %2423 = vmatpush1.msra.mxu0 0.0
  %2424 = vmatprep.subr.mxu0 0.0
  %2425 = vmatpush1.msra.mxu0 0.0
  %2426 = vmatprep.subr.mxu0 0.0
  %2427 = vmatpush1.msra.mxu0 0.0
  %2428 = vmatprep.subr.mxu0 0.0
  %2429 = vmatpush1.msra.mxu0 0.0
  %2430 = vmatprep.subr.mxu0 0.0
  %2431 = vmatpush1.msra.mxu0 0.0
  %2432 = vmatprep.subr.mxu0 0.0
  %2433 = vmatpush1.msra.mxu0 0.0
  %2434 = vmatprep.subr.mxu0 0.0
  %2435 = vmatpush1.msra.mxu0 0.0
  %2436 = vmatprep.subr.mxu0 0.0
  %2437 = vmatpush1.msra.mxu0 0.0
  %2438 = vmatprep.subr.mxu0 0.0
  %2439 = vmatpush1.msra.mxu0 0.0
  %2440 = vmatprep.subr.mxu0 0.0
  %2441 = vmatpush1.msra.mxu0 0.0
  %2442 = vmatprep.subr.mxu0 0.0
  %2443 = vmatpush1.msra.mxu0 0.0
  %2444 = vmatprep.subr.mxu0 0.0
  %2445 = vmatpush1.msra.mxu0 0.0
  %2446 = vmatprep.subr.mxu0 0.0
  %2447 = vmatpush1.msra.mxu0 0.0
  %2448 = vmatprep.subr.mxu0 0.0
  %2449 = vmatpush1.msra.mxu0 0.0
  %2450 = vmatprep.subr.mxu0 0.0
  %2451 = vmatpush1.msra.mxu0 0.0
  %2452 = vmatprep.subr.mxu0 0.0
  %2453 = vmatpush1.msra.mxu0 0.0
  %2454 = vmatprep.subr.mxu0 0.0
  %2455 = vmatpush1.msra.mxu0 0.0
  %2456 = vmatprep.subr.mxu0 0.0
  %2457 = vmatpush1.msra.mxu0 0.0
  %2458 = vmatprep.subr.mxu0 0.0
  %2459 = vmatpush1.msra.mxu0 0.0
  %2460 = vmatprep.subr.mxu0 0.0
  %2461 = vmatpush1.msra.mxu0 0.0
  %2462 = vmatprep.subr.mxu0 0.0
  %2463 = vmatpush1.msra.mxu0 0.0
  %2464 = vmatprep.subr.mxu0 0.0
  %2465 = vmatpush1.msra.mxu0 0.0
  %2466 = vmatprep.subr.mxu0 0.0
  %2467 = vmatpush1.msra.mxu0 0.0
  %2468 = vmatprep.subr.mxu0 0.0
  %2469 = vmatpush1.msra.mxu0 0.0
  %2470 = vmatprep.subr.mxu0 0.0
  %2471 = vmatpush1.msra.mxu0 0.0
  %2472 = vmatprep.mubr.f32.mxu0 0.0
  %2473 = vmatmul.mubr.f32.gmra.mrb[0].mxu0 %v2397
  %v2474 = vpop.f32.mrb[0].mxu0
  %v2475 = vadd.f32 0.0, %v2474
  %v2476 = vpop.f32.mrb[0].mxu0
  %2477 = vmatprep.mubr.f32.mxu0 0.0
  %2478 = vmatmul.mubr.f32.gmra.mrb[0].mxu0 %v2400
  %v2479 = vpop.f32.mrb[0].mxu0
  %v2480 = vadd.f32 0.0, %v2479
  %v2481 = vpop.f32.mrb[0].mxu0
  %2482 = vmatprep.mubr.f32.mxu0 0.0
  %2483 = vmatmul.mubr.f32.gmra.mrb[0].mxu0 %v2403
  %v2484 = vpop.f32.mrb[0].mxu0
  %v2485 = vadd.f32 0.0, %v2484
  %v2486 = vpop.f32.mrb[0].mxu0
  %2487 = vmatprep.mubr.f32.mxu0 0.0
  %2488 = vmatmul.mubr.f32.gmra.mrb[0].mxu0 %v2406
  %v2489 = vpop.f32.mrb[0].mxu0
  %v2490 = vadd.f32 0.0, %v2489
  %v2491 = vpop.f32.mrb[0].mxu0
  %2492 = vdwg.mxu0
  %v2493 = vadd.f32 %v2383, %v2475
  %v2494 = vadd.f32 %v2384, %v2480
  %v2495 = vadd.f32 %v2385, %v2485
  %v2496 = vadd.f32 %v2386, %v2490
  %v2497 = vxor.u32 %v2493, 2147483648
  %v2498 = vxor.u32 %v2494, 2147483648
  %v2499 = vxor.u32 %v2495, 2147483648
  %v2500 = vxor.u32 %v2496, 2147483648
  %v2501 = vmul.f32 %v2497, 1.442695
  %v2502 = vpow.pop %v2501
  %v2503 = vmul.f32 %v2498, 1.442695
  %v2504 = vpow.pop %v2503
  %v2505 = vmul.f32 %v2499, 1.442695
  %v2506 = vpow.pop %v2505
  %v2507 = vmul.f32 %v2500, 1.442695
  %v2508 = vpow.pop %v2507
  %v2509 = vadd.f32 %v2502, 1.0
  %v2510 = vadd.f32 %v2504, 1.0
  %v2511 = vadd.f32 %v2506, 1.0
  %v2512 = vadd.f32 %v2508, 1.0
  %v2513 = vrcp.pop %v2509
  %v2514 = vmul.f32 1.0, %v2513
  %v2515 = vrcp.pop %v2510
  %v2516 = vmul.f32 1.0, %v2515
  %v2517 = vrcp.pop %v2511
  %v2518 = vmul.f32 1.0, %v2517
  %v2519 = vrcp.pop %v2512
  %v2520 = vmul.f32 1.0, %v2519
  %v2521 = vld [vmem:[%s10] sm:$0xff]
  %v2522 = vld [vmem:[%s10 + $0x8] sm:$0xff]
  %v2524 = vsel %vm1709, %v2514, 0
  %v2527 = vsel %vm1709, %v2516, 0
  %v2530 = vsel %vm1709, %v2518, 0
  %v2533 = vsel %vm1709, %v2520, 0
  %2535 = vmatprep.subr.mxu0 0.0
  %2536 = vmatpush1.msra.mxu0 %v2521
  %2537 = vmatprep.subr.mxu0 0.0
  %2538 = vmatpush1.msra.mxu0 %v2522
  %2539 = vmatprep.subr.mxu0 0.0
  %2540 = vmatpush1.msra.mxu0 0.0
  %2541 = vmatprep.subr.mxu0 0.0
  %2542 = vmatpush1.msra.mxu0 0.0
  %2543 = vmatprep.subr.mxu0 0.0
  %2544 = vmatpush1.msra.mxu0 0.0
  %2545 = vmatprep.subr.mxu0 0.0
  %2546 = vmatpush1.msra.mxu0 0.0
  %2547 = vmatprep.subr.mxu0 0.0
  %2548 = vmatpush1.msra.mxu0 0.0
  %2549 = vmatprep.subr.mxu0 0.0
  %2550 = vmatpush1.msra.mxu0 0.0
  %2551 = vmatprep.subr.mxu0 0.0
  %2552 = vmatpush1.msra.mxu0 0.0
  %2553 = vmatprep.subr.mxu0 0.0
  %2554 = vmatpush1.msra.mxu0 0.0
  %2555 = vmatprep.subr.mxu0 0.0
  %2556 = vmatpush1.msra.mxu0 0.0
  %2557 = vmatprep.subr.mxu0 0.0
  %2558 = vmatpush1.msra.mxu0 0.0
  %2559 = vmatprep.subr.mxu0 0.0
  %2560 = vmatpush1.msra.mxu0 0.0
  %2561 = vmatprep.subr.mxu0 0.0
  %2562 = vmatpush1.msra.mxu0 0.0
  %2563 = vmatprep.subr.mxu0 0.0
  %2564 = vmatpush1.msra.mxu0 0.0
  %2565 = vmatprep.subr.mxu0 0.0
  %2566 = vmatpush1.msra.mxu0 0.0
  %2567 = vmatprep.subr.mxu0 0.0
  %2568 = vmatpush1.msra.mxu0 0.0
  %2569 = vmatprep.subr.mxu0 0.0
  %2570 = vmatpush1.msra.mxu0 0.0
  %2571 = vmatprep.subr.mxu0 0.0
  %2572 = vmatpush1.msra.mxu0 0.0
  %2573 = vmatprep.subr.mxu0 0.0
  %2574 = vmatpush1.msra.mxu0 0.0
  %2575 = vmatprep.subr.mxu0 0.0
  %2576 = vmatpush1.msra.mxu0 0.0
  %2577 = vmatprep.subr.mxu0 0.0
  %2578 = vmatpush1.msra.mxu0 0.0
  %2579 = vmatprep.subr.mxu0 0.0
  %2580 = vmatpush1.msra.mxu0 0.0
  %2581 = vmatprep.subr.mxu0 0.0
  %2582 = vmatpush1.msra.mxu0 0.0
  %2583 = vmatprep.subr.mxu0 0.0
  %2584 = vmatpush1.msra.mxu0 0.0
  %2585 = vmatprep.subr.mxu0 0.0
  %2586 = vmatpush1.msra.mxu0 0.0
  %2587 = vmatprep.subr.mxu0 0.0
  %2588 = vmatpush1.msra.mxu0 0.0
  %2589 = vmatprep.subr.mxu0 0.0
  %2590 = vmatpush1.msra.mxu0 0.0
  %2591 = vmatprep.subr.mxu0 0.0
  %2592 = vmatpush1.msra.mxu0 0.0
  %2593 = vmatprep.subr.mxu0 0.0
  %2594 = vmatpush1.msra.mxu0 0.0
  %2595 = vmatprep.subr.mxu0 0.0
  %2596 = vmatpush1.msra.mxu0 0.0
  %2597 = vmatprep.subr.mxu0 0.0
  %2598 = vmatpush1.msra.mxu0 0.0
  %2599 = vmatprep.mubr.f32.mxu0 0.0
  %2600 = vmatmul.mubr.f32.gmra.mrb[0].mxu0 %v2524
  %v2601 = vpop.f32.mrb[0].mxu0
  %v2602 = vadd.f32 0.0, %v2601
  %v2603 = vpop.f32.mrb[0].mxu0
  %2604 = vmatprep.mubr.f32.mxu0 0.0
  %2605 = vmatmul.mubr.f32.gmra.mrb[0].mxu0 %v2527
  %v2606 = vpop.f32.mrb[0].mxu0
  %v2607 = vadd.f32 0.0, %v2606
  %v2608 = vpop.f32.mrb[0].mxu0
  %2609 = vmatprep.mubr.f32.mxu0 0.0
  %2610 = vmatmul.mubr.f32.gmra.mrb[0].mxu0 %v2530
  %v2611 = vpop.f32.mrb[0].mxu0
  %v2612 = vadd.f32 0.0, %v2611
  %v2613 = vpop.f32.mrb[0].mxu0
  %2614 = vmatprep.mubr.f32.mxu0 0.0
  %2615 = vmatmul.mubr.f32.gmra.mrb[0].mxu0 %v2533
  %v2616 = vpop.f32.mrb[0].mxu0
  %v2617 = vadd.f32 0.0, %v2616
  %v2618 = vpop.f32.mrb[0].mxu0
  %2619 = vdwg.mxu0
  %v2620 = vmul.f32 %v1155, %v2602
  %v2621 = vmul.f32 %v1156, %v2607
  %v2622 = vmul.f32 %v1157, %v2612
  %v2623 = vmul.f32 %v1158, %v2617
  %v2624 = vadd.f32 %v2620, %v41
  %v2625 = vadd.f32 %v2621, %v42
  %v2626 = vadd.f32 %v2622, %v43
  %v2627 = vadd.f32 %v2623, %v44
  %v2628 = vmax.f32 %v2624, 0.0
  %v2629 = vmax.f32 %v2625, 0.0
  %v2630 = vmax.f32 %v2626, 0.0
  %v2631 = vmax.f32 %v2627, 0.0
  %2632 = vst.msk [vmem:[%s12] sm:$0xff] %vm66, %v2628
  %2633 = vst.msk [vmem:[%s12 + $0x8] sm:$0xff] %vm66, %v2629
  %2634 = vst.msk [vmem:[%s12 + $0x10] sm:$0xff] %vm66, %v2630
  %2635 = vst.msk [vmem:[%s12 + $0x18] sm:$0xff] %vm66, %v2631
  // Predicated region
  $region50: #{basic_block_forward.1} parent=0 // pred_check
    _
  $region51: #{basic_block_forward.1} parent=0 // pred_check_branch
    %2637 = sbr.rel (0) target = $region53
  $region52: #{basic_block_forward.1} parent=0 // pred_region
    _
  $region53: #{basic_block_forward.1} parent=0 // pred_fallthru
    _
  // Predicated region
  $region54: #{basic_block_forward.1} parent=0 // pred_check
    _
  $region55: #{basic_block_forward.1} parent=0 // pred_check_branch
    %2639 = sbr.rel (0) target = $region57
  $region56: #{basic_block_forward.1} parent=0 // pred_region
    _
  $region57: #{basic_block_forward.1} parent=0 // pred_fallthru
    _

</llo_original>
